<compile_context>
chip_gen: v7x
topology: tpu7x:2x2x1
jax: 0.10.0
libtpu: 0.0.40
codegen_flags: <defaults>
</compile_context>

<pallas_src>
import jax
import jax.numpy as jnp
from jax import lax
from jax.experimental import pallas as pl
from jax.experimental.pallas import tpu as pltpu


def _fused_heads_kernel(xpad_ref, w3_ref, b3_ref, w1t_ref, b1t_ref, out_ref):
    # xpad_ref: (1, H+2, W+2, Cin)      zero-padded NHWC feature tile (f32)
    # w3_ref  : (3, 3, Cin, Cmid_tot)   fused 3x3 weights, HWIO (bf16)
    # b3_ref  : (1, Cmid_tot)           fused first-conv bias (f32)
    # w1t_ref : (Cout_tot, Cmid_tot)    block-diagonal 1x1 weights, transposed (bf16)
    # b1t_ref : (Cout_tot, 1)           fused final bias (f32)
    # out_ref : (1, Cout_tot, H*W)      channel-major output (lane-dense stores)
    H = xpad_ref.shape[1] - 2
    W = xpad_ref.shape[2] - 2
    Cin = xpad_ref.shape[3]
    Cmid = w3_ref.shape[3]

    # 3x3 conv as 9 shifted (H*W, Cin) x (Cin, Cmid_tot) bf16 matmuls on the
    # MXU, accumulated in f32.  The dy shift is an outer-dim slice (free);
    # only the dx shift touches the sublane axis.
    acc = jnp.zeros((H * W, Cmid), jnp.float32)
    for dy in range(3):
        rows = xpad_ref[0, dy:dy + H, :, :]                 # (H, W+2, Cin)
        for dx in range(3):
            patch = rows[:, dx:dx + W, :].reshape(H * W, Cin)
            acc = acc + jnp.dot(patch.astype(jnp.bfloat16), w3_ref[dy, dx],
                                preferred_element_type=jnp.float32)

    hidden = jnp.maximum(acc + b3_ref[...], 0.0)            # bias + ReLU, f32

    # Fused (block-diagonal) 1x1 conv, emitted channel-major:
    # (Cout, Cmid) . (H*W, Cmid)^T -> (Cout, H*W)   (same contraction pattern
    # as q @ k^T in flash attention; no explicit transpose op needed).
    out_t = lax.dot_general(
        w1t_ref[...], hidden.astype(jnp.bfloat16),
        dimension_numbers=(((1,), (1,)), ((), ())),
        preferred_element_type=jnp.float32)
    out_t = out_t + b1t_ref[...]
    out_ref[0] = out_t.astype(out_ref.dtype)


def fused_heads_forward(x_nchw, w3, b3, w1t, b1t):
    """All heads at once.  x_nchw: (N, Cin, H, W) f32.  Returns (N, Cout_tot, H*W)."""
    N, Cin, H, W = x_nchw.shape
    Cmid = w3.shape[3]
    Cout = w1t.shape[0]

    # Single NCHW->NHWC transpose and single zero pad per feature map
    # (shared by all heads; previously this happened once per head).
    x = jnp.transpose(x_nchw, (0, 2, 3, 1))
    x = jnp.pad(x, ((0, 0), (1, 1), (1, 1), (0, 0)))

    return pl.pallas_call(
        _fused_heads_kernel,
        out_shape=jax.ShapeDtypeStruct((N, Cout, H * W), jnp.float32),
        grid_spec=pltpu.PrefetchScalarGridSpec(
            num_scalar_prefetch=0,
            grid=(N,),
            in_specs=[
                pl.BlockSpec((1, H + 2, W + 2, Cin), lambda n: (n, 0, 0, 0)),
                pl.BlockSpec((3, 3, Cin, Cmid), lambda n: (0, 0, 0, 0)),
                pl.BlockSpec((1, Cmid), lambda n: (0, 0)),
                pl.BlockSpec((Cout, Cmid), lambda n: (0, 0)),
                pl.BlockSpec((Cout, 1), lambda n: (0, 0)),
            ],
            out_specs=pl.BlockSpec((1, Cout, H * W), lambda n: (n, 0, 0)),
        ),
        compiler_params=pltpu.CompilerParams(
            dimension_semantics=("parallel",)),
    )(x, w3, b3, w1t, b1t)


class BaseModelPallas:
    """Pallas port of BaseModel (non-recurrent path, num_stacks feature maps)."""

    def __init__(self, heads, head_convs, num_stacks, last_channel,
                 prior_bias=-4.6, key=jax.random.PRNGKey(0)):
        self.heads = heads
        self.num_stacks = num_stacks
        self.last_channel = last_channel
        self.params = {}
        # TODO(synk): only the len(head_conv)==1 configuration (3x3 -> ReLU ->
        # 1x1) is translated; deeper head_conv chains and the head_conv == []
        # branch of the PyTorch module are not implemented here.
        for head in heads:
            assert len(head_convs[head]) == 1, \
                "only single-hidden-layer heads are supported"

        for head in heads:
            classes = heads[head]
            cmid = head_convs[head][-1]
            key, k1, k2, k3 = jax.random.split(key, 4)
            fan3 = last_channel * 9
            w3 = jax.random.uniform(k1, (3, 3, last_channel, cmid),
                                    jnp.float32, -1.0, 1.0) / jnp.sqrt(fan3)
            if ('hm' in head) or ('visibility' in head):
                b3 = jax.random.uniform(k3, (cmid,), jnp.float32,
                                        -1.0, 1.0) / jnp.sqrt(fan3)
                b1 = jnp.full((classes,), prior_bias, jnp.float32)
            else:
                # fill_fc_weights: zero conv biases of non-hm heads.
                b3 = jnp.zeros((cmid,), jnp.float32)
                b1 = jnp.zeros((classes,), jnp.float32)
            w1 = jax.random.uniform(k2, (cmid, classes),
                                    jnp.float32, -1.0, 1.0) / jnp.sqrt(cmid)
            self.params[head] = (w3, b3, w1, b1)

        self._build_fused_params()

    def _build_fused_params(self):
        head_names = list(self.heads.keys())
        cmids = [self.params[h][0].shape[-1] for h in head_names]
        couts = [self.heads[h] for h in head_names]
        cmid_tot, cout_tot = sum(cmids), sum(couts)

        # Concatenate 3x3 weights / biases along the hidden axis.
        w3_cat = jnp.concatenate([self.params[h][0] for h in head_names], axis=-1)
        self.fused_w3 = w3_cat.astype(jnp.bfloat16)
        self.fused_b3 = jnp.concatenate(
            [self.params[h][1] for h in head_names]).reshape(1, cmid_tot)

        # Block-diagonal, transposed 1x1 weights: (Cout_tot, Cmid_tot).
        w1t = jnp.zeros((cout_tot, cmid_tot), jnp.float32)
        self.head_slices = {}
        co, cm = 0, 0
        for h, cmid, cout in zip(head_names, cmids, couts):
            w1t = w1t.at[co:co + cout, cm:cm + cmid].set(self.params[h][2].T)
            self.head_slices[h] = (co, cout)
            co += cout
            cm += cmid
        self.fused_w1t = w1t.astype(jnp.bfloat16)
        self.fused_b1t = jnp.concatenate(
            [self.params[h][3] for h in head_names]).reshape(cout_tot, 1)

    def apply_heads(self, feat_nchw):
        N, _, H, W = feat_nchw.shape
        y = fused_heads_forward(feat_nchw, self.fused_w3, self.fused_b3,
                                self.fused_w1t, self.fused_b1t)
        z = {}
        for head in self.heads:
            off, cout = self.head_slices[head]
            # Channel-major slice + free reshape; no NHWC->NCHW transpose.
            z[head] = y[:, off:off + cout, :].reshape(N, cout, H, W)
        return z

    def forward(self, feats):
        out = []
        for s in range(self.num_stacks):
            out.append(self.apply_heads(feats[s]))
        pre_hms = [None]
        # TODO(synk): the recurrent branch (ConvGRU, pre_hm interpolation,
        # roi_align feature_dict) of BaseModel.forward is not translated;
        # img2feats / imgpre2feats are abstract in the original module.
        return out, pre_hms, feats, {}


def _reference_head(x_nchw, w3, b3, w1, b1):
    """Pure-JAX (XLA conv) reference for one head, NCHW in / NCHW out.
    Weights are rounded to bf16 to match the kernel's MXU operand precision."""
    dn = ('NHWC', 'HWIO', 'NHWC')
    x = jnp.transpose(x_nchw, (0, 2, 3, 1))
    w3 = w3.astype(jnp.bfloat16).astype(jnp.float32)
    w1 = w1.astype(jnp.bfloat16).astype(jnp.float32)
    h = lax.conv_general_dilated(x, w3, (1, 1), 'SAME', dimension_numbers=dn) + b3
    h = jnp.maximum(h, 0.0)
    o = lax.conv_general_dilated(h, w1.reshape(1, 1, *w1.shape), (1, 1),
                                 'VALID', dimension_numbers=dn) + b1
    return jnp.transpose(o, (0, 3, 1, 2))


if __name__ == "__main__":
    # Small, module-consistent shapes: batch=2, last_channel=32, spatial=16.
    heads = {"hm": 4, "reg": 2, "wh": 2}
    head_convs = {"hm": [32], "reg": [32], "wh": [32]}
    num_stacks = 1
    last_channel = 32
    N, H, W = 2, 16, 16

    key = jax.random.PRNGKey(0)
    kfeat, kparam = jax.random.split(key)
    feats = [jax.random.normal(kfeat, (N, last_channel, H, W), jnp.float32)]

    model = BaseModelPallas(heads, head_convs, num_stacks, last_channel,
                            prior_bias=-4.6, key=kparam)

    out, pre_hms, _, _ = model.forward(feats)
    jax.block_until_ready(out)

    # Verify against a pure-JAX (XLA conv) reference of the same head math.
    ok = True
    for head in heads:
        w3, b3, w1, b1 = model.params[head]
        ref = _reference_head(feats[0], w3, b3, w1, b1)
        got = out[0][head]
        if got.shape != (N, heads[head], H, W):
            ok = False
        if not jnp.allclose(got, ref, atol=2e-2, rtol=2e-2):
            ok = False
    print("KERNEL_OK" if ok else "KERNEL_MISMATCH")
</pallas_src>

<mosaic_0001>
module attributes {stable_mosaic.version = 11 : i64} {
  func.func @_fused_heads_kernel(%arg0: i32, %arg1: memref<1x18x18x32xf32, #tpu.memory_space<vmem>>, %arg2: memref<3x3x32x96xbf16, #tpu.memory_space<vmem>>, %arg3: memref<1x96xf32, #tpu.memory_space<vmem>>, %arg4: memref<8x96xbf16, #tpu.memory_space<vmem>>, %arg5: memref<8x1xf32, #tpu.memory_space<vmem>>, %arg6: memref<1x8x256xf32, #tpu.memory_space<vmem>>) attributes {dimension_semantics = [#tpu.dimension_semantics<parallel>], iteration_bounds = array<i64: 2>, scalar_prefetch = 0 : i64, scratch_operands = 0 : i64, tpu.core_type = #tpu.core_type<tc>, window_params = [{transform_indices = @transform_0, window_bounds = array<i64: 1, 18, 18, 32>}, {pipeline_mode = #tpu.pipeline_mode<synchronous>, transform_indices = @transform_1, window_bounds = array<i64: 3, 3, 32, 96>}, {pipeline_mode = #tpu.pipeline_mode<synchronous>, transform_indices = @transform_2, window_bounds = array<i64: 1, 96>}, {pipeline_mode = #tpu.pipeline_mode<synchronous>, transform_indices = @transform_3, window_bounds = array<i64: 8, 96>}, {pipeline_mode = #tpu.pipeline_mode<synchronous>, transform_indices = @transform_4, window_bounds = array<i64: 8, 1>}, {transform_indices = @transform_5, window_bounds = array<i64: 1, 8, 256>}]} {
    %cst = arith.constant 0.000000e+00 : f32
    %0 = vector.broadcast %cst : f32 to vector<256x96xf32>
    %c0 = arith.constant 0 : index
    %c0_0 = arith.constant 0 : index
    %c0_1 = arith.constant 0 : index
    %c0_2 = arith.constant 0 : index
    %1 = vector.load %arg1[%c0, %c0_0, %c0_1, %c0_2] : memref<1x18x18x32xf32, #tpu.memory_space<vmem>>, vector<1x16x18x32xf32>
    %2 = vector.shape_cast %1 : vector<1x16x18x32xf32> to vector<16x18x32xf32>
    %3 = vector.extract_strided_slice %2 {offsets = [0, 0, 0], sizes = [16, 16, 32], strides = [1, 1, 1]} : vector<16x18x32xf32> to vector<16x16x32xf32>
    %4 = vector.shape_cast %3 : vector<16x16x32xf32> to vector<256x32xf32>
    %5 = arith.truncf %4 : vector<256x32xf32> to vector<256x32xbf16>
    %c0_3 = arith.constant 0 : index
    %c0_4 = arith.constant 0 : index
    %c0_5 = arith.constant 0 : index
    %c0_6 = arith.constant 0 : index
    %6 = vector.load %arg2[%c0_3, %c0_4, %c0_5, %c0_6] : memref<3x3x32x96xbf16, #tpu.memory_space<vmem>>, vector<1x1x32x96xbf16>
    %7 = vector.shape_cast %6 : vector<1x1x32x96xbf16> to vector<32x96xbf16>
    %cst_7 = arith.constant dense<0.000000e+00> : vector<256x96xf32>
    %8 = tpu.matmul %5, %7, %cst_7 {dimension_numbers = #tpu.dot_dimension_numbers<[1], [0], [0], [1], [0, 0, 1, 1], [], []>} : vector<256x32xbf16>, vector<32x96xbf16>, vector<256x96xf32> -> vector<256x96xf32>
    %9 = arith.addf %0, %8 : vector<256x96xf32>
    %10 = vector.extract_strided_slice %2 {offsets = [0, 1, 0], sizes = [16, 16, 32], strides = [1, 1, 1]} : vector<16x18x32xf32> to vector<16x16x32xf32>
    %11 = vector.shape_cast %10 : vector<16x16x32xf32> to vector<256x32xf32>
    %12 = arith.truncf %11 : vector<256x32xf32> to vector<256x32xbf16>
    %c0_8 = arith.constant 0 : index
    %c1 = arith.constant 1 : index
    %c0_9 = arith.constant 0 : index
    %c0_10 = arith.constant 0 : index
    %13 = vector.load %arg2[%c0_8, %c1, %c0_9, %c0_10] : memref<3x3x32x96xbf16, #tpu.memory_space<vmem>>, vector<1x1x32x96xbf16>
    %14 = vector.shape_cast %13 : vector<1x1x32x96xbf16> to vector<32x96xbf16>
    %cst_11 = arith.constant dense<0.000000e+00> : vector<256x96xf32>
    %15 = tpu.matmul %12, %14, %cst_11 {dimension_numbers = #tpu.dot_dimension_numbers<[1], [0], [0], [1], [0, 0, 1, 1], [], []>} : vector<256x32xbf16>, vector<32x96xbf16>, vector<256x96xf32> -> vector<256x96xf32>
    %16 = arith.addf %9, %15 : vector<256x96xf32>
    %17 = vector.extract_strided_slice %2 {offsets = [0, 2, 0], sizes = [16, 16, 32], strides = [1, 1, 1]} : vector<16x18x32xf32> to vector<16x16x32xf32>
    %18 = vector.shape_cast %17 : vector<16x16x32xf32> to vector<256x32xf32>
    %19 = arith.truncf %18 : vector<256x32xf32> to vector<256x32xbf16>
    %c0_12 = arith.constant 0 : index
    %c2 = arith.constant 2 : index
    %c0_13 = arith.constant 0 : index
    %c0_14 = arith.constant 0 : index
    %20 = vector.load %arg2[%c0_12, %c2, %c0_13, %c0_14] : memref<3x3x32x96xbf16, #tpu.memory_space<vmem>>, vector<1x1x32x96xbf16>
    %21 = vector.shape_cast %20 : vector<1x1x32x96xbf16> to vector<32x96xbf16>
    %cst_15 = arith.constant dense<0.000000e+00> : vector<256x96xf32>
    %22 = tpu.matmul %19, %21, %cst_15 {dimension_numbers = #tpu.dot_dimension_numbers<[1], [0], [0], [1], [0, 0, 1, 1], [], []>} : vector<256x32xbf16>, vector<32x96xbf16>, vector<256x96xf32> -> vector<256x96xf32>
    %23 = arith.addf %16, %22 : vector<256x96xf32>
    %c0_16 = arith.constant 0 : index
    %c1_17 = arith.constant 1 : index
    %c0_18 = arith.constant 0 : index
    %c0_19 = arith.constant 0 : index
    %24 = vector.load %arg1[%c0_16, %c1_17, %c0_18, %c0_19] : memref<1x18x18x32xf32, #tpu.memory_space<vmem>>, vector<1x16x18x32xf32>
    %25 = vector.shape_cast %24 : vector<1x16x18x32xf32> to vector<16x18x32xf32>
    %26 = vector.extract_strided_slice %25 {offsets = [0, 0, 0], sizes = [16, 16, 32], strides = [1, 1, 1]} : vector<16x18x32xf32> to vector<16x16x32xf32>
    %27 = vector.shape_cast %26 : vector<16x16x32xf32> to vector<256x32xf32>
    %28 = arith.truncf %27 : vector<256x32xf32> to vector<256x32xbf16>
    %c1_20 = arith.constant 1 : index
    %c0_21 = arith.constant 0 : index
    %c0_22 = arith.constant 0 : index
    %c0_23 = arith.constant 0 : index
    %29 = vector.load %arg2[%c1_20, %c0_21, %c0_22, %c0_23] : memref<3x3x32x96xbf16, #tpu.memory_space<vmem>>, vector<1x1x32x96xbf16>
    %30 = vector.shape_cast %29 : vector<1x1x32x96xbf16> to vector<32x96xbf16>
    %cst_24 = arith.constant dense<0.000000e+00> : vector<256x96xf32>
    %31 = tpu.matmul %28, %30, %cst_24 {dimension_numbers = #tpu.dot_dimension_numbers<[1], [0], [0], [1], [0, 0, 1, 1], [], []>} : vector<256x32xbf16>, vector<32x96xbf16>, vector<256x96xf32> -> vector<256x96xf32>
    %32 = arith.addf %23, %31 : vector<256x96xf32>
    %33 = vector.extract_strided_slice %25 {offsets = [0, 1, 0], sizes = [16, 16, 32], strides = [1, 1, 1]} : vector<16x18x32xf32> to vector<16x16x32xf32>
    %34 = vector.shape_cast %33 : vector<16x16x32xf32> to vector<256x32xf32>
    %35 = arith.truncf %34 : vector<256x32xf32> to vector<256x32xbf16>
    %c1_25 = arith.constant 1 : index
    %c1_26 = arith.constant 1 : index
    %c0_27 = arith.constant 0 : index
    %c0_28 = arith.constant 0 : index
    %36 = vector.load %arg2[%c1_25, %c1_26, %c0_27, %c0_28] : memref<3x3x32x96xbf16, #tpu.memory_space<vmem>>, vector<1x1x32x96xbf16>
    %37 = vector.shape_cast %36 : vector<1x1x32x96xbf16> to vector<32x96xbf16>
    %cst_29 = arith.constant dense<0.000000e+00> : vector<256x96xf32>
    %38 = tpu.matmul %35, %37, %cst_29 {dimension_numbers = #tpu.dot_dimension_numbers<[1], [0], [0], [1], [0, 0, 1, 1], [], []>} : vector<256x32xbf16>, vector<32x96xbf16>, vector<256x96xf32> -> vector<256x96xf32>
    %39 = arith.addf %32, %38 : vector<256x96xf32>
    %40 = vector.extract_strided_slice %25 {offsets = [0, 2, 0], sizes = [16, 16, 32], strides = [1, 1, 1]} : vector<16x18x32xf32> to vector<16x16x32xf32>
    %41 = vector.shape_cast %40 : vector<16x16x32xf32> to vector<256x32xf32>
    %42 = arith.truncf %41 : vector<256x32xf32> to vector<256x32xbf16>
    %c1_30 = arith.constant 1 : index
    %c2_31 = arith.constant 2 : index
    %c0_32 = arith.constant 0 : index
    %c0_33 = arith.constant 0 : index
    %43 = vector.load %arg2[%c1_30, %c2_31, %c0_32, %c0_33] : memref<3x3x32x96xbf16, #tpu.memory_space<vmem>>, vector<1x1x32x96xbf16>
    %44 = vector.shape_cast %43 : vector<1x1x32x96xbf16> to vector<32x96xbf16>
    %cst_34 = arith.constant dense<0.000000e+00> : vector<256x96xf32>
    %45 = tpu.matmul %42, %44, %cst_34 {dimension_numbers = #tpu.dot_dimension_numbers<[1], [0], [0], [1], [0, 0, 1, 1], [], []>} : vector<256x32xbf16>, vector<32x96xbf16>, vector<256x96xf32> -> vector<256x96xf32>
    %46 = arith.addf %39, %45 : vector<256x96xf32>
    %c0_35 = arith.constant 0 : index
    %c2_36 = arith.constant 2 : index
    %c0_37 = arith.constant 0 : index
    %c0_38 = arith.constant 0 : index
    %47 = vector.load %arg1[%c0_35, %c2_36, %c0_37, %c0_38] : memref<1x18x18x32xf32, #tpu.memory_space<vmem>>, vector<1x16x18x32xf32>
    %48 = vector.shape_cast %47 : vector<1x16x18x32xf32> to vector<16x18x32xf32>
    %49 = vector.extract_strided_slice %48 {offsets = [0, 0, 0], sizes = [16, 16, 32], strides = [1, 1, 1]} : vector<16x18x32xf32> to vector<16x16x32xf32>
    %50 = vector.shape_cast %49 : vector<16x16x32xf32> to vector<256x32xf32>
    %51 = arith.truncf %50 : vector<256x32xf32> to vector<256x32xbf16>
    %c2_39 = arith.constant 2 : index
    %c0_40 = arith.constant 0 : index
    %c0_41 = arith.constant 0 : index
    %c0_42 = arith.constant 0 : index
    %52 = vector.load %arg2[%c2_39, %c0_40, %c0_41, %c0_42] : memref<3x3x32x96xbf16, #tpu.memory_space<vmem>>, vector<1x1x32x96xbf16>
    %53 = vector.shape_cast %52 : vector<1x1x32x96xbf16> to vector<32x96xbf16>
    %cst_43 = arith.constant dense<0.000000e+00> : vector<256x96xf32>
    %54 = tpu.matmul %51, %53, %cst_43 {dimension_numbers = #tpu.dot_dimension_numbers<[1], [0], [0], [1], [0, 0, 1, 1], [], []>} : vector<256x32xbf16>, vector<32x96xbf16>, vector<256x96xf32> -> vector<256x96xf32>
    %55 = arith.addf %46, %54 : vector<256x96xf32>
    %56 = vector.extract_strided_slice %48 {offsets = [0, 1, 0], sizes = [16, 16, 32], strides = [1, 1, 1]} : vector<16x18x32xf32> to vector<16x16x32xf32>
    %57 = vector.shape_cast %56 : vector<16x16x32xf32> to vector<256x32xf32>
    %58 = arith.truncf %57 : vector<256x32xf32> to vector<256x32xbf16>
    %c2_44 = arith.constant 2 : index
    %c1_45 = arith.constant 1 : index
    %c0_46 = arith.constant 0 : index
    %c0_47 = arith.constant 0 : index
    %59 = vector.load %arg2[%c2_44, %c1_45, %c0_46, %c0_47] : memref<3x3x32x96xbf16, #tpu.memory_space<vmem>>, vector<1x1x32x96xbf16>
    %60 = vector.shape_cast %59 : vector<1x1x32x96xbf16> to vector<32x96xbf16>
    %cst_48 = arith.constant dense<0.000000e+00> : vector<256x96xf32>
    %61 = tpu.matmul %58, %60, %cst_48 {dimension_numbers = #tpu.dot_dimension_numbers<[1], [0], [0], [1], [0, 0, 1, 1], [], []>} : vector<256x32xbf16>, vector<32x96xbf16>, vector<256x96xf32> -> vector<256x96xf32>
    %62 = arith.addf %55, %61 : vector<256x96xf32>
    %63 = vector.extract_strided_slice %48 {offsets = [0, 2, 0], sizes = [16, 16, 32], strides = [1, 1, 1]} : vector<16x18x32xf32> to vector<16x16x32xf32>
    %64 = vector.shape_cast %63 : vector<16x16x32xf32> to vector<256x32xf32>
    %65 = arith.truncf %64 : vector<256x32xf32> to vector<256x32xbf16>
    %c2_49 = arith.constant 2 : index
    %c2_50 = arith.constant 2 : index
    %c0_51 = arith.constant 0 : index
    %c0_52 = arith.constant 0 : index
    %66 = vector.load %arg2[%c2_49, %c2_50, %c0_51, %c0_52] : memref<3x3x32x96xbf16, #tpu.memory_space<vmem>>, vector<1x1x32x96xbf16>
    %67 = vector.shape_cast %66 : vector<1x1x32x96xbf16> to vector<32x96xbf16>
    %cst_53 = arith.constant dense<0.000000e+00> : vector<256x96xf32>
    %68 = tpu.matmul %65, %67, %cst_53 {dimension_numbers = #tpu.dot_dimension_numbers<[1], [0], [0], [1], [0, 0, 1, 1], [], []>} : vector<256x32xbf16>, vector<32x96xbf16>, vector<256x96xf32> -> vector<256x96xf32>
    %69 = arith.addf %62, %68 : vector<256x96xf32>
    %c0_54 = arith.constant 0 : index
    %c0_55 = arith.constant 0 : index
    %70 = vector.load %arg3[%c0_54, %c0_55] : memref<1x96xf32, #tpu.memory_space<vmem>>, vector<1x96xf32>
    %71 = vector.broadcast %70 : vector<1x96xf32> to vector<256x96xf32>
    %72 = arith.addf %69, %71 : vector<256x96xf32>
    %cst_56 = arith.constant 0.000000e+00 : f32
    %73 = vector.broadcast %cst_56 : f32 to vector<256x96xf32>
    %74 = arith.maximumf %72, %73 : vector<256x96xf32>
    %c0_57 = arith.constant 0 : index
    %c0_58 = arith.constant 0 : index
    %75 = vector.load %arg4[%c0_57, %c0_58] : memref<8x96xbf16, #tpu.memory_space<vmem>>, vector<8x96xbf16>
    %76 = arith.truncf %74 : vector<256x96xf32> to vector<256x96xbf16>
    %cst_59 = arith.constant dense<0.000000e+00> : vector<8x256xf32>
    %77 = tpu.matmul %75, %76, %cst_59 {dimension_numbers = #tpu.dot_dimension_numbers<[1], [1], [0], [0], [0, 0, 1, 0], [], []>} : vector<8x96xbf16>, vector<256x96xbf16>, vector<8x256xf32> -> vector<8x256xf32>
    %c0_60 = arith.constant 0 : index
    %c0_61 = arith.constant 0 : index
    %78 = vector.load %arg5[%c0_60, %c0_61] : memref<8x1xf32, #tpu.memory_space<vmem>>, vector<8x1xf32>
    %79 = vector.broadcast %78 : vector<8x1xf32> to vector<8x256xf32>
    %80 = arith.addf %77, %79 : vector<8x256xf32>
    %c0_62 = arith.constant 0 : index
    %c0_63 = arith.constant 0 : index
    %c0_64 = arith.constant 0 : index
    %81 = vector.load %arg6[%c0_62, %c0_63, %c0_64] : memref<1x8x256xf32, #tpu.memory_space<vmem>>, vector<1x8x256xf32>
    %82 = vector.shape_cast %81 : vector<1x8x256xf32> to vector<8x256xf32>
    %83 = vector.shape_cast %80 : vector<8x256xf32> to vector<1x8x256xf32>
    tpu.vector_store %arg6[%c0_62, %c0_63, %c0_64], %83 {strides = array<i32>} : memref<1x8x256xf32, #tpu.memory_space<vmem>>, vector<1x8x256xf32>,
    return
  }
  func.func @transform_0(%arg0: i32) -> (i32, i32, i32, i32) {
    %c0_i32 = arith.constant 0 : i32
    %c0_i32_0 = arith.constant 0 : i32
    %c0_i32_1 = arith.constant 0 : i32
    %c0_i32_2 = arith.constant 0 : i32
    return %arg0, %c0_i32, %c0_i32_0, %c0_i32_1 : i32, i32, i32, i32
  }
  func.func @transform_1(%arg0: i32) -> (i32, i32, i32, i32) {
    %c0_i32 = arith.constant 0 : i32
    %c0_i32_0 = arith.constant 0 : i32
    %c0_i32_1 = arith.constant 0 : i32
    %c0_i32_2 = arith.constant 0 : i32
    %c0_i32_3 = arith.constant 0 : i32
    return %c0_i32, %c0_i32_0, %c0_i32_1, %c0_i32_2 : i32, i32, i32, i32
  }
  func.func @transform_2(%arg0: i32) -> (i32, i32) {
    %c0_i32 = arith.constant 0 : i32
    %c0_i32_0 = arith.constant 0 : i32
    %c0_i32_1 = arith.constant 0 : i32
    return %c0_i32, %c0_i32_0 : i32, i32
  }
  func.func @transform_3(%arg0: i32) -> (i32, i32) {
    %c0_i32 = arith.constant 0 : i32
    %c0_i32_0 = arith.constant 0 : i32
    %c0_i32_1 = arith.constant 0 : i32
    return %c0_i32, %c0_i32_0 : i32, i32
  }
  func.func @transform_4(%arg0: i32) -> (i32, i32) {
    %c0_i32 = arith.constant 0 : i32
    %c0_i32_0 = arith.constant 0 : i32
    %c0_i32_1 = arith.constant 0 : i32
    return %c0_i32, %c0_i32_0 : i32, i32
  }
  func.func @transform_5(%arg0: i32) -> (i32, i32, i32) {
    %c0_i32 = arith.constant 0 : i32
    %c0_i32_0 = arith.constant 0 : i32
    %c0_i32_1 = arith.constant 0 : i32
    return %arg0, %c0_i32, %c0_i32_0 : i32, i32, i32
  }
}

</mosaic_0001>

<llo_original>
// kernel: tpu_custom_call.1
$region0: #{tpu_custom_call.1}
  #allocation0 [shape = 'u32[]', space=smem, size = 0x4, offset = 0x4, fixed_abs, tag = 'smem constant byte address 0x4 - core index']
  #allocation1 [shape = 'u32[144,128]{1,0:T(1,128)}', space=vmem, size = 0x12000, scoped, tag = 'internal scratch']
  %s0 = inlined_call_operand.vmem [shape: f32[2,18,18,32], index: 0, kind: input, shape index: {}]
  %s1 = inlined_call_operand.vmem [shape: bf16[3,3,32,96], index: 1, kind: input, shape index: {}]
  %s2 = inlined_call_operand.vmem [shape: f32[1,96], index: 2, kind: input, shape index: {}]
  %s3 = inlined_call_operand.vmem [shape: bf16[8,96], index: 3, kind: input, shape index: {}]
  %s4 = inlined_call_operand.vmem [shape: f32[8,1], index: 4, kind: input, shape index: {}]
  %s5 = inlined_call_operand.hbm [shape: f32[2,8,256], index: 5, kind: output, shape index: {}]
  %s6 = sld [smem:[#allocation0]]
  $region53: #{tpu_custom_call.1} parent=0
    _
  %s8 = ssub.s32 1, %s6
  %s9 = scalar_select 0, %s8, %s6
  $region1: #{tpu_custom_call.1} parent=0
    #allocation2 [shape = 'u8[16384]{0}', space=vmem, size = 0x4000, scoped, tag = 'output window, operand 0']
    #allocation3 [shape = 's32[2]{0}', space=sflag, size = 0x8, scoped, tag = 'scoped memory for tpu_custom_call.1']
    %10 = vsyncpa [#allocation3], 0
    %s11 = scalar_lea.sflag [#allocation3], 1
    %12 = vsyncpa %s11, 0
    loop: start=0, step=1, limit=4
    $region2: #{tpu_custom_call.1} parent=1 // loop_pre_header
      _
    $region3: #{tpu_custom_call.1} parent=1 // loop_header
      %s14 = sphi 0, %s18
      %p15 = scmp.ge.s32.totalorder %s14, 4
      %s24 = sphi 0, %s26
      %s27 = sphi 0, %s24
      %s28 = sphi 0, %s27
      %s44 = sphi 0, %s28
      %s48 = sphi 0, %s48
      %s50 = sphi 0, %s48
      %s51 = sphi 0, %s50
      %s65 = sphi 0, %s51
      %s69 = sphi 0, %s69
      %s71 = sphi 0, %s69
      %s72 = sphi 0, %s71
      %s86 = sphi 0, %s72
      %s90 = sphi 0, %s90
      %s92 = sphi 0, %s90
      %s93 = sphi 0, %s92
      %s107 = sphi 0, %s93
      %s111 = sphi 0, %s111
      %s113 = sphi 0, %s111
      %s114 = sphi 0, %s113
      %s128 = sphi 0, %s114
      %s134 = sphi 0, %s136
      %s137 = sphi 0, %s134
      %s138 = sphi 0, %s137
      %s154 = sphi 0, %s138
    $region4: #{tpu_custom_call.1} parent=1 // loop_header_branch
      %17 = sbr.rel (%p15) target = $region8
    $region5: #{tpu_custom_call.1} parent=1 // loop_body
      %s19 = ssub.s32 %s14, 1
      %s20 = ssub.s32 %s14, 2
      %s21 = sadd.s32 %s14, 1
      %s22 = ssub.s32 %s14, %s21
      %p23 = scmp.eq.s32.totalorder %s22, 0
      %s25 = sadd.s32 %s24, 1
      %s26 = scalar_select %p23, %s24, %s25
      %p29 = pneg %p23
      %p30 = scmp.eq.s32.totalorder %s14, 1
      %p31 = por %p29, %p30
      %p32 = scmp.ne.s32.totalorder %s24, %s27
      %p33 = scmp.eq.s32.totalorder %s14, 0
      %p34 = por %p32, %p33
      %p35 = scmp.ne.s32.totalorder %s24, %s27
      %p36 = scmp.eq.s32.totalorder %s19, 1
      %p37 = por %p35, %p36
      %p38 = scmp.ne.s32.totalorder %s27, %s28
      %p39 = scmp.eq.s32.totalorder %s19, 0
      %p40 = por %p38, %p39
      %p41 = scmp.ne.s32.totalorder %s27, %s28
      %p42 = scmp.eq.s32.totalorder %s20, 1
      %p43 = por %p41, %p42
      %p45 = scmp.ne.s32.totalorder %s28, %s44
      %p46 = scmp.eq.s32.totalorder %s20, 0
      %p47 = por %p45, %p46
      %s49 = sadd.s32 %s48, 1
      %p52 = scmp.eq.s32.totalorder %s14, 1
      %p53 = scmp.ne.s32.totalorder %s48, %s50
      %p54 = scmp.eq.s32.totalorder %s14, 0
      %p55 = por %p53, %p54
      %p56 = scmp.ne.s32.totalorder %s48, %s50
      %p57 = scmp.eq.s32.totalorder %s19, 1
      %p58 = por %p56, %p57
      %p59 = scmp.ne.s32.totalorder %s50, %s51
      %p60 = scmp.eq.s32.totalorder %s19, 0
      %p61 = por %p59, %p60
      %p62 = scmp.ne.s32.totalorder %s50, %s51
      %p63 = scmp.eq.s32.totalorder %s20, 1
      %p64 = por %p62, %p63
      %p66 = scmp.ne.s32.totalorder %s51, %s65
      %p67 = scmp.eq.s32.totalorder %s20, 0
      %p68 = por %p66, %p67
      %s70 = sadd.s32 %s69, 1
      %p73 = scmp.eq.s32.totalorder %s14, 1
      %p74 = scmp.ne.s32.totalorder %s69, %s71
      %p75 = scmp.eq.s32.totalorder %s14, 0
      %p76 = por %p74, %p75
      %p77 = scmp.ne.s32.totalorder %s69, %s71
      %p78 = scmp.eq.s32.totalorder %s19, 1
      %p79 = por %p77, %p78
      %p80 = scmp.ne.s32.totalorder %s71, %s72
      %p81 = scmp.eq.s32.totalorder %s19, 0
      %p82 = por %p80, %p81
      %p83 = scmp.ne.s32.totalorder %s71, %s72
      %p84 = scmp.eq.s32.totalorder %s20, 1
      %p85 = por %p83, %p84
      %p87 = scmp.ne.s32.totalorder %s72, %s86
      %p88 = scmp.eq.s32.totalorder %s20, 0
      %p89 = por %p87, %p88
      %s91 = sadd.s32 %s90, 1
      %p94 = scmp.eq.s32.totalorder %s14, 1
      %p95 = scmp.ne.s32.totalorder %s90, %s92
      %p96 = scmp.eq.s32.totalorder %s14, 0
      %p97 = por %p95, %p96
      %p98 = scmp.ne.s32.totalorder %s90, %s92
      %p99 = scmp.eq.s32.totalorder %s19, 1
      %p100 = por %p98, %p99
      %p101 = scmp.ne.s32.totalorder %s92, %s93
      %p102 = scmp.eq.s32.totalorder %s19, 0
      %p103 = por %p101, %p102
      %p104 = scmp.ne.s32.totalorder %s92, %s93
      %p105 = scmp.eq.s32.totalorder %s20, 1
      %p106 = por %p104, %p105
      %p108 = scmp.ne.s32.totalorder %s93, %s107
      %p109 = scmp.eq.s32.totalorder %s20, 0
      %p110 = por %p108, %p109
      %s112 = sadd.s32 %s111, 1
      %p115 = scmp.eq.s32.totalorder %s14, 1
      %p116 = scmp.ne.s32.totalorder %s111, %s113
      %p117 = scmp.eq.s32.totalorder %s14, 0
      %p118 = por %p116, %p117
      %p119 = scmp.ne.s32.totalorder %s111, %s113
      %p120 = scmp.eq.s32.totalorder %s19, 1
      %p121 = por %p119, %p120
      %p122 = scmp.ne.s32.totalorder %s113, %s114
      %p123 = scmp.eq.s32.totalorder %s19, 0
      %p124 = por %p122, %p123
      %p125 = scmp.ne.s32.totalorder %s113, %s114
      %p126 = scmp.eq.s32.totalorder %s20, 1
      %p127 = por %p125, %p126
      %p129 = scmp.ne.s32.totalorder %s114, %s128
      %p130 = scmp.eq.s32.totalorder %s20, 0
      %p131 = por %p129, %p130
      %s132 = ssub.s32 %s14, %s21
      %p133 = scmp.eq.s32.totalorder %s132, 0
      %s135 = sadd.s32 %s134, 1
      %s136 = scalar_select %p133, %s134, %s135
      %p139 = pneg %p133
      %p140 = scmp.eq.s32.totalorder %s14, 1
      %p141 = por %p139, %p140
      %p142 = scmp.ne.s32.totalorder %s134, %s137
      %p143 = scmp.eq.s32.totalorder %s14, 0
      %p144 = por %p142, %p143
      %p145 = scmp.ne.s32.totalorder %s134, %s137
      %p146 = scmp.eq.s32.totalorder %s19, 1
      %p147 = por %p145, %p146
      %p148 = scmp.ne.s32.totalorder %s137, %s138
      %p149 = scmp.eq.s32.totalorder %s19, 0
      %p150 = por %p148, %p149
      %p151 = scmp.ne.s32.totalorder %s137, %s138
      %p152 = scmp.eq.s32.totalorder %s20, 1
      %p153 = por %p151, %p152
      %p155 = scmp.ne.s32.totalorder %s138, %s154
      %p156 = scmp.eq.s32.totalorder %s20, 0
      %p157 = por %p155, %p156
      %p158 = scmp.le.s32.totalorder 1, %s14
      %p159 = scmp.lt.s32.totalorder %s14, 3
      %p160 = pnand %p158, %p159
      %p161 = pneg %p160
      // Predicated region
      $region9: #{tpu_custom_call.1} parent=5 // pred_check
        _
      $region10: #{tpu_custom_call.1} parent=5 // pred_check_branch
        %163 = sbr.rel (%p160) target = $region12
      $region11: #{tpu_custom_call.1} parent=5 // pred_region
        %s164 = ssub.s32 %s14, 1
        // Predicated region
        $region13: #{tpu_custom_call.1} parent=11 // pred_check
          %p165 = pneg %p61
        $region14: #{tpu_custom_call.1} parent=11 // pred_check_branch
          %167 = sbr.rel (%p165) target = $region16
        $region15: #{tpu_custom_call.1} parent=11 // pred_region
          _
        $region16: #{tpu_custom_call.1} parent=11 // pred_fallthru
          _
        // Predicated region
        $region17: #{tpu_custom_call.1} parent=11 // pred_check
          %p168 = pneg %p82
        $region18: #{tpu_custom_call.1} parent=11 // pred_check_branch
          %170 = sbr.rel (%p168) target = $region20
        $region19: #{tpu_custom_call.1} parent=11 // pred_region
          _
        $region20: #{tpu_custom_call.1} parent=11 // pred_fallthru
          _
        // Predicated region
        $region21: #{tpu_custom_call.1} parent=11 // pred_check
          %p171 = pneg %p103
        $region22: #{tpu_custom_call.1} parent=11 // pred_check_branch
          %173 = sbr.rel (%p171) target = $region24
        $region23: #{tpu_custom_call.1} parent=11 // pred_region
          _
        $region24: #{tpu_custom_call.1} parent=11 // pred_fallthru
          _
        // Predicated region
        $region25: #{tpu_custom_call.1} parent=11 // pred_check
          %p174 = pneg %p124
        $region26: #{tpu_custom_call.1} parent=11 // pred_check_branch
          %176 = sbr.rel (%p174) target = $region28
        $region27: #{tpu_custom_call.1} parent=11 // pred_region
          _
        $region28: #{tpu_custom_call.1} parent=11 // pred_fallthru
          _
      $region12: #{tpu_custom_call.1} parent=5 // pred_fallthru
        _
      %p177 = scmp.lt.s32.totalorder %s14, 2
      // Predicated region
      $region29: #{tpu_custom_call.1} parent=5 // pred_check
        %p178 = pneg %p177
      $region30: #{tpu_custom_call.1} parent=5 // pred_check_branch
        %180 = sbr.rel (%p178) target = $region32
      $region31: #{tpu_custom_call.1} parent=5 // pred_region
        // Predicated region
        $region33: #{tpu_custom_call.1} parent=31 // pred_check
          %p181 = pneg %p34
        $region34: #{tpu_custom_call.1} parent=31 // pred_check_branch
          %183 = sbr.rel (%p181) target = $region36
        $region35: #{tpu_custom_call.1} parent=31 // pred_region
          %p184 = scmp.lt.s32.totalorder %s14, 1
          %s185 = scalar_select %p184, %s14, 1
          %s186 = smul.addr %s185, 54
          %s187 = smul.addr %s186, 8
          %s188 = scalar_lea.vmem %s0, %s187
        $region36: #{tpu_custom_call.1} parent=31 // pred_fallthru
          _
      $region32: #{tpu_custom_call.1} parent=5 // pred_fallthru
        _
      %p189 = scmp.le.s32.totalorder 1, %s14
      %p190 = scmp.lt.s32.totalorder %s14, 3
      %p191 = pnand %p189, %p190
      %p192 = pneg %p191
      // Predicated region
      $region37: #{tpu_custom_call.1} parent=5 // pred_check
        _
      $region38: #{tpu_custom_call.1} parent=5 // pred_check_branch
        %194 = sbr.rel (%p191) target = $region40
      $region39: #{tpu_custom_call.1} parent=5 // pred_region
        %s195 = ssub.s32 %s14, 1
        %p196 = scmp.lt.s32.totalorder %s19, 1
        %s197 = scalar_select %p196, %s19, 1
        %s198 = smul.addr %s197, 54
        %s199 = smul.addr %s198, 8
        %s200 = scalar_lea.vmem %s0, %s199
        %p201 = pneg %p40
        %p202 = pneg %p37
        %p203 = pneg %p61
        %p204 = pneg %p58
        %p205 = pneg %p82
        %p206 = pneg %p79
        %p207 = pneg %p103
        %p208 = pneg %p100
        %p209 = pneg %p124
        %p210 = pneg %p121
        %p211 = pneg %p150
        %p212 = pneg %p147
        %s213 = sand.u32 %s137, 1
        %s214 = scalar_lea.sflag [#allocation3], %s213
        %s215 = sand.u32 %s137, 1
        %s216 = smul.addr %s215, 16
        %s217 = scalar_lea.vmem [#allocation2], %s216
        %p218 = scmp.lt.s32.totalorder %s19, 1
        %s219 = scalar_select %p218, %s19, 1
        %s220 = smul.addr %s219, 54
        %s221 = smul.addr %s220, 8
        %s222 = scalar_lea.vmem %s0, %s221
        %v224 = vld [vmem:[%s222] sm:$0xff]
        %v225 = vld [vmem:[%s222 + $0x8] sm:$0xff]
        %v226 = vld [vmem:[%s222 + $0x10] sm:$0x3]
        %v227 = vld [vmem:[%s222 + $0x18] sm:$0xff]
        %v228 = vld [vmem:[%s222 + $0x20] sm:$0xff]
        %v229 = vld [vmem:[%s222 + $0x28] sm:$0x3]
        %v230 = vld [vmem:[%s222 + $0x30] sm:$0xff]
        %v231 = vld [vmem:[%s222 + $0x38] sm:$0xff]
        %v232 = vld [vmem:[%s222 + $0x40] sm:$0x3]
        %v233 = vld [vmem:[%s222 + $0x48] sm:$0xff]
        %v234 = vld [vmem:[%s222 + $0x50] sm:$0xff]
        %v235 = vld [vmem:[%s222 + $0x58] sm:$0x3]
        %v236 = vld [vmem:[%s222 + $0x60] sm:$0xff]
        %v237 = vld [vmem:[%s222 + $0x68] sm:$0xff]
        %v238 = vld [vmem:[%s222 + $0x70] sm:$0x3]
        %v239 = vld [vmem:[%s222 + $0x78] sm:$0xff]
        %v240 = vld [vmem:[%s222 + $0x80] sm:$0xff]
        %v241 = vld [vmem:[%s222 + $0x88] sm:$0x3]
        %v242 = vld [vmem:[%s222 + $0x90] sm:$0xff]
        %v243 = vld [vmem:[%s222 + $0x98] sm:$0xff]
        %v244 = vld [vmem:[%s222 + $0xa0] sm:$0x3]
        %v245 = vld [vmem:[%s222 + $0xa8] sm:$0xff]
        %v246 = vld [vmem:[%s222 + $0xb0] sm:$0xff]
        %v247 = vld [vmem:[%s222 + $0xb8] sm:$0x3]
        %v248 = vld [vmem:[%s222 + $0xc0] sm:$0xff]
        %v249 = vld [vmem:[%s222 + $0xc8] sm:$0xff]
        %v250 = vld [vmem:[%s222 + $0xd0] sm:$0x3]
        %v251 = vld [vmem:[%s222 + $0xd8] sm:$0xff]
        %v252 = vld [vmem:[%s222 + $0xe0] sm:$0xff]
        %v253 = vld [vmem:[%s222 + $0xe8] sm:$0x3]
        %v254 = vld [vmem:[%s222 + $0xf0] sm:$0xff]
        %v255 = vld [vmem:[%s222 + $0xf8] sm:$0xff]
        %v256 = vld [vmem:[%s222 + $0x100] sm:$0x3]
        %v257 = vld [vmem:[%s222 + $0x108] sm:$0xff]
        %v258 = vld [vmem:[%s222 + $0x110] sm:$0xff]
        %v259 = vld [vmem:[%s222 + $0x118] sm:$0x3]
        %v260 = vld [vmem:[%s222 + $0x120] sm:$0xff]
        %v261 = vld [vmem:[%s222 + $0x128] sm:$0xff]
        %v262 = vld [vmem:[%s222 + $0x130] sm:$0x3]
        %v263 = vld [vmem:[%s222 + $0x138] sm:$0xff]
        %v264 = vld [vmem:[%s222 + $0x140] sm:$0xff]
        %v265 = vld [vmem:[%s222 + $0x148] sm:$0x3]
        %v266 = vld [vmem:[%s222 + $0x150] sm:$0xff]
        %v267 = vld [vmem:[%s222 + $0x158] sm:$0xff]
        %v268 = vld [vmem:[%s222 + $0x160] sm:$0x3]
        %v269 = vld [vmem:[%s222 + $0x168] sm:$0xff]
        %v270 = vld [vmem:[%s222 + $0x170] sm:$0xff]
        %v271 = vld [vmem:[%s222 + $0x178] sm:$0x3]
        %v272 = vpack.c.bf16 %v225, %v224
        %v273 = vpack.c.bf16 %v228, %v227
        %v274 = vpack.c.bf16 %v231, %v230
        %v275 = vpack.c.bf16 %v234, %v233
        %v276 = vpack.c.bf16 %v237, %v236
        %v277 = vpack.c.bf16 %v240, %v239
        %v278 = vpack.c.bf16 %v243, %v242
        %v279 = vpack.c.bf16 %v246, %v245
        %v280 = vpack.c.bf16 %v249, %v248
        %v281 = vpack.c.bf16 %v252, %v251
        %v282 = vpack.c.bf16 %v255, %v254
        %v283 = vpack.c.bf16 %v258, %v257
        %v284 = vpack.c.bf16 %v261, %v260
        %v285 = vpack.c.bf16 %v264, %v263
        %v286 = vpack.c.bf16 %v267, %v266
        %v287 = vpack.c.bf16 %v270, %v269
        %v288 = vld [vmem:[%s1] sm:$0xf]
        %v289 = vld [vmem:[%s1 + $0x4] sm:$0xf]
        %v290 = vld [vmem:[%s1 + $0x8] sm:$0xf]
        %v291 = vld [vmem:[%s1 + $0xc] sm:$0xf]
        %vm340 = vcmask 1046528
        %v341 = vrot.slane %v224, 1
        %v342 = vrot.slane %v225, 1
        %v343 = vsel %vm340, %v341, %v342
        %v344 = vrot.slane %v226, 1
        %v345 = vsel %vm340, %v342, %v344
        %v346 = vrot.slane %v227, 1
        %v347 = vrot.slane %v228, 1
        %v348 = vsel %vm340, %v346, %v347
        %v349 = vrot.slane %v229, 1
        %v350 = vsel %vm340, %v347, %v349
        %v351 = vrot.slane %v230, 1
        %v352 = vrot.slane %v231, 1
        %v353 = vsel %vm340, %v351, %v352
        %v354 = vrot.slane %v232, 1
        %v355 = vsel %vm340, %v352, %v354
        %v356 = vrot.slane %v233, 1
        %v357 = vrot.slane %v234, 1
        %v358 = vsel %vm340, %v356, %v357
        %v359 = vrot.slane %v235, 1
        %v360 = vsel %vm340, %v357, %v359
        %v361 = vrot.slane %v236, 1
        %v362 = vrot.slane %v237, 1
        %v363 = vsel %vm340, %v361, %v362
        %v364 = vrot.slane %v238, 1
        %v365 = vsel %vm340, %v362, %v364
        %v366 = vrot.slane %v239, 1
        %v367 = vrot.slane %v240, 1
        %v368 = vsel %vm340, %v366, %v367
        %v369 = vrot.slane %v241, 1
        %v370 = vsel %vm340, %v367, %v369
        %v371 = vrot.slane %v242, 1
        %v372 = vrot.slane %v243, 1
        %v373 = vsel %vm340, %v371, %v372
        %v374 = vrot.slane %v244, 1
        %v375 = vsel %vm340, %v372, %v374
        %v376 = vrot.slane %v245, 1
        %v377 = vrot.slane %v246, 1
        %v378 = vsel %vm340, %v376, %v377
        %v379 = vrot.slane %v247, 1
        %v380 = vsel %vm340, %v377, %v379
        %v381 = vrot.slane %v248, 1
        %v382 = vrot.slane %v249, 1
        %v383 = vsel %vm340, %v381, %v382
        %v384 = vrot.slane %v250, 1
        %v385 = vsel %vm340, %v382, %v384
        %v386 = vrot.slane %v251, 1
        %v387 = vrot.slane %v252, 1
        %v388 = vsel %vm340, %v386, %v387
        %v389 = vrot.slane %v253, 1
        %v390 = vsel %vm340, %v387, %v389
        %v391 = vrot.slane %v254, 1
        %v392 = vrot.slane %v255, 1
        %v393 = vsel %vm340, %v391, %v392
        %v394 = vrot.slane %v256, 1
        %v395 = vsel %vm340, %v392, %v394
        %v396 = vrot.slane %v257, 1
        %v397 = vrot.slane %v258, 1
        %v398 = vsel %vm340, %v396, %v397
        %v399 = vrot.slane %v259, 1
        %v400 = vsel %vm340, %v397, %v399
        %v401 = vrot.slane %v260, 1
        %v402 = vrot.slane %v261, 1
        %v403 = vsel %vm340, %v401, %v402
        %v404 = vrot.slane %v262, 1
        %v405 = vsel %vm340, %v402, %v404
        %v406 = vrot.slane %v263, 1
        %v407 = vrot.slane %v264, 1
        %v408 = vsel %vm340, %v406, %v407
        %v409 = vrot.slane %v265, 1
        %v410 = vsel %vm340, %v407, %v409
        %v411 = vrot.slane %v266, 1
        %v412 = vrot.slane %v267, 1
        %v413 = vsel %vm340, %v411, %v412
        %v414 = vrot.slane %v268, 1
        %v415 = vsel %vm340, %v412, %v414
        %v416 = vrot.slane %v269, 1
        %v417 = vrot.slane %v270, 1
        %v418 = vsel %vm340, %v416, %v417
        %v419 = vrot.slane %v271, 1
        %v420 = vsel %vm340, %v417, %v419
        %v453 = vpack.c.bf16 %v345, %v343
        %v454 = vpack.c.bf16 %v350, %v348
        %v455 = vpack.c.bf16 %v355, %v353
        %v456 = vpack.c.bf16 %v360, %v358
        %v457 = vpack.c.bf16 %v365, %v363
        %v458 = vpack.c.bf16 %v370, %v368
        %v459 = vpack.c.bf16 %v375, %v373
        %v460 = vpack.c.bf16 %v380, %v378
        %v461 = vpack.c.bf16 %v385, %v383
        %v462 = vpack.c.bf16 %v390, %v388
        %v463 = vpack.c.bf16 %v395, %v393
        %v464 = vpack.c.bf16 %v400, %v398
        %v465 = vpack.c.bf16 %v405, %v403
        %v466 = vpack.c.bf16 %v410, %v408
        %v467 = vpack.c.bf16 %v415, %v413
        %v468 = vpack.c.bf16 %v420, %v418
        %s469 = scalar_lea.vmem %s1, 16
        %v470 = vld [vmem:[%s469] sm:$0xf]
        %v471 = vld [vmem:[%s469 + $0x4] sm:$0xf]
        %v472 = vld [vmem:[%s469 + $0x8] sm:$0xf]
        %v473 = vld [vmem:[%s469 + $0xc] sm:$0xf]
        %v478 = vunpack.c.l.b16 %v470
        %v479 = vunpack.c.l.b16 %v471
        %v480 = vunpack.c.l.b16 %v472
        %v481 = vunpack.c.l.b16 %v473
        %v482 = vpack.c.b16 %v479, %v478
        %v483 = vpack.c.b16 %v481, %v480
        %vm486 = vcmask 261120
        %v488 = vsel %vm486, %v453, 0
        %v491 = vsel %vm486, %v454, 0
        %v494 = vsel %vm486, %v455, 0
        %v497 = vsel %vm486, %v456, 0
        %v500 = vsel %vm486, %v457, 0
        %v503 = vsel %vm486, %v458, 0
        %v506 = vsel %vm486, %v459, 0
        %v509 = vsel %vm486, %v460, 0
        %v512 = vsel %vm486, %v461, 0
        %v515 = vsel %vm486, %v462, 0
        %v518 = vsel %vm486, %v463, 0
        %v521 = vsel %vm486, %v464, 0
        %v524 = vsel %vm486, %v465, 0
        %v527 = vsel %vm486, %v466, 0
        %v530 = vsel %vm486, %v467, 0
        %v533 = vsel %vm486, %v468, 0
        %535 = vmatprep.subr.bf16.mxu0 0
        %536 = vmatpush1.bf16.msra.mxu0 %v482
        %537 = vmatprep.subr.bf16.mxu0 0
        %538 = vmatpush1.bf16.msra.mxu0 %v483
        %539 = vmatprep.subr.bf16.mxu0 0
        %540 = vmatpush1.bf16.msra.mxu0 0
        %541 = vmatprep.subr.bf16.mxu0 0
        %542 = vmatpush1.bf16.msra.mxu0 0
        %543 = vmatprep.subr.bf16.mxu0 0
        %544 = vmatpush1.bf16.msra.mxu0 0
        %545 = vmatprep.subr.bf16.mxu0 0
        %546 = vmatpush1.bf16.msra.mxu0 0
        %547 = vmatprep.subr.bf16.mxu0 0
        %548 = vmatpush1.bf16.msra.mxu0 0
        %549 = vmatprep.subr.bf16.mxu0 0
        %550 = vmatpush1.bf16.msra.mxu0 0
        %551 = vmatprep.subr.bf16.mxu0 0
        %552 = vmatpush1.bf16.msra.mxu0 0
        %553 = vmatprep.subr.bf16.mxu0 0
        %554 = vmatpush1.bf16.msra.mxu0 0
        %555 = vmatprep.subr.bf16.mxu0 0
        %556 = vmatpush1.bf16.msra.mxu0 0
        %557 = vmatprep.subr.bf16.mxu0 0
        %558 = vmatpush1.bf16.msra.mxu0 0
        %559 = vmatprep.subr.bf16.mxu0 0
        %560 = vmatpush1.bf16.msra.mxu0 0
        %561 = vmatprep.subr.bf16.mxu0 0
        %562 = vmatpush1.bf16.msra.mxu0 0
        %563 = vmatprep.subr.bf16.mxu0 0
        %564 = vmatpush1.bf16.msra.mxu0 0
        %565 = vmatprep.subr.bf16.mxu0 0
        %566 = vmatpush1.bf16.msra.mxu0 0
        %567 = vmatprep.mubr.bf16.mxu0 0
        %568 = vmatmul.mubr.bf16.gmra.mrb[0].mxu0 %v488
        %v569 = vpop.f32.mrb[0].mxu0
        %v570 = vadd.f32 0.0, %v569
        %v571 = vpop.f32.mrb[0].mxu0
        %v572 = vpop.f32.mrb[0].mxu0
        %v573 = vadd.f32 0.0, %v572
        %v574 = vpop.f32.mrb[0].mxu0
        %575 = vmatprep.mubr.bf16.mxu0 0
        %576 = vmatmul.mubr.bf16.gmra.mrb[0].mxu0 %v491
        %v577 = vpop.f32.mrb[0].mxu0
        %v578 = vadd.f32 0.0, %v577
        %v579 = vpop.f32.mrb[0].mxu0
        %v580 = vpop.f32.mrb[0].mxu0
        %v581 = vadd.f32 0.0, %v580
        %v582 = vpop.f32.mrb[0].mxu0
        %583 = vmatprep.mubr.bf16.mxu0 0
        %584 = vmatmul.mubr.bf16.gmra.mrb[0].mxu0 %v494
        %v585 = vpop.f32.mrb[0].mxu0
        %v586 = vadd.f32 0.0, %v585
        %v587 = vpop.f32.mrb[0].mxu0
        %v588 = vpop.f32.mrb[0].mxu0
        %v589 = vadd.f32 0.0, %v588
        %v590 = vpop.f32.mrb[0].mxu0
        %591 = vmatprep.mubr.bf16.mxu0 0
        %592 = vmatmul.mubr.bf16.gmra.mrb[0].mxu0 %v497
        %v593 = vpop.f32.mrb[0].mxu0
        %v594 = vadd.f32 0.0, %v593
        %v595 = vpop.f32.mrb[0].mxu0
        %v596 = vpop.f32.mrb[0].mxu0
        %v597 = vadd.f32 0.0, %v596
        %v598 = vpop.f32.mrb[0].mxu0
        %599 = vmatprep.mubr.bf16.mxu0 0
        %600 = vmatmul.mubr.bf16.gmra.mrb[0].mxu0 %v500
        %v601 = vpop.f32.mrb[0].mxu0
        %v602 = vadd.f32 0.0, %v601
        %v603 = vpop.f32.mrb[0].mxu0
        %v604 = vpop.f32.mrb[0].mxu0
        %v605 = vadd.f32 0.0, %v604
        %v606 = vpop.f32.mrb[0].mxu0
        %607 = vmatprep.mubr.bf16.mxu0 0
        %608 = vmatmul.mubr.bf16.gmra.mrb[0].mxu0 %v503
        %v609 = vpop.f32.mrb[0].mxu0
        %v610 = vadd.f32 0.0, %v609
        %v611 = vpop.f32.mrb[0].mxu0
        %v612 = vpop.f32.mrb[0].mxu0
        %v613 = vadd.f32 0.0, %v612
        %v614 = vpop.f32.mrb[0].mxu0
        %615 = vmatprep.mubr.bf16.mxu0 0
        %616 = vmatmul.mubr.bf16.gmra.mrb[0].mxu0 %v506
        %v617 = vpop.f32.mrb[0].mxu0
        %v618 = vadd.f32 0.0, %v617
        %v619 = vpop.f32.mrb[0].mxu0
        %v620 = vpop.f32.mrb[0].mxu0
        %v621 = vadd.f32 0.0, %v620
        %v622 = vpop.f32.mrb[0].mxu0
        %623 = vmatprep.mubr.bf16.mxu0 0
        %624 = vmatmul.mubr.bf16.gmra.mrb[0].mxu0 %v509
        %v625 = vpop.f32.mrb[0].mxu0
        %v626 = vadd.f32 0.0, %v625
        %v627 = vpop.f32.mrb[0].mxu0
        %v628 = vpop.f32.mrb[0].mxu0
        %v629 = vadd.f32 0.0, %v628
        %v630 = vpop.f32.mrb[0].mxu0
        %631 = vmatprep.mubr.bf16.mxu0 0
        %632 = vmatmul.mubr.bf16.gmra.mrb[0].mxu0 %v512
        %v633 = vpop.f32.mrb[0].mxu0
        %v634 = vadd.f32 0.0, %v633
        %v635 = vpop.f32.mrb[0].mxu0
        %v636 = vpop.f32.mrb[0].mxu0
        %v637 = vadd.f32 0.0, %v636
        %v638 = vpop.f32.mrb[0].mxu0
        %639 = vmatprep.mubr.bf16.mxu0 0
        %640 = vmatmul.mubr.bf16.gmra.mrb[0].mxu0 %v515
        %v641 = vpop.f32.mrb[0].mxu0
        %v642 = vadd.f32 0.0, %v641
        %v643 = vpop.f32.mrb[0].mxu0
        %v644 = vpop.f32.mrb[0].mxu0
        %v645 = vadd.f32 0.0, %v644
        %v646 = vpop.f32.mrb[0].mxu0
        %647 = vmatprep.mubr.bf16.mxu0 0
        %648 = vmatmul.mubr.bf16.gmra.mrb[0].mxu0 %v518
        %v649 = vpop.f32.mrb[0].mxu0
        %v650 = vadd.f32 0.0, %v649
        %v651 = vpop.f32.mrb[0].mxu0
        %v652 = vpop.f32.mrb[0].mxu0
        %v653 = vadd.f32 0.0, %v652
        %v654 = vpop.f32.mrb[0].mxu0
        %655 = vmatprep.mubr.bf16.mxu0 0
        %656 = vmatmul.mubr.bf16.gmra.mrb[0].mxu0 %v521
        %v657 = vpop.f32.mrb[0].mxu0
        %v658 = vadd.f32 0.0, %v657
        %v659 = vpop.f32.mrb[0].mxu0
        %v660 = vpop.f32.mrb[0].mxu0
        %v661 = vadd.f32 0.0, %v660
        %v662 = vpop.f32.mrb[0].mxu0
        %663 = vmatprep.mubr.bf16.mxu0 0
        %664 = vmatmul.mubr.bf16.gmra.mrb[0].mxu0 %v524
        %v665 = vpop.f32.mrb[0].mxu0
        %v666 = vadd.f32 0.0, %v665
        %v667 = vpop.f32.mrb[0].mxu0
        %v668 = vpop.f32.mrb[0].mxu0
        %v669 = vadd.f32 0.0, %v668
        %v670 = vpop.f32.mrb[0].mxu0
        %671 = vmatprep.mubr.bf16.mxu0 0
        %672 = vmatmul.mubr.bf16.gmra.mrb[0].mxu0 %v527
        %v673 = vpop.f32.mrb[0].mxu0
        %v674 = vadd.f32 0.0, %v673
        %v675 = vpop.f32.mrb[0].mxu0
        %v676 = vpop.f32.mrb[0].mxu0
        %v677 = vadd.f32 0.0, %v676
        %v678 = vpop.f32.mrb[0].mxu0
        %679 = vmatprep.mubr.bf16.mxu0 0
        %680 = vmatmul.mubr.bf16.gmra.mrb[0].mxu0 %v530
        %v681 = vpop.f32.mrb[0].mxu0
        %v682 = vadd.f32 0.0, %v681
        %v683 = vpop.f32.mrb[0].mxu0
        %v684 = vpop.f32.mrb[0].mxu0
        %v685 = vadd.f32 0.0, %v684
        %v686 = vpop.f32.mrb[0].mxu0
        %687 = vmatprep.mubr.bf16.mxu0 0
        %688 = vmatmul.mubr.bf16.gmra.mrb[0].mxu0 %v533
        %v689 = vpop.f32.mrb[0].mxu0
        %v690 = vadd.f32 0.0, %v689
        %v691 = vpop.f32.mrb[0].mxu0
        %v692 = vpop.f32.mrb[0].mxu0
        %v693 = vadd.f32 0.0, %v692
        %v694 = vpop.f32.mrb[0].mxu0
        %695 = vdwg.mxu0
        %v700 = vunpack.c.l.b16 %v288
        %v701 = vunpack.c.l.b16 %v289
        %v702 = vunpack.c.l.b16 %v290
        %v703 = vunpack.c.l.b16 %v291
        %v704 = vpack.c.b16 %v701, %v700
        %v705 = vpack.c.b16 %v703, %v702
        %v709 = vsel %vm486, %v272, 0
        %v712 = vsel %vm486, %v273, 0
        %v715 = vsel %vm486, %v274, 0
        %v718 = vsel %vm486, %v275, 0
        %v721 = vsel %vm486, %v276, 0
        %v724 = vsel %vm486, %v277, 0
        %v727 = vsel %vm486, %v278, 0
        %v730 = vsel %vm486, %v279, 0
        %v733 = vsel %vm486, %v280, 0
        %v736 = vsel %vm486, %v281, 0
        %v739 = vsel %vm486, %v282, 0
        %v742 = vsel %vm486, %v283, 0
        %v745 = vsel %vm486, %v284, 0
        %v748 = vsel %vm486, %v285, 0
        %v751 = vsel %vm486, %v286, 0
        %v754 = vsel %vm486, %v287, 0
        %756 = vmatprep.subr.bf16.mxu0 0
        %757 = vmatpush1.bf16.msra.mxu0 %v704
        %758 = vmatprep.subr.bf16.mxu0 0
        %759 = vmatpush1.bf16.msra.mxu0 %v705
        %760 = vmatprep.subr.bf16.mxu0 0
        %761 = vmatpush1.bf16.msra.mxu0 0
        %762 = vmatprep.subr.bf16.mxu0 0
        %763 = vmatpush1.bf16.msra.mxu0 0
        %764 = vmatprep.subr.bf16.mxu0 0
        %765 = vmatpush1.bf16.msra.mxu0 0
        %766 = vmatprep.subr.bf16.mxu0 0
        %767 = vmatpush1.bf16.msra.mxu0 0
        %768 = vmatprep.subr.bf16.mxu0 0
        %769 = vmatpush1.bf16.msra.mxu0 0
        %770 = vmatprep.subr.bf16.mxu0 0
        %771 = vmatpush1.bf16.msra.mxu0 0
        %772 = vmatprep.subr.bf16.mxu0 0
        %773 = vmatpush1.bf16.msra.mxu0 0
        %774 = vmatprep.subr.bf16.mxu0 0
        %775 = vmatpush1.bf16.msra.mxu0 0
        %776 = vmatprep.subr.bf16.mxu0 0
        %777 = vmatpush1.bf16.msra.mxu0 0
        %778 = vmatprep.subr.bf16.mxu0 0
        %779 = vmatpush1.bf16.msra.mxu0 0
        %780 = vmatprep.subr.bf16.mxu0 0
        %781 = vmatpush1.bf16.msra.mxu0 0
        %782 = vmatprep.subr.bf16.mxu0 0
        %783 = vmatpush1.bf16.msra.mxu0 0
        %784 = vmatprep.subr.bf16.mxu0 0
        %785 = vmatpush1.bf16.msra.mxu0 0
        %786 = vmatprep.subr.bf16.mxu0 0
        %787 = vmatpush1.bf16.msra.mxu0 0
        %788 = vmatprep.mubr.bf16.mxu0 0
        %789 = vmatmul.mubr.bf16.gmra.mrb[0].mxu0 %v709
        %v790 = vpop.f32.mrb[0].mxu0
        %v791 = vadd.f32 %v570, %v790
        %v792 = vpop.f32.mrb[0].mxu0
        %v793 = vpop.f32.mrb[0].mxu0
        %v794 = vadd.f32 %v573, %v793
        %v795 = vpop.f32.mrb[0].mxu0
        %796 = vmatprep.mubr.bf16.mxu0 0
        %797 = vmatmul.mubr.bf16.gmra.mrb[0].mxu0 %v712
        %v798 = vpop.f32.mrb[0].mxu0
        %v799 = vadd.f32 %v578, %v798
        %v800 = vpop.f32.mrb[0].mxu0
        %v801 = vpop.f32.mrb[0].mxu0
        %v802 = vadd.f32 %v581, %v801
        %v803 = vpop.f32.mrb[0].mxu0
        %804 = vmatprep.mubr.bf16.mxu0 0
        %805 = vmatmul.mubr.bf16.gmra.mrb[0].mxu0 %v715
        %v806 = vpop.f32.mrb[0].mxu0
        %v807 = vadd.f32 %v586, %v806
        %v808 = vpop.f32.mrb[0].mxu0
        %v809 = vpop.f32.mrb[0].mxu0
        %v810 = vadd.f32 %v589, %v809
        %v811 = vpop.f32.mrb[0].mxu0
        %812 = vmatprep.mubr.bf16.mxu0 0
        %813 = vmatmul.mubr.bf16.gmra.mrb[0].mxu0 %v718
        %v814 = vpop.f32.mrb[0].mxu0
        %v815 = vadd.f32 %v594, %v814
        %v816 = vpop.f32.mrb[0].mxu0
        %v817 = vpop.f32.mrb[0].mxu0
        %v818 = vadd.f32 %v597, %v817
        %v819 = vpop.f32.mrb[0].mxu0
        %820 = vmatprep.mubr.bf16.mxu0 0
        %821 = vmatmul.mubr.bf16.gmra.mrb[0].mxu0 %v721
        %v822 = vpop.f32.mrb[0].mxu0
        %v823 = vadd.f32 %v602, %v822
        %v824 = vpop.f32.mrb[0].mxu0
        %v825 = vpop.f32.mrb[0].mxu0
        %v826 = vadd.f32 %v605, %v825
        %v827 = vpop.f32.mrb[0].mxu0
        %828 = vmatprep.mubr.bf16.mxu0 0
        %829 = vmatmul.mubr.bf16.gmra.mrb[0].mxu0 %v724
        %v830 = vpop.f32.mrb[0].mxu0
        %v831 = vadd.f32 %v610, %v830
        %v832 = vpop.f32.mrb[0].mxu0
        %v833 = vpop.f32.mrb[0].mxu0
        %v834 = vadd.f32 %v613, %v833
        %v835 = vpop.f32.mrb[0].mxu0
        %836 = vmatprep.mubr.bf16.mxu0 0
        %837 = vmatmul.mubr.bf16.gmra.mrb[0].mxu0 %v727
        %v838 = vpop.f32.mrb[0].mxu0
        %v839 = vadd.f32 %v618, %v838
        %v840 = vpop.f32.mrb[0].mxu0
        %v841 = vpop.f32.mrb[0].mxu0
        %v842 = vadd.f32 %v621, %v841
        %v843 = vpop.f32.mrb[0].mxu0
        %844 = vmatprep.mubr.bf16.mxu0 0
        %845 = vmatmul.mubr.bf16.gmra.mrb[0].mxu0 %v730
        %v846 = vpop.f32.mrb[0].mxu0
        %v847 = vadd.f32 %v626, %v846
        %v848 = vpop.f32.mrb[0].mxu0
        %v849 = vpop.f32.mrb[0].mxu0
        %v850 = vadd.f32 %v629, %v849
        %v851 = vpop.f32.mrb[0].mxu0
        %852 = vmatprep.mubr.bf16.mxu0 0
        %853 = vmatmul.mubr.bf16.gmra.mrb[0].mxu0 %v733
        %v854 = vpop.f32.mrb[0].mxu0
        %v855 = vadd.f32 %v634, %v854
        %v856 = vpop.f32.mrb[0].mxu0
        %v857 = vpop.f32.mrb[0].mxu0
        %v858 = vadd.f32 %v637, %v857
        %v859 = vpop.f32.mrb[0].mxu0
        %860 = vmatprep.mubr.bf16.mxu0 0
        %861 = vmatmul.mubr.bf16.gmra.mrb[0].mxu0 %v736
        %v862 = vpop.f32.mrb[0].mxu0
        %v863 = vadd.f32 %v642, %v862
        %v864 = vpop.f32.mrb[0].mxu0
        %v865 = vpop.f32.mrb[0].mxu0
        %v866 = vadd.f32 %v645, %v865
        %v867 = vpop.f32.mrb[0].mxu0
        %868 = vmatprep.mubr.bf16.mxu0 0
        %869 = vmatmul.mubr.bf16.gmra.mrb[0].mxu0 %v739
        %v870 = vpop.f32.mrb[0].mxu0
        %v871 = vadd.f32 %v650, %v870
        %v872 = vpop.f32.mrb[0].mxu0
        %v873 = vpop.f32.mrb[0].mxu0
        %v874 = vadd.f32 %v653, %v873
        %v875 = vpop.f32.mrb[0].mxu0
        %876 = vmatprep.mubr.bf16.mxu0 0
        %877 = vmatmul.mubr.bf16.gmra.mrb[0].mxu0 %v742
        %v878 = vpop.f32.mrb[0].mxu0
        %v879 = vadd.f32 %v658, %v878
        %v880 = vpop.f32.mrb[0].mxu0
        %v881 = vpop.f32.mrb[0].mxu0
        %v882 = vadd.f32 %v661, %v881
        %v883 = vpop.f32.mrb[0].mxu0
        %884 = vmatprep.mubr.bf16.mxu0 0
        %885 = vmatmul.mubr.bf16.gmra.mrb[0].mxu0 %v745
        %v886 = vpop.f32.mrb[0].mxu0
        %v887 = vadd.f32 %v666, %v886
        %v888 = vpop.f32.mrb[0].mxu0
        %v889 = vpop.f32.mrb[0].mxu0
        %v890 = vadd.f32 %v669, %v889
        %v891 = vpop.f32.mrb[0].mxu0
        %892 = vmatprep.mubr.bf16.mxu0 0
        %893 = vmatmul.mubr.bf16.gmra.mrb[0].mxu0 %v748
        %v894 = vpop.f32.mrb[0].mxu0
        %v895 = vadd.f32 %v674, %v894
        %v896 = vpop.f32.mrb[0].mxu0
        %v897 = vpop.f32.mrb[0].mxu0
        %v898 = vadd.f32 %v677, %v897
        %v899 = vpop.f32.mrb[0].mxu0
        %900 = vmatprep.mubr.bf16.mxu0 0
        %901 = vmatmul.mubr.bf16.gmra.mrb[0].mxu0 %v751
        %v902 = vpop.f32.mrb[0].mxu0
        %v903 = vadd.f32 %v682, %v902
        %v904 = vpop.f32.mrb[0].mxu0
        %v905 = vpop.f32.mrb[0].mxu0
        %v906 = vadd.f32 %v685, %v905
        %v907 = vpop.f32.mrb[0].mxu0
        %908 = vmatprep.mubr.bf16.mxu0 0
        %909 = vmatmul.mubr.bf16.gmra.mrb[0].mxu0 %v754
        %v910 = vpop.f32.mrb[0].mxu0
        %v911 = vadd.f32 %v690, %v910
        %v912 = vpop.f32.mrb[0].mxu0
        %v913 = vpop.f32.mrb[0].mxu0
        %v914 = vadd.f32 %v693, %v913
        %v915 = vpop.f32.mrb[0].mxu0
        %916 = vdwg.mxu0
        %vm917 = vcmask 1045504
        %v918 = vrot.slane %v224, 2
        %v919 = vrot.slane %v225, 2
        %v920 = vsel %vm917, %v918, %v919
        %v921 = vrot.slane %v226, 2
        %v922 = vsel %vm917, %v919, %v921
        %v923 = vrot.slane %v227, 2
        %v924 = vrot.slane %v228, 2
        %v925 = vsel %vm917, %v923, %v924
        %v926 = vrot.slane %v229, 2
        %v927 = vsel %vm917, %v924, %v926
        %v928 = vrot.slane %v230, 2
        %v929 = vrot.slane %v231, 2
        %v930 = vsel %vm917, %v928, %v929
        %v931 = vrot.slane %v232, 2
        %v932 = vsel %vm917, %v929, %v931
        %v933 = vrot.slane %v233, 2
        %v934 = vrot.slane %v234, 2
        %v935 = vsel %vm917, %v933, %v934
        %v936 = vrot.slane %v235, 2
        %v937 = vsel %vm917, %v934, %v936
        %v938 = vrot.slane %v236, 2
        %v939 = vrot.slane %v237, 2
        %v940 = vsel %vm917, %v938, %v939
        %v941 = vrot.slane %v238, 2
        %v942 = vsel %vm917, %v939, %v941
        %v943 = vrot.slane %v239, 2
        %v944 = vrot.slane %v240, 2
        %v945 = vsel %vm917, %v943, %v944
        %v946 = vrot.slane %v241, 2
        %v947 = vsel %vm917, %v944, %v946
        %v948 = vrot.slane %v242, 2
        %v949 = vrot.slane %v243, 2
        %v950 = vsel %vm917, %v948, %v949
        %v951 = vrot.slane %v244, 2
        %v952 = vsel %vm917, %v949, %v951
        %v953 = vrot.slane %v245, 2
        %v954 = vrot.slane %v246, 2
        %v955 = vsel %vm917, %v953, %v954
        %v956 = vrot.slane %v247, 2
        %v957 = vsel %vm917, %v954, %v956
        %v958 = vrot.slane %v248, 2
        %v959 = vrot.slane %v249, 2
        %v960 = vsel %vm917, %v958, %v959
        %v961 = vrot.slane %v250, 2
        %v962 = vsel %vm917, %v959, %v961
        %v963 = vrot.slane %v251, 2
        %v964 = vrot.slane %v252, 2
        %v965 = vsel %vm917, %v963, %v964
        %v966 = vrot.slane %v253, 2
        %v967 = vsel %vm917, %v964, %v966
        %v968 = vrot.slane %v254, 2
        %v969 = vrot.slane %v255, 2
        %v970 = vsel %vm917, %v968, %v969
        %v971 = vrot.slane %v256, 2
        %v972 = vsel %vm917, %v969, %v971
        %v973 = vrot.slane %v257, 2
        %v974 = vrot.slane %v258, 2
        %v975 = vsel %vm917, %v973, %v974
        %v976 = vrot.slane %v259, 2
        %v977 = vsel %vm917, %v974, %v976
        %v978 = vrot.slane %v260, 2
        %v979 = vrot.slane %v261, 2
        %v980 = vsel %vm917, %v978, %v979
        %v981 = vrot.slane %v262, 2
        %v982 = vsel %vm917, %v979, %v981
        %v983 = vrot.slane %v263, 2
        %v984 = vrot.slane %v264, 2
        %v985 = vsel %vm917, %v983, %v984
        %v986 = vrot.slane %v265, 2
        %v987 = vsel %vm917, %v984, %v986
        %v988 = vrot.slane %v266, 2
        %v989 = vrot.slane %v267, 2
        %v990 = vsel %vm917, %v988, %v989
        %v991 = vrot.slane %v268, 2
        %v992 = vsel %vm917, %v989, %v991
        %v993 = vrot.slane %v269, 2
        %v994 = vrot.slane %v270, 2
        %v995 = vsel %vm917, %v993, %v994
        %v996 = vrot.slane %v271, 2
        %v997 = vsel %vm917, %v994, %v996
        %v1030 = vpack.c.bf16 %v922, %v920
        %v1031 = vpack.c.bf16 %v927, %v925
        %v1032 = vpack.c.bf16 %v932, %v930
        %v1033 = vpack.c.bf16 %v937, %v935
        %v1034 = vpack.c.bf16 %v942, %v940
        %v1035 = vpack.c.bf16 %v947, %v945
        %v1036 = vpack.c.bf16 %v952, %v950
        %v1037 = vpack.c.bf16 %v957, %v955
        %v1038 = vpack.c.bf16 %v962, %v960
        %v1039 = vpack.c.bf16 %v967, %v965
        %v1040 = vpack.c.bf16 %v972, %v970
        %v1041 = vpack.c.bf16 %v977, %v975
        %v1042 = vpack.c.bf16 %v982, %v980
        %v1043 = vpack.c.bf16 %v987, %v985
        %v1044 = vpack.c.bf16 %v992, %v990
        %v1045 = vpack.c.bf16 %v997, %v995
        %s1046 = scalar_lea.vmem %s1, 32
        %v1047 = vld [vmem:[%s1046] sm:$0xf]
        %v1048 = vld [vmem:[%s1046 + $0x4] sm:$0xf]
        %v1049 = vld [vmem:[%s1046 + $0x8] sm:$0xf]
        %v1050 = vld [vmem:[%s1046 + $0xc] sm:$0xf]
        %v1055 = vunpack.c.l.b16 %v1047
        %v1056 = vunpack.c.l.b16 %v1048
        %v1057 = vunpack.c.l.b16 %v1049
        %v1058 = vunpack.c.l.b16 %v1050
        %v1059 = vpack.c.b16 %v1056, %v1055
        %v1060 = vpack.c.b16 %v1058, %v1057
        %v1064 = vsel %vm486, %v1030, 0
        %v1067 = vsel %vm486, %v1031, 0
        %v1070 = vsel %vm486, %v1032, 0
        %v1073 = vsel %vm486, %v1033, 0
        %v1076 = vsel %vm486, %v1034, 0
        %v1079 = vsel %vm486, %v1035, 0
        %v1082 = vsel %vm486, %v1036, 0
        %v1085 = vsel %vm486, %v1037, 0
        %v1088 = vsel %vm486, %v1038, 0
        %v1091 = vsel %vm486, %v1039, 0
        %v1094 = vsel %vm486, %v1040, 0
        %v1097 = vsel %vm486, %v1041, 0
        %v1100 = vsel %vm486, %v1042, 0
        %v1103 = vsel %vm486, %v1043, 0
        %v1106 = vsel %vm486, %v1044, 0
        %v1109 = vsel %vm486, %v1045, 0
        %1111 = vmatprep.subr.bf16.mxu0 0
        %1112 = vmatpush1.bf16.msra.mxu0 %v1059
        %1113 = vmatprep.subr.bf16.mxu0 0
        %1114 = vmatpush1.bf16.msra.mxu0 %v1060
        %1115 = vmatprep.subr.bf16.mxu0 0
        %1116 = vmatpush1.bf16.msra.mxu0 0
        %1117 = vmatprep.subr.bf16.mxu0 0
        %1118 = vmatpush1.bf16.msra.mxu0 0
        %1119 = vmatprep.subr.bf16.mxu0 0
        %1120 = vmatpush1.bf16.msra.mxu0 0
        %1121 = vmatprep.subr.bf16.mxu0 0
        %1122 = vmatpush1.bf16.msra.mxu0 0
        %1123 = vmatprep.subr.bf16.mxu0 0
        %1124 = vmatpush1.bf16.msra.mxu0 0
        %1125 = vmatprep.subr.bf16.mxu0 0
        %1126 = vmatpush1.bf16.msra.mxu0 0
        %1127 = vmatprep.subr.bf16.mxu0 0
        %1128 = vmatpush1.bf16.msra.mxu0 0
        %1129 = vmatprep.subr.bf16.mxu0 0
        %1130 = vmatpush1.bf16.msra.mxu0 0
        %1131 = vmatprep.subr.bf16.mxu0 0
        %1132 = vmatpush1.bf16.msra.mxu0 0
        %1133 = vmatprep.subr.bf16.mxu0 0
        %1134 = vmatpush1.bf16.msra.mxu0 0
        %1135 = vmatprep.subr.bf16.mxu0 0
        %1136 = vmatpush1.bf16.msra.mxu0 0
        %1137 = vmatprep.subr.bf16.mxu0 0
        %1138 = vmatpush1.bf16.msra.mxu0 0
        %1139 = vmatprep.subr.bf16.mxu0 0
        %1140 = vmatpush1.bf16.msra.mxu0 0
        %1141 = vmatprep.subr.bf16.mxu0 0
        %1142 = vmatpush1.bf16.msra.mxu0 0
        %1143 = vmatprep.mubr.bf16.mxu0 0
        %1144 = vmatmul.mubr.bf16.gmra.mrb[0].mxu0 %v1064
        %v1145 = vpop.f32.mrb[0].mxu0
        %v1146 = vadd.f32 0.0, %v1145
        %v1147 = vpop.f32.mrb[0].mxu0
        %v1148 = vpop.f32.mrb[0].mxu0
        %v1149 = vadd.f32 0.0, %v1148
        %v1150 = vpop.f32.mrb[0].mxu0
        %1151 = vmatprep.mubr.bf16.mxu0 0
        %1152 = vmatmul.mubr.bf16.gmra.mrb[0].mxu0 %v1067
        %v1153 = vpop.f32.mrb[0].mxu0
        %v1154 = vadd.f32 0.0, %v1153
        %v1155 = vpop.f32.mrb[0].mxu0
        %v1156 = vpop.f32.mrb[0].mxu0
        %v1157 = vadd.f32 0.0, %v1156
        %v1158 = vpop.f32.mrb[0].mxu0
        %1159 = vmatprep.mubr.bf16.mxu0 0
        %1160 = vmatmul.mubr.bf16.gmra.mrb[0].mxu0 %v1070
        %v1161 = vpop.f32.mrb[0].mxu0
        %v1162 = vadd.f32 0.0, %v1161
        %v1163 = vpop.f32.mrb[0].mxu0
        %v1164 = vpop.f32.mrb[0].mxu0
        %v1165 = vadd.f32 0.0, %v1164
        %v1166 = vpop.f32.mrb[0].mxu0
        %1167 = vmatprep.mubr.bf16.mxu0 0
        %1168 = vmatmul.mubr.bf16.gmra.mrb[0].mxu0 %v1073
        %v1169 = vpop.f32.mrb[0].mxu0
        %v1170 = vadd.f32 0.0, %v1169
        %v1171 = vpop.f32.mrb[0].mxu0
        %v1172 = vpop.f32.mrb[0].mxu0
        %v1173 = vadd.f32 0.0, %v1172
        %v1174 = vpop.f32.mrb[0].mxu0
        %1175 = vmatprep.mubr.bf16.mxu0 0
        %1176 = vmatmul.mubr.bf16.gmra.mrb[0].mxu0 %v1076
        %v1177 = vpop.f32.mrb[0].mxu0
        %v1178 = vadd.f32 0.0, %v1177
        %v1179 = vpop.f32.mrb[0].mxu0
        %v1180 = vpop.f32.mrb[0].mxu0
        %v1181 = vadd.f32 0.0, %v1180
        %v1182 = vpop.f32.mrb[0].mxu0
        %1183 = vmatprep.mubr.bf16.mxu0 0
        %1184 = vmatmul.mubr.bf16.gmra.mrb[0].mxu0 %v1079
        %v1185 = vpop.f32.mrb[0].mxu0
        %v1186 = vadd.f32 0.0, %v1185
        %v1187 = vpop.f32.mrb[0].mxu0
        %v1188 = vpop.f32.mrb[0].mxu0
        %v1189 = vadd.f32 0.0, %v1188
        %v1190 = vpop.f32.mrb[0].mxu0
        %1191 = vmatprep.mubr.bf16.mxu0 0
        %1192 = vmatmul.mubr.bf16.gmra.mrb[0].mxu0 %v1082
        %v1193 = vpop.f32.mrb[0].mxu0
        %v1194 = vadd.f32 0.0, %v1193
        %v1195 = vpop.f32.mrb[0].mxu0
        %v1196 = vpop.f32.mrb[0].mxu0
        %v1197 = vadd.f32 0.0, %v1196
        %v1198 = vpop.f32.mrb[0].mxu0
        %1199 = vmatprep.mubr.bf16.mxu0 0
        %1200 = vmatmul.mubr.bf16.gmra.mrb[0].mxu0 %v1085
        %v1201 = vpop.f32.mrb[0].mxu0
        %v1202 = vadd.f32 0.0, %v1201
        %v1203 = vpop.f32.mrb[0].mxu0
        %v1204 = vpop.f32.mrb[0].mxu0
        %v1205 = vadd.f32 0.0, %v1204
        %v1206 = vpop.f32.mrb[0].mxu0
        %1207 = vmatprep.mubr.bf16.mxu0 0
        %1208 = vmatmul.mubr.bf16.gmra.mrb[0].mxu0 %v1088
        %v1209 = vpop.f32.mrb[0].mxu0
        %v1210 = vadd.f32 0.0, %v1209
        %v1211 = vpop.f32.mrb[0].mxu0
        %v1212 = vpop.f32.mrb[0].mxu0
        %v1213 = vadd.f32 0.0, %v1212
        %v1214 = vpop.f32.mrb[0].mxu0
        %1215 = vmatprep.mubr.bf16.mxu0 0
        %1216 = vmatmul.mubr.bf16.gmra.mrb[0].mxu0 %v1091
        %v1217 = vpop.f32.mrb[0].mxu0
        %v1218 = vadd.f32 0.0, %v1217
        %v1219 = vpop.f32.mrb[0].mxu0
        %v1220 = vpop.f32.mrb[0].mxu0
        %v1221 = vadd.f32 0.0, %v1220
        %v1222 = vpop.f32.mrb[0].mxu0
        %1223 = vmatprep.mubr.bf16.mxu0 0
        %1224 = vmatmul.mubr.bf16.gmra.mrb[0].mxu0 %v1094
        %v1225 = vpop.f32.mrb[0].mxu0
        %v1226 = vadd.f32 0.0, %v1225
        %v1227 = vpop.f32.mrb[0].mxu0
        %v1228 = vpop.f32.mrb[0].mxu0
        %v1229 = vadd.f32 0.0, %v1228
        %v1230 = vpop.f32.mrb[0].mxu0
        %1231 = vmatprep.mubr.bf16.mxu0 0
        %1232 = vmatmul.mubr.bf16.gmra.mrb[0].mxu0 %v1097
        %v1233 = vpop.f32.mrb[0].mxu0
        %v1234 = vadd.f32 0.0, %v1233
        %v1235 = vpop.f32.mrb[0].mxu0
        %v1236 = vpop.f32.mrb[0].mxu0
        %v1237 = vadd.f32 0.0, %v1236
        %v1238 = vpop.f32.mrb[0].mxu0
        %1239 = vmatprep.mubr.bf16.mxu0 0
        %1240 = vmatmul.mubr.bf16.gmra.mrb[0].mxu0 %v1100
        %v1241 = vpop.f32.mrb[0].mxu0
        %v1242 = vadd.f32 0.0, %v1241
        %v1243 = vpop.f32.mrb[0].mxu0
        %v1244 = vpop.f32.mrb[0].mxu0
        %v1245 = vadd.f32 0.0, %v1244
        %v1246 = vpop.f32.mrb[0].mxu0
        %1247 = vmatprep.mubr.bf16.mxu0 0
        %1248 = vmatmul.mubr.bf16.gmra.mrb[0].mxu0 %v1103
        %v1249 = vpop.f32.mrb[0].mxu0
        %v1250 = vadd.f32 0.0, %v1249
        %v1251 = vpop.f32.mrb[0].mxu0
        %v1252 = vpop.f32.mrb[0].mxu0
        %v1253 = vadd.f32 0.0, %v1252
        %v1254 = vpop.f32.mrb[0].mxu0
        %1255 = vmatprep.mubr.bf16.mxu0 0
        %1256 = vmatmul.mubr.bf16.gmra.mrb[0].mxu0 %v1106
        %v1257 = vpop.f32.mrb[0].mxu0
        %v1258 = vadd.f32 0.0, %v1257
        %v1259 = vpop.f32.mrb[0].mxu0
        %v1260 = vpop.f32.mrb[0].mxu0
        %v1261 = vadd.f32 0.0, %v1260
        %v1262 = vpop.f32.mrb[0].mxu0
        %1263 = vmatprep.mubr.bf16.mxu0 0
        %1264 = vmatmul.mubr.bf16.gmra.mrb[0].mxu0 %v1109
        %v1265 = vpop.f32.mrb[0].mxu0
        %v1266 = vadd.f32 0.0, %v1265
        %v1267 = vpop.f32.mrb[0].mxu0
        %v1268 = vpop.f32.mrb[0].mxu0
        %v1269 = vadd.f32 0.0, %v1268
        %v1270 = vpop.f32.mrb[0].mxu0
        %1271 = vdwg.mxu0
        %v1272 = vadd.f32 %v791, %v1146
        %v1273 = vadd.f32 %v794, %v1149
        %v1274 = vadd.f32 %v799, %v1154
        %v1275 = vadd.f32 %v802, %v1157
        %v1276 = vadd.f32 %v807, %v1162
        %v1277 = vadd.f32 %v810, %v1165
        %v1278 = vadd.f32 %v815, %v1170
        %v1279 = vadd.f32 %v818, %v1173
        %v1280 = vadd.f32 %v823, %v1178
        %v1281 = vadd.f32 %v826, %v1181
        %v1282 = vadd.f32 %v831, %v1186
        %v1283 = vadd.f32 %v834, %v1189
        %v1284 = vadd.f32 %v839, %v1194
        %v1285 = vadd.f32 %v842, %v1197
        %v1286 = vadd.f32 %v847, %v1202
        %v1287 = vadd.f32 %v850, %v1205
        %v1288 = vadd.f32 %v855, %v1210
        %v1289 = vadd.f32 %v858, %v1213
        %v1290 = vadd.f32 %v863, %v1218
        %v1291 = vadd.f32 %v866, %v1221
        %v1292 = vadd.f32 %v871, %v1226
        %v1293 = vadd.f32 %v874, %v1229
        %v1294 = vadd.f32 %v879, %v1234
        %v1295 = vadd.f32 %v882, %v1237
        %v1296 = vadd.f32 %v887, %v1242
        %v1297 = vadd.f32 %v890, %v1245
        %v1298 = vadd.f32 %v895, %v1250
        %v1299 = vadd.f32 %v898, %v1253
        %v1300 = vadd.f32 %v903, %v1258
        %v1301 = vadd.f32 %v906, %v1261
        %v1302 = vadd.f32 %v911, %v1266
        %v1303 = vadd.f32 %v914, %v1269
        %s1304 = scalar_lea.vmem %s222, 24
        %v1305 = vld [vmem:[%s1304] sm:$0xff]
        %v1306 = vld [vmem:[%s1304 + $0x8] sm:$0xff]
        %v1307 = vld [vmem:[%s1304 + $0x10] sm:$0x3]
        %v1308 = vld [vmem:[%s1304 + $0x18] sm:$0xff]
        %v1309 = vld [vmem:[%s1304 + $0x20] sm:$0xff]
        %v1310 = vld [vmem:[%s1304 + $0x28] sm:$0x3]
        %v1311 = vld [vmem:[%s1304 + $0x30] sm:$0xff]
        %v1312 = vld [vmem:[%s1304 + $0x38] sm:$0xff]
        %v1313 = vld [vmem:[%s1304 + $0x40] sm:$0x3]
        %v1314 = vld [vmem:[%s1304 + $0x48] sm:$0xff]
        %v1315 = vld [vmem:[%s1304 + $0x50] sm:$0xff]
        %v1316 = vld [vmem:[%s1304 + $0x58] sm:$0x3]
        %v1317 = vld [vmem:[%s1304 + $0x60] sm:$0xff]
        %v1318 = vld [vmem:[%s1304 + $0x68] sm:$0xff]
        %v1319 = vld [vmem:[%s1304 + $0x70] sm:$0x3]
        %v1320 = vld [vmem:[%s1304 + $0x78] sm:$0xff]
        %v1321 = vld [vmem:[%s1304 + $0x80] sm:$0xff]
        %v1322 = vld [vmem:[%s1304 + $0x88] sm:$0x3]
        %v1323 = vld [vmem:[%s1304 + $0x90] sm:$0xff]
        %v1324 = vld [vmem:[%s1304 + $0x98] sm:$0xff]
        %v1325 = vld [vmem:[%s1304 + $0xa0] sm:$0x3]
        %v1326 = vld [vmem:[%s1304 + $0xa8] sm:$0xff]
        %v1327 = vld [vmem:[%s1304 + $0xb0] sm:$0xff]
        %v1328 = vld [vmem:[%s1304 + $0xb8] sm:$0x3]
        %v1329 = vld [vmem:[%s1304 + $0xc0] sm:$0xff]
        %v1330 = vld [vmem:[%s1304 + $0xc8] sm:$0xff]
        %v1331 = vld [vmem:[%s1304 + $0xd0] sm:$0x3]
        %v1332 = vld [vmem:[%s1304 + $0xd8] sm:$0xff]
        %v1333 = vld [vmem:[%s1304 + $0xe0] sm:$0xff]
        %v1334 = vld [vmem:[%s1304 + $0xe8] sm:$0x3]
        %v1335 = vld [vmem:[%s1304 + $0xf0] sm:$0xff]
        %v1336 = vld [vmem:[%s1304 + $0xf8] sm:$0xff]
        %v1337 = vld [vmem:[%s1304 + $0x100] sm:$0x3]
        %v1338 = vld [vmem:[%s1304 + $0x108] sm:$0xff]
        %v1339 = vld [vmem:[%s1304 + $0x110] sm:$0xff]
        %v1340 = vld [vmem:[%s1304 + $0x118] sm:$0x3]
        %v1341 = vld [vmem:[%s1304 + $0x120] sm:$0xff]
        %v1342 = vld [vmem:[%s1304 + $0x128] sm:$0xff]
        %v1343 = vld [vmem:[%s1304 + $0x130] sm:$0x3]
        %v1344 = vld [vmem:[%s1304 + $0x138] sm:$0xff]
        %v1345 = vld [vmem:[%s1304 + $0x140] sm:$0xff]
        %v1346 = vld [vmem:[%s1304 + $0x148] sm:$0x3]
        %v1347 = vld [vmem:[%s1304 + $0x150] sm:$0xff]
        %v1348 = vld [vmem:[%s1304 + $0x158] sm:$0xff]
        %v1349 = vld [vmem:[%s1304 + $0x160] sm:$0x3]
        %v1350 = vld [vmem:[%s1304 + $0x168] sm:$0xff]
        %v1351 = vld [vmem:[%s1304 + $0x170] sm:$0xff]
        %v1352 = vld [vmem:[%s1304 + $0x178] sm:$0x3]
        %v1353 = vpack.c.bf16 %v1306, %v1305
        %v1354 = vpack.c.bf16 %v1309, %v1308
        %v1355 = vpack.c.bf16 %v1312, %v1311
        %v1356 = vpack.c.bf16 %v1315, %v1314
        %v1357 = vpack.c.bf16 %v1318, %v1317
        %v1358 = vpack.c.bf16 %v1321, %v1320
        %v1359 = vpack.c.bf16 %v1324, %v1323
        %v1360 = vpack.c.bf16 %v1327, %v1326
        %v1361 = vpack.c.bf16 %v1330, %v1329
        %v1362 = vpack.c.bf16 %v1333, %v1332
        %v1363 = vpack.c.bf16 %v1336, %v1335
        %v1364 = vpack.c.bf16 %v1339, %v1338
        %v1365 = vpack.c.bf16 %v1342, %v1341
        %v1366 = vpack.c.bf16 %v1345, %v1344
        %v1367 = vpack.c.bf16 %v1348, %v1347
        %v1368 = vpack.c.bf16 %v1351, %v1350
        %s1369 = scalar_lea.vmem %s1, 48
        %v1370 = vld [vmem:[%s1369] sm:$0xf]
        %v1371 = vld [vmem:[%s1369 + $0x4] sm:$0xf]
        %v1372 = vld [vmem:[%s1369 + $0x8] sm:$0xf]
        %v1373 = vld [vmem:[%s1369 + $0xc] sm:$0xf]
        %v1378 = vunpack.c.l.b16 %v1370
        %v1379 = vunpack.c.l.b16 %v1371
        %v1380 = vunpack.c.l.b16 %v1372
        %v1381 = vunpack.c.l.b16 %v1373
        %v1382 = vpack.c.b16 %v1379, %v1378
        %v1383 = vpack.c.b16 %v1381, %v1380
        %v1387 = vsel %vm486, %v1353, 0
        %v1390 = vsel %vm486, %v1354, 0
        %v1393 = vsel %vm486, %v1355, 0
        %v1396 = vsel %vm486, %v1356, 0
        %v1399 = vsel %vm486, %v1357, 0
        %v1402 = vsel %vm486, %v1358, 0
        %v1405 = vsel %vm486, %v1359, 0
        %v1408 = vsel %vm486, %v1360, 0
        %v1411 = vsel %vm486, %v1361, 0
        %v1414 = vsel %vm486, %v1362, 0
        %v1417 = vsel %vm486, %v1363, 0
        %v1420 = vsel %vm486, %v1364, 0
        %v1423 = vsel %vm486, %v1365, 0
        %v1426 = vsel %vm486, %v1366, 0
        %v1429 = vsel %vm486, %v1367, 0
        %v1432 = vsel %vm486, %v1368, 0
        %1434 = vmatprep.subr.bf16.mxu0 0
        %1435 = vmatpush1.bf16.msra.mxu0 %v1382
        %1436 = vmatprep.subr.bf16.mxu0 0
        %1437 = vmatpush1.bf16.msra.mxu0 %v1383
        %1438 = vmatprep.subr.bf16.mxu0 0
        %1439 = vmatpush1.bf16.msra.mxu0 0
        %1440 = vmatprep.subr.bf16.mxu0 0
        %1441 = vmatpush1.bf16.msra.mxu0 0
        %1442 = vmatprep.subr.bf16.mxu0 0
        %1443 = vmatpush1.bf16.msra.mxu0 0
        %1444 = vmatprep.subr.bf16.mxu0 0
        %1445 = vmatpush1.bf16.msra.mxu0 0
        %1446 = vmatprep.subr.bf16.mxu0 0
        %1447 = vmatpush1.bf16.msra.mxu0 0
        %1448 = vmatprep.subr.bf16.mxu0 0
        %1449 = vmatpush1.bf16.msra.mxu0 0
        %1450 = vmatprep.subr.bf16.mxu0 0
        %1451 = vmatpush1.bf16.msra.mxu0 0
        %1452 = vmatprep.subr.bf16.mxu0 0
        %1453 = vmatpush1.bf16.msra.mxu0 0
        %1454 = vmatprep.subr.bf16.mxu0 0
        %1455 = vmatpush1.bf16.msra.mxu0 0
        %1456 = vmatprep.subr.bf16.mxu0 0
        %1457 = vmatpush1.bf16.msra.mxu0 0
        %1458 = vmatprep.subr.bf16.mxu0 0
        %1459 = vmatpush1.bf16.msra.mxu0 0
        %1460 = vmatprep.subr.bf16.mxu0 0
        %1461 = vmatpush1.bf16.msra.mxu0 0
        %1462 = vmatprep.subr.bf16.mxu0 0
        %1463 = vmatpush1.bf16.msra.mxu0 0
        %1464 = vmatprep.subr.bf16.mxu0 0
        %1465 = vmatpush1.bf16.msra.mxu0 0
        %1466 = vmatprep.mubr.bf16.mxu0 0
        %1467 = vmatmul.mubr.bf16.gmra.mrb[0].mxu0 %v1387
        %v1468 = vpop.f32.mrb[0].mxu0
        %v1469 = vadd.f32 0.0, %v1468
        %v1470 = vpop.f32.mrb[0].mxu0
        %v1471 = vpop.f32.mrb[0].mxu0
        %v1472 = vadd.f32 0.0, %v1471
        %v1473 = vpop.f32.mrb[0].mxu0
        %1474 = vmatprep.mubr.bf16.mxu0 0
        %1475 = vmatmul.mubr.bf16.gmra.mrb[0].mxu0 %v1390
        %v1476 = vpop.f32.mrb[0].mxu0
        %v1477 = vadd.f32 0.0, %v1476
        %v1478 = vpop.f32.mrb[0].mxu0
        %v1479 = vpop.f32.mrb[0].mxu0
        %v1480 = vadd.f32 0.0, %v1479
        %v1481 = vpop.f32.mrb[0].mxu0
        %1482 = vmatprep.mubr.bf16.mxu0 0
        %1483 = vmatmul.mubr.bf16.gmra.mrb[0].mxu0 %v1393
        %v1484 = vpop.f32.mrb[0].mxu0
        %v1485 = vadd.f32 0.0, %v1484
        %v1486 = vpop.f32.mrb[0].mxu0
        %v1487 = vpop.f32.mrb[0].mxu0
        %v1488 = vadd.f32 0.0, %v1487
        %v1489 = vpop.f32.mrb[0].mxu0
        %1490 = vmatprep.mubr.bf16.mxu0 0
        %1491 = vmatmul.mubr.bf16.gmra.mrb[0].mxu0 %v1396
        %v1492 = vpop.f32.mrb[0].mxu0
        %v1493 = vadd.f32 0.0, %v1492
        %v1494 = vpop.f32.mrb[0].mxu0
        %v1495 = vpop.f32.mrb[0].mxu0
        %v1496 = vadd.f32 0.0, %v1495
        %v1497 = vpop.f32.mrb[0].mxu0
        %1498 = vmatprep.mubr.bf16.mxu0 0
        %1499 = vmatmul.mubr.bf16.gmra.mrb[0].mxu0 %v1399
        %v1500 = vpop.f32.mrb[0].mxu0
        %v1501 = vadd.f32 0.0, %v1500
        %v1502 = vpop.f32.mrb[0].mxu0
        %v1503 = vpop.f32.mrb[0].mxu0
        %v1504 = vadd.f32 0.0, %v1503
        %v1505 = vpop.f32.mrb[0].mxu0
        %1506 = vmatprep.mubr.bf16.mxu0 0
        %1507 = vmatmul.mubr.bf16.gmra.mrb[0].mxu0 %v1402
        %v1508 = vpop.f32.mrb[0].mxu0
        %v1509 = vadd.f32 0.0, %v1508
        %v1510 = vpop.f32.mrb[0].mxu0
        %v1511 = vpop.f32.mrb[0].mxu0
        %v1512 = vadd.f32 0.0, %v1511
        %v1513 = vpop.f32.mrb[0].mxu0
        %1514 = vmatprep.mubr.bf16.mxu0 0
        %1515 = vmatmul.mubr.bf16.gmra.mrb[0].mxu0 %v1405
        %v1516 = vpop.f32.mrb[0].mxu0
        %v1517 = vadd.f32 0.0, %v1516
        %v1518 = vpop.f32.mrb[0].mxu0
        %v1519 = vpop.f32.mrb[0].mxu0
        %v1520 = vadd.f32 0.0, %v1519
        %v1521 = vpop.f32.mrb[0].mxu0
        %1522 = vmatprep.mubr.bf16.mxu0 0
        %1523 = vmatmul.mubr.bf16.gmra.mrb[0].mxu0 %v1408
        %v1524 = vpop.f32.mrb[0].mxu0
        %v1525 = vadd.f32 0.0, %v1524
        %v1526 = vpop.f32.mrb[0].mxu0
        %v1527 = vpop.f32.mrb[0].mxu0
        %v1528 = vadd.f32 0.0, %v1527
        %v1529 = vpop.f32.mrb[0].mxu0
        %1530 = vmatprep.mubr.bf16.mxu0 0
        %1531 = vmatmul.mubr.bf16.gmra.mrb[0].mxu0 %v1411
        %v1532 = vpop.f32.mrb[0].mxu0
        %v1533 = vadd.f32 0.0, %v1532
        %v1534 = vpop.f32.mrb[0].mxu0
        %v1535 = vpop.f32.mrb[0].mxu0
        %v1536 = vadd.f32 0.0, %v1535
        %v1537 = vpop.f32.mrb[0].mxu0
        %1538 = vmatprep.mubr.bf16.mxu0 0
        %1539 = vmatmul.mubr.bf16.gmra.mrb[0].mxu0 %v1414
        %v1540 = vpop.f32.mrb[0].mxu0
        %v1541 = vadd.f32 0.0, %v1540
        %v1542 = vpop.f32.mrb[0].mxu0
        %v1543 = vpop.f32.mrb[0].mxu0
        %v1544 = vadd.f32 0.0, %v1543
        %v1545 = vpop.f32.mrb[0].mxu0
        %1546 = vmatprep.mubr.bf16.mxu0 0
        %1547 = vmatmul.mubr.bf16.gmra.mrb[0].mxu0 %v1417
        %v1548 = vpop.f32.mrb[0].mxu0
        %v1549 = vadd.f32 0.0, %v1548
        %v1550 = vpop.f32.mrb[0].mxu0
        %v1551 = vpop.f32.mrb[0].mxu0
        %v1552 = vadd.f32 0.0, %v1551
        %v1553 = vpop.f32.mrb[0].mxu0
        %1554 = vmatprep.mubr.bf16.mxu0 0
        %1555 = vmatmul.mubr.bf16.gmra.mrb[0].mxu0 %v1420
        %v1556 = vpop.f32.mrb[0].mxu0
        %v1557 = vadd.f32 0.0, %v1556
        %v1558 = vpop.f32.mrb[0].mxu0
        %v1559 = vpop.f32.mrb[0].mxu0
        %v1560 = vadd.f32 0.0, %v1559
        %v1561 = vpop.f32.mrb[0].mxu0
        %1562 = vmatprep.mubr.bf16.mxu0 0
        %1563 = vmatmul.mubr.bf16.gmra.mrb[0].mxu0 %v1423
        %v1564 = vpop.f32.mrb[0].mxu0
        %v1565 = vadd.f32 0.0, %v1564
        %v1566 = vpop.f32.mrb[0].mxu0
        %v1567 = vpop.f32.mrb[0].mxu0
        %v1568 = vadd.f32 0.0, %v1567
        %v1569 = vpop.f32.mrb[0].mxu0
        %1570 = vmatprep.mubr.bf16.mxu0 0
        %1571 = vmatmul.mubr.bf16.gmra.mrb[0].mxu0 %v1426
        %v1572 = vpop.f32.mrb[0].mxu0
        %v1573 = vadd.f32 0.0, %v1572
        %v1574 = vpop.f32.mrb[0].mxu0
        %v1575 = vpop.f32.mrb[0].mxu0
        %v1576 = vadd.f32 0.0, %v1575
        %v1577 = vpop.f32.mrb[0].mxu0
        %1578 = vmatprep.mubr.bf16.mxu0 0
        %1579 = vmatmul.mubr.bf16.gmra.mrb[0].mxu0 %v1429
        %v1580 = vpop.f32.mrb[0].mxu0
        %v1581 = vadd.f32 0.0, %v1580
        %v1582 = vpop.f32.mrb[0].mxu0
        %v1583 = vpop.f32.mrb[0].mxu0
        %v1584 = vadd.f32 0.0, %v1583
        %v1585 = vpop.f32.mrb[0].mxu0
        %1586 = vmatprep.mubr.bf16.mxu0 0
        %1587 = vmatmul.mubr.bf16.gmra.mrb[0].mxu0 %v1432
        %v1588 = vpop.f32.mrb[0].mxu0
        %v1589 = vadd.f32 0.0, %v1588
        %v1590 = vpop.f32.mrb[0].mxu0
        %v1591 = vpop.f32.mrb[0].mxu0
        %v1592 = vadd.f32 0.0, %v1591
        %v1593 = vpop.f32.mrb[0].mxu0
        %1594 = vdwg.mxu0
        %v1595 = vadd.f32 %v1272, %v1469
        %v1596 = vadd.f32 %v1273, %v1472
        %v1597 = vadd.f32 %v1274, %v1477
        %v1598 = vadd.f32 %v1275, %v1480
        %v1599 = vadd.f32 %v1276, %v1485
        %v1600 = vadd.f32 %v1277, %v1488
        %v1601 = vadd.f32 %v1278, %v1493
        %v1602 = vadd.f32 %v1279, %v1496
        %v1603 = vadd.f32 %v1280, %v1501
        %v1604 = vadd.f32 %v1281, %v1504
        %v1605 = vadd.f32 %v1282, %v1509
        %v1606 = vadd.f32 %v1283, %v1512
        %v1607 = vadd.f32 %v1284, %v1517
        %v1608 = vadd.f32 %v1285, %v1520
        %v1609 = vadd.f32 %v1286, %v1525
        %v1610 = vadd.f32 %v1287, %v1528
        %v1611 = vadd.f32 %v1288, %v1533
        %v1612 = vadd.f32 %v1289, %v1536
        %v1613 = vadd.f32 %v1290, %v1541
        %v1614 = vadd.f32 %v1291, %v1544
        %v1615 = vadd.f32 %v1292, %v1549
        %v1616 = vadd.f32 %v1293, %v1552
        %v1617 = vadd.f32 %v1294, %v1557
        %v1618 = vadd.f32 %v1295, %v1560
        %v1619 = vadd.f32 %v1296, %v1565
        %v1620 = vadd.f32 %v1297, %v1568
        %v1621 = vadd.f32 %v1298, %v1573
        %v1622 = vadd.f32 %v1299, %v1576
        %v1623 = vadd.f32 %v1300, %v1581
        %v1624 = vadd.f32 %v1301, %v1584
        %v1625 = vadd.f32 %v1302, %v1589
        %v1626 = vadd.f32 %v1303, %v1592
        %v1675 = vrot.slane %v1305, 1
        %v1676 = vrot.slane %v1306, 1
        %v1677 = vsel %vm340, %v1675, %v1676
        %v1678 = vrot.slane %v1307, 1
        %v1679 = vsel %vm340, %v1676, %v1678
        %v1680 = vrot.slane %v1308, 1
        %v1681 = vrot.slane %v1309, 1
        %v1682 = vsel %vm340, %v1680, %v1681
        %v1683 = vrot.slane %v1310, 1
        %v1684 = vsel %vm340, %v1681, %v1683
        %v1685 = vrot.slane %v1311, 1
        %v1686 = vrot.slane %v1312, 1
        %v1687 = vsel %vm340, %v1685, %v1686
        %v1688 = vrot.slane %v1313, 1
        %v1689 = vsel %vm340, %v1686, %v1688
        %v1690 = vrot.slane %v1314, 1
        %v1691 = vrot.slane %v1315, 1
        %v1692 = vsel %vm340, %v1690, %v1691
        %v1693 = vrot.slane %v1316, 1
        %v1694 = vsel %vm340, %v1691, %v1693
        %v1695 = vrot.slane %v1317, 1
        %v1696 = vrot.slane %v1318, 1
        %v1697 = vsel %vm340, %v1695, %v1696
        %v1698 = vrot.slane %v1319, 1
        %v1699 = vsel %vm340, %v1696, %v1698
        %v1700 = vrot.slane %v1320, 1
        %v1701 = vrot.slane %v1321, 1
        %v1702 = vsel %vm340, %v1700, %v1701
        %v1703 = vrot.slane %v1322, 1
        %v1704 = vsel %vm340, %v1701, %v1703
        %v1705 = vrot.slane %v1323, 1
        %v1706 = vrot.slane %v1324, 1
        %v1707 = vsel %vm340, %v1705, %v1706
        %v1708 = vrot.slane %v1325, 1
        %v1709 = vsel %vm340, %v1706, %v1708
        %v1710 = vrot.slane %v1326, 1
        %v1711 = vrot.slane %v1327, 1
        %v1712 = vsel %vm340, %v1710, %v1711
        %v1713 = vrot.slane %v1328, 1
        %v1714 = vsel %vm340, %v1711, %v1713
        %v1715 = vrot.slane %v1329, 1
        %v1716 = vrot.slane %v1330, 1
        %v1717 = vsel %vm340, %v1715, %v1716
        %v1718 = vrot.slane %v1331, 1
        %v1719 = vsel %vm340, %v1716, %v1718
        %v1720 = vrot.slane %v1332, 1
        %v1721 = vrot.slane %v1333, 1
        %v1722 = vsel %vm340, %v1720, %v1721
        %v1723 = vrot.slane %v1334, 1
        %v1724 = vsel %vm340, %v1721, %v1723
        %v1725 = vrot.slane %v1335, 1
        %v1726 = vrot.slane %v1336, 1
        %v1727 = vsel %vm340, %v1725, %v1726
        %v1728 = vrot.slane %v1337, 1
        %v1729 = vsel %vm340, %v1726, %v1728
        %v1730 = vrot.slane %v1338, 1
        %v1731 = vrot.slane %v1339, 1
        %v1732 = vsel %vm340, %v1730, %v1731
        %v1733 = vrot.slane %v1340, 1
        %v1734 = vsel %vm340, %v1731, %v1733
        %v1735 = vrot.slane %v1341, 1
        %v1736 = vrot.slane %v1342, 1
        %v1737 = vsel %vm340, %v1735, %v1736
        %v1738 = vrot.slane %v1343, 1
        %v1739 = vsel %vm340, %v1736, %v1738
        %v1740 = vrot.slane %v1344, 1
        %v1741 = vrot.slane %v1345, 1
        %v1742 = vsel %vm340, %v1740, %v1741
        %v1743 = vrot.slane %v1346, 1
        %v1744 = vsel %vm340, %v1741, %v1743
        %v1745 = vrot.slane %v1347, 1
        %v1746 = vrot.slane %v1348, 1
        %v1747 = vsel %vm340, %v1745, %v1746
        %v1748 = vrot.slane %v1349, 1
        %v1749 = vsel %vm340, %v1746, %v1748
        %v1750 = vrot.slane %v1350, 1
        %v1751 = vrot.slane %v1351, 1
        %v1752 = vsel %vm340, %v1750, %v1751
        %v1753 = vrot.slane %v1352, 1
        %v1754 = vsel %vm340, %v1751, %v1753
        %v1787 = vpack.c.bf16 %v1679, %v1677
        %v1788 = vpack.c.bf16 %v1684, %v1682
        %v1789 = vpack.c.bf16 %v1689, %v1687
        %v1790 = vpack.c.bf16 %v1694, %v1692
        %v1791 = vpack.c.bf16 %v1699, %v1697
        %v1792 = vpack.c.bf16 %v1704, %v1702
        %v1793 = vpack.c.bf16 %v1709, %v1707
        %v1794 = vpack.c.bf16 %v1714, %v1712
        %v1795 = vpack.c.bf16 %v1719, %v1717
        %v1796 = vpack.c.bf16 %v1724, %v1722
        %v1797 = vpack.c.bf16 %v1729, %v1727
        %v1798 = vpack.c.bf16 %v1734, %v1732
        %v1799 = vpack.c.bf16 %v1739, %v1737
        %v1800 = vpack.c.bf16 %v1744, %v1742
        %v1801 = vpack.c.bf16 %v1749, %v1747
        %v1802 = vpack.c.bf16 %v1754, %v1752
        %s1803 = scalar_lea.vmem %s1, 64
        %v1804 = vld [vmem:[%s1803] sm:$0xf]
        %v1805 = vld [vmem:[%s1803 + $0x4] sm:$0xf]
        %v1806 = vld [vmem:[%s1803 + $0x8] sm:$0xf]
        %v1807 = vld [vmem:[%s1803 + $0xc] sm:$0xf]
        %v1812 = vunpack.c.l.b16 %v1804
        %v1813 = vunpack.c.l.b16 %v1805
        %v1814 = vunpack.c.l.b16 %v1806
        %v1815 = vunpack.c.l.b16 %v1807
        %v1816 = vpack.c.b16 %v1813, %v1812
        %v1817 = vpack.c.b16 %v1815, %v1814
        %v1821 = vsel %vm486, %v1787, 0
        %v1824 = vsel %vm486, %v1788, 0
        %v1827 = vsel %vm486, %v1789, 0
        %v1830 = vsel %vm486, %v1790, 0
        %v1833 = vsel %vm486, %v1791, 0
        %v1836 = vsel %vm486, %v1792, 0
        %v1839 = vsel %vm486, %v1793, 0
        %v1842 = vsel %vm486, %v1794, 0
        %v1845 = vsel %vm486, %v1795, 0
        %v1848 = vsel %vm486, %v1796, 0
        %v1851 = vsel %vm486, %v1797, 0
        %v1854 = vsel %vm486, %v1798, 0
        %v1857 = vsel %vm486, %v1799, 0
        %v1860 = vsel %vm486, %v1800, 0
        %v1863 = vsel %vm486, %v1801, 0
        %v1866 = vsel %vm486, %v1802, 0
        %1868 = vmatprep.subr.bf16.mxu0 0
        %1869 = vmatpush1.bf16.msra.mxu0 %v1816
        %1870 = vmatprep.subr.bf16.mxu0 0
        %1871 = vmatpush1.bf16.msra.mxu0 %v1817
        %1872 = vmatprep.subr.bf16.mxu0 0
        %1873 = vmatpush1.bf16.msra.mxu0 0
        %1874 = vmatprep.subr.bf16.mxu0 0
        %1875 = vmatpush1.bf16.msra.mxu0 0
        %1876 = vmatprep.subr.bf16.mxu0 0
        %1877 = vmatpush1.bf16.msra.mxu0 0
        %1878 = vmatprep.subr.bf16.mxu0 0
        %1879 = vmatpush1.bf16.msra.mxu0 0
        %1880 = vmatprep.subr.bf16.mxu0 0
        %1881 = vmatpush1.bf16.msra.mxu0 0
        %1882 = vmatprep.subr.bf16.mxu0 0
        %1883 = vmatpush1.bf16.msra.mxu0 0
        %1884 = vmatprep.subr.bf16.mxu0 0
        %1885 = vmatpush1.bf16.msra.mxu0 0
        %1886 = vmatprep.subr.bf16.mxu0 0
        %1887 = vmatpush1.bf16.msra.mxu0 0
        %1888 = vmatprep.subr.bf16.mxu0 0
        %1889 = vmatpush1.bf16.msra.mxu0 0
        %1890 = vmatprep.subr.bf16.mxu0 0
        %1891 = vmatpush1.bf16.msra.mxu0 0
        %1892 = vmatprep.subr.bf16.mxu0 0
        %1893 = vmatpush1.bf16.msra.mxu0 0
        %1894 = vmatprep.subr.bf16.mxu0 0
        %1895 = vmatpush1.bf16.msra.mxu0 0
        %1896 = vmatprep.subr.bf16.mxu0 0
        %1897 = vmatpush1.bf16.msra.mxu0 0
        %1898 = vmatprep.subr.bf16.mxu0 0
        %1899 = vmatpush1.bf16.msra.mxu0 0
        %1900 = vmatprep.mubr.bf16.mxu0 0
        %1901 = vmatmul.mubr.bf16.gmra.mrb[0].mxu0 %v1821
        %v1902 = vpop.f32.mrb[0].mxu0
        %v1903 = vadd.f32 0.0, %v1902
        %v1904 = vpop.f32.mrb[0].mxu0
        %v1905 = vpop.f32.mrb[0].mxu0
        %v1906 = vadd.f32 0.0, %v1905
        %v1907 = vpop.f32.mrb[0].mxu0
        %1908 = vmatprep.mubr.bf16.mxu0 0
        %1909 = vmatmul.mubr.bf16.gmra.mrb[0].mxu0 %v1824
        %v1910 = vpop.f32.mrb[0].mxu0
        %v1911 = vadd.f32 0.0, %v1910
        %v1912 = vpop.f32.mrb[0].mxu0
        %v1913 = vpop.f32.mrb[0].mxu0
        %v1914 = vadd.f32 0.0, %v1913
        %v1915 = vpop.f32.mrb[0].mxu0
        %1916 = vmatprep.mubr.bf16.mxu0 0
        %1917 = vmatmul.mubr.bf16.gmra.mrb[0].mxu0 %v1827
        %v1918 = vpop.f32.mrb[0].mxu0
        %v1919 = vadd.f32 0.0, %v1918
        %v1920 = vpop.f32.mrb[0].mxu0
        %v1921 = vpop.f32.mrb[0].mxu0
        %v1922 = vadd.f32 0.0, %v1921
        %v1923 = vpop.f32.mrb[0].mxu0
        %1924 = vmatprep.mubr.bf16.mxu0 0
        %1925 = vmatmul.mubr.bf16.gmra.mrb[0].mxu0 %v1830
        %v1926 = vpop.f32.mrb[0].mxu0
        %v1927 = vadd.f32 0.0, %v1926
        %v1928 = vpop.f32.mrb[0].mxu0
        %v1929 = vpop.f32.mrb[0].mxu0
        %v1930 = vadd.f32 0.0, %v1929
        %v1931 = vpop.f32.mrb[0].mxu0
        %1932 = vmatprep.mubr.bf16.mxu0 0
        %1933 = vmatmul.mubr.bf16.gmra.mrb[0].mxu0 %v1833
        %v1934 = vpop.f32.mrb[0].mxu0
        %v1935 = vadd.f32 0.0, %v1934
        %v1936 = vpop.f32.mrb[0].mxu0
        %v1937 = vpop.f32.mrb[0].mxu0
        %v1938 = vadd.f32 0.0, %v1937
        %v1939 = vpop.f32.mrb[0].mxu0
        %1940 = vmatprep.mubr.bf16.mxu0 0
        %1941 = vmatmul.mubr.bf16.gmra.mrb[0].mxu0 %v1836
        %v1942 = vpop.f32.mrb[0].mxu0
        %v1943 = vadd.f32 0.0, %v1942
        %v1944 = vpop.f32.mrb[0].mxu0
        %v1945 = vpop.f32.mrb[0].mxu0
        %v1946 = vadd.f32 0.0, %v1945
        %v1947 = vpop.f32.mrb[0].mxu0
        %1948 = vmatprep.mubr.bf16.mxu0 0
        %1949 = vmatmul.mubr.bf16.gmra.mrb[0].mxu0 %v1839
        %v1950 = vpop.f32.mrb[0].mxu0
        %v1951 = vadd.f32 0.0, %v1950
        %v1952 = vpop.f32.mrb[0].mxu0
        %v1953 = vpop.f32.mrb[0].mxu0
        %v1954 = vadd.f32 0.0, %v1953
        %v1955 = vpop.f32.mrb[0].mxu0
        %1956 = vmatprep.mubr.bf16.mxu0 0
        %1957 = vmatmul.mubr.bf16.gmra.mrb[0].mxu0 %v1842
        %v1958 = vpop.f32.mrb[0].mxu0
        %v1959 = vadd.f32 0.0, %v1958
        %v1960 = vpop.f32.mrb[0].mxu0
        %v1961 = vpop.f32.mrb[0].mxu0
        %v1962 = vadd.f32 0.0, %v1961
        %v1963 = vpop.f32.mrb[0].mxu0
        %1964 = vmatprep.mubr.bf16.mxu0 0
        %1965 = vmatmul.mubr.bf16.gmra.mrb[0].mxu0 %v1845
        %v1966 = vpop.f32.mrb[0].mxu0
        %v1967 = vadd.f32 0.0, %v1966
        %v1968 = vpop.f32.mrb[0].mxu0
        %v1969 = vpop.f32.mrb[0].mxu0
        %v1970 = vadd.f32 0.0, %v1969
        %v1971 = vpop.f32.mrb[0].mxu0
        %1972 = vmatprep.mubr.bf16.mxu0 0
        %1973 = vmatmul.mubr.bf16.gmra.mrb[0].mxu0 %v1848
        %v1974 = vpop.f32.mrb[0].mxu0
        %v1975 = vadd.f32 0.0, %v1974
        %v1976 = vpop.f32.mrb[0].mxu0
        %v1977 = vpop.f32.mrb[0].mxu0
        %v1978 = vadd.f32 0.0, %v1977
        %v1979 = vpop.f32.mrb[0].mxu0
        %1980 = vmatprep.mubr.bf16.mxu0 0
        %1981 = vmatmul.mubr.bf16.gmra.mrb[0].mxu0 %v1851
        %v1982 = vpop.f32.mrb[0].mxu0
        %v1983 = vadd.f32 0.0, %v1982
        %v1984 = vpop.f32.mrb[0].mxu0
        %v1985 = vpop.f32.mrb[0].mxu0
        %v1986 = vadd.f32 0.0, %v1985
        %v1987 = vpop.f32.mrb[0].mxu0
        %1988 = vmatprep.mubr.bf16.mxu0 0
        %1989 = vmatmul.mubr.bf16.gmra.mrb[0].mxu0 %v1854
        %v1990 = vpop.f32.mrb[0].mxu0
        %v1991 = vadd.f32 0.0, %v1990
        %v1992 = vpop.f32.mrb[0].mxu0
        %v1993 = vpop.f32.mrb[0].mxu0
        %v1994 = vadd.f32 0.0, %v1993
        %v1995 = vpop.f32.mrb[0].mxu0
        %1996 = vmatprep.mubr.bf16.mxu0 0
        %1997 = vmatmul.mubr.bf16.gmra.mrb[0].mxu0 %v1857
        %v1998 = vpop.f32.mrb[0].mxu0
        %v1999 = vadd.f32 0.0, %v1998
        %v2000 = vpop.f32.mrb[0].mxu0
        %v2001 = vpop.f32.mrb[0].mxu0
        %v2002 = vadd.f32 0.0, %v2001
        %v2003 = vpop.f32.mrb[0].mxu0
        %2004 = vmatprep.mubr.bf16.mxu0 0
        %2005 = vmatmul.mubr.bf16.gmra.mrb[0].mxu0 %v1860
        %v2006 = vpop.f32.mrb[0].mxu0
        %v2007 = vadd.f32 0.0, %v2006
        %v2008 = vpop.f32.mrb[0].mxu0
        %v2009 = vpop.f32.mrb[0].mxu0
        %v2010 = vadd.f32 0.0, %v2009
        %v2011 = vpop.f32.mrb[0].mxu0
        %2012 = vmatprep.mubr.bf16.mxu0 0
        %2013 = vmatmul.mubr.bf16.gmra.mrb[0].mxu0 %v1863
        %v2014 = vpop.f32.mrb[0].mxu0
        %v2015 = vadd.f32 0.0, %v2014
        %v2016 = vpop.f32.mrb[0].mxu0
        %v2017 = vpop.f32.mrb[0].mxu0
        %v2018 = vadd.f32 0.0, %v2017
        %v2019 = vpop.f32.mrb[0].mxu0
        %2020 = vmatprep.mubr.bf16.mxu0 0
        %2021 = vmatmul.mubr.bf16.gmra.mrb[0].mxu0 %v1866
        %v2022 = vpop.f32.mrb[0].mxu0
        %v2023 = vadd.f32 0.0, %v2022
        %v2024 = vpop.f32.mrb[0].mxu0
        %v2025 = vpop.f32.mrb[0].mxu0
        %v2026 = vadd.f32 0.0, %v2025
        %v2027 = vpop.f32.mrb[0].mxu0
        %2028 = vdwg.mxu0
        %v2029 = vadd.f32 %v1595, %v1903
        %v2030 = vadd.f32 %v1596, %v1906
        %v2031 = vadd.f32 %v1597, %v1911
        %v2032 = vadd.f32 %v1598, %v1914
        %v2033 = vadd.f32 %v1599, %v1919
        %v2034 = vadd.f32 %v1600, %v1922
        %v2035 = vadd.f32 %v1601, %v1927
        %v2036 = vadd.f32 %v1602, %v1930
        %v2037 = vadd.f32 %v1603, %v1935
        %v2038 = vadd.f32 %v1604, %v1938
        %v2039 = vadd.f32 %v1605, %v1943
        %v2040 = vadd.f32 %v1606, %v1946
        %v2041 = vadd.f32 %v1607, %v1951
        %v2042 = vadd.f32 %v1608, %v1954
        %v2043 = vadd.f32 %v1609, %v1959
        %v2044 = vadd.f32 %v1610, %v1962
        %v2045 = vadd.f32 %v1611, %v1967
        %v2046 = vadd.f32 %v1612, %v1970
        %v2047 = vadd.f32 %v1613, %v1975
        %v2048 = vadd.f32 %v1614, %v1978
        %v2049 = vadd.f32 %v1615, %v1983
        %v2050 = vadd.f32 %v1616, %v1986
        %v2051 = vadd.f32 %v1617, %v1991
        %v2052 = vadd.f32 %v1618, %v1994
        %v2053 = vadd.f32 %v1619, %v1999
        %v2054 = vadd.f32 %v1620, %v2002
        %v2055 = vadd.f32 %v1621, %v2007
        %v2056 = vadd.f32 %v1622, %v2010
        %v2057 = vadd.f32 %v1623, %v2015
        %v2058 = vadd.f32 %v1624, %v2018
        %v2059 = vadd.f32 %v1625, %v2023
        %v2060 = vadd.f32 %v1626, %v2026
        %v2061 = vrot.slane %v1305, 2
        %v2062 = vrot.slane %v1306, 2
        %v2063 = vsel %vm917, %v2061, %v2062
        %v2064 = vrot.slane %v1307, 2
        %v2065 = vsel %vm917, %v2062, %v2064
        %v2066 = vrot.slane %v1308, 2
        %v2067 = vrot.slane %v1309, 2
        %v2068 = vsel %vm917, %v2066, %v2067
        %v2069 = vrot.slane %v1310, 2
        %v2070 = vsel %vm917, %v2067, %v2069
        %v2071 = vrot.slane %v1311, 2
        %v2072 = vrot.slane %v1312, 2
        %v2073 = vsel %vm917, %v2071, %v2072
        %v2074 = vrot.slane %v1313, 2
        %v2075 = vsel %vm917, %v2072, %v2074
        %v2076 = vrot.slane %v1314, 2
        %v2077 = vrot.slane %v1315, 2
        %v2078 = vsel %vm917, %v2076, %v2077
        %v2079 = vrot.slane %v1316, 2
        %v2080 = vsel %vm917, %v2077, %v2079
        %v2081 = vrot.slane %v1317, 2
        %v2082 = vrot.slane %v1318, 2
        %v2083 = vsel %vm917, %v2081, %v2082
        %v2084 = vrot.slane %v1319, 2
        %v2085 = vsel %vm917, %v2082, %v2084
        %v2086 = vrot.slane %v1320, 2
        %v2087 = vrot.slane %v1321, 2
        %v2088 = vsel %vm917, %v2086, %v2087
        %v2089 = vrot.slane %v1322, 2
        %v2090 = vsel %vm917, %v2087, %v2089
        %v2091 = vrot.slane %v1323, 2
        %v2092 = vrot.slane %v1324, 2
        %v2093 = vsel %vm917, %v2091, %v2092
        %v2094 = vrot.slane %v1325, 2
        %v2095 = vsel %vm917, %v2092, %v2094
        %v2096 = vrot.slane %v1326, 2
        %v2097 = vrot.slane %v1327, 2
        %v2098 = vsel %vm917, %v2096, %v2097
        %v2099 = vrot.slane %v1328, 2
        %v2100 = vsel %vm917, %v2097, %v2099
        %v2101 = vrot.slane %v1329, 2
        %v2102 = vrot.slane %v1330, 2
        %v2103 = vsel %vm917, %v2101, %v2102
        %v2104 = vrot.slane %v1331, 2
        %v2105 = vsel %vm917, %v2102, %v2104
        %v2106 = vrot.slane %v1332, 2
        %v2107 = vrot.slane %v1333, 2
        %v2108 = vsel %vm917, %v2106, %v2107
        %v2109 = vrot.slane %v1334, 2
        %v2110 = vsel %vm917, %v2107, %v2109
        %v2111 = vrot.slane %v1335, 2
        %v2112 = vrot.slane %v1336, 2
        %v2113 = vsel %vm917, %v2111, %v2112
        %v2114 = vrot.slane %v1337, 2
        %v2115 = vsel %vm917, %v2112, %v2114
        %v2116 = vrot.slane %v1338, 2
        %v2117 = vrot.slane %v1339, 2
        %v2118 = vsel %vm917, %v2116, %v2117
        %v2119 = vrot.slane %v1340, 2
        %v2120 = vsel %vm917, %v2117, %v2119
        %v2121 = vrot.slane %v1341, 2
        %v2122 = vrot.slane %v1342, 2
        %v2123 = vsel %vm917, %v2121, %v2122
        %v2124 = vrot.slane %v1343, 2
        %v2125 = vsel %vm917, %v2122, %v2124
        %v2126 = vrot.slane %v1344, 2
        %v2127 = vrot.slane %v1345, 2
        %v2128 = vsel %vm917, %v2126, %v2127
        %v2129 = vrot.slane %v1346, 2
        %v2130 = vsel %vm917, %v2127, %v2129
        %v2131 = vrot.slane %v1347, 2
        %v2132 = vrot.slane %v1348, 2
        %v2133 = vsel %vm917, %v2131, %v2132
        %v2134 = vrot.slane %v1349, 2
        %v2135 = vsel %vm917, %v2132, %v2134
        %v2136 = vrot.slane %v1350, 2
        %v2137 = vrot.slane %v1351, 2
        %v2138 = vsel %vm917, %v2136, %v2137
        %v2139 = vrot.slane %v1352, 2
        %v2140 = vsel %vm917, %v2137, %v2139
        %v2173 = vpack.c.bf16 %v2065, %v2063
        %v2174 = vpack.c.bf16 %v2070, %v2068
        %v2175 = vpack.c.bf16 %v2075, %v2073
        %v2176 = vpack.c.bf16 %v2080, %v2078
        %v2177 = vpack.c.bf16 %v2085, %v2083
        %v2178 = vpack.c.bf16 %v2090, %v2088
        %v2179 = vpack.c.bf16 %v2095, %v2093
        %v2180 = vpack.c.bf16 %v2100, %v2098
        %v2181 = vpack.c.bf16 %v2105, %v2103
        %v2182 = vpack.c.bf16 %v2110, %v2108
        %v2183 = vpack.c.bf16 %v2115, %v2113
        %v2184 = vpack.c.bf16 %v2120, %v2118
        %v2185 = vpack.c.bf16 %v2125, %v2123
        %v2186 = vpack.c.bf16 %v2130, %v2128
        %v2187 = vpack.c.bf16 %v2135, %v2133
        %v2188 = vpack.c.bf16 %v2140, %v2138
        %s2189 = scalar_lea.vmem %s1, 80
        %v2190 = vld [vmem:[%s2189] sm:$0xf]
        %v2191 = vld [vmem:[%s2189 + $0x4] sm:$0xf]
        %v2192 = vld [vmem:[%s2189 + $0x8] sm:$0xf]
        %v2193 = vld [vmem:[%s2189 + $0xc] sm:$0xf]
        %v2198 = vunpack.c.l.b16 %v2190
        %v2199 = vunpack.c.l.b16 %v2191
        %v2200 = vunpack.c.l.b16 %v2192
        %v2201 = vunpack.c.l.b16 %v2193
        %v2202 = vpack.c.b16 %v2199, %v2198
        %v2203 = vpack.c.b16 %v2201, %v2200
        %v2207 = vsel %vm486, %v2173, 0
        %v2210 = vsel %vm486, %v2174, 0
        %v2213 = vsel %vm486, %v2175, 0
        %v2216 = vsel %vm486, %v2176, 0
        %v2219 = vsel %vm486, %v2177, 0
        %v2222 = vsel %vm486, %v2178, 0
        %v2225 = vsel %vm486, %v2179, 0
        %v2228 = vsel %vm486, %v2180, 0
        %v2231 = vsel %vm486, %v2181, 0
        %v2234 = vsel %vm486, %v2182, 0
        %v2237 = vsel %vm486, %v2183, 0
        %v2240 = vsel %vm486, %v2184, 0
        %v2243 = vsel %vm486, %v2185, 0
        %v2246 = vsel %vm486, %v2186, 0
        %v2249 = vsel %vm486, %v2187, 0
        %v2252 = vsel %vm486, %v2188, 0
        %2254 = vmatprep.subr.bf16.mxu0 0
        %2255 = vmatpush1.bf16.msra.mxu0 %v2202
        %2256 = vmatprep.subr.bf16.mxu0 0
        %2257 = vmatpush1.bf16.msra.mxu0 %v2203
        %2258 = vmatprep.subr.bf16.mxu0 0
        %2259 = vmatpush1.bf16.msra.mxu0 0
        %2260 = vmatprep.subr.bf16.mxu0 0
        %2261 = vmatpush1.bf16.msra.mxu0 0
        %2262 = vmatprep.subr.bf16.mxu0 0
        %2263 = vmatpush1.bf16.msra.mxu0 0
        %2264 = vmatprep.subr.bf16.mxu0 0
        %2265 = vmatpush1.bf16.msra.mxu0 0
        %2266 = vmatprep.subr.bf16.mxu0 0
        %2267 = vmatpush1.bf16.msra.mxu0 0
        %2268 = vmatprep.subr.bf16.mxu0 0
        %2269 = vmatpush1.bf16.msra.mxu0 0
        %2270 = vmatprep.subr.bf16.mxu0 0
        %2271 = vmatpush1.bf16.msra.mxu0 0
        %2272 = vmatprep.subr.bf16.mxu0 0
        %2273 = vmatpush1.bf16.msra.mxu0 0
        %2274 = vmatprep.subr.bf16.mxu0 0
        %2275 = vmatpush1.bf16.msra.mxu0 0
        %2276 = vmatprep.subr.bf16.mxu0 0
        %2277 = vmatpush1.bf16.msra.mxu0 0
        %2278 = vmatprep.subr.bf16.mxu0 0
        %2279 = vmatpush1.bf16.msra.mxu0 0
        %2280 = vmatprep.subr.bf16.mxu0 0
        %2281 = vmatpush1.bf16.msra.mxu0 0
        %2282 = vmatprep.subr.bf16.mxu0 0
        %2283 = vmatpush1.bf16.msra.mxu0 0
        %2284 = vmatprep.subr.bf16.mxu0 0
        %2285 = vmatpush1.bf16.msra.mxu0 0
        %2286 = vmatprep.mubr.bf16.mxu0 0
        %2287 = vmatmul.mubr.bf16.gmra.mrb[0].mxu0 %v2207
        %v2288 = vpop.f32.mrb[0].mxu0
        %v2289 = vadd.f32 0.0, %v2288
        %v2290 = vpop.f32.mrb[0].mxu0
        %v2291 = vpop.f32.mrb[0].mxu0
        %v2292 = vadd.f32 0.0, %v2291
        %v2293 = vpop.f32.mrb[0].mxu0
        %2294 = vmatprep.mubr.bf16.mxu0 0
        %2295 = vmatmul.mubr.bf16.gmra.mrb[0].mxu0 %v2210
        %v2296 = vpop.f32.mrb[0].mxu0
        %v2297 = vadd.f32 0.0, %v2296
        %v2298 = vpop.f32.mrb[0].mxu0
        %v2299 = vpop.f32.mrb[0].mxu0
        %v2300 = vadd.f32 0.0, %v2299
        %v2301 = vpop.f32.mrb[0].mxu0
        %2302 = vmatprep.mubr.bf16.mxu0 0
        %2303 = vmatmul.mubr.bf16.gmra.mrb[0].mxu0 %v2213
        %v2304 = vpop.f32.mrb[0].mxu0
        %v2305 = vadd.f32 0.0, %v2304
        %v2306 = vpop.f32.mrb[0].mxu0
        %v2307 = vpop.f32.mrb[0].mxu0
        %v2308 = vadd.f32 0.0, %v2307
        %v2309 = vpop.f32.mrb[0].mxu0
        %2310 = vmatprep.mubr.bf16.mxu0 0
        %2311 = vmatmul.mubr.bf16.gmra.mrb[0].mxu0 %v2216
        %v2312 = vpop.f32.mrb[0].mxu0
        %v2313 = vadd.f32 0.0, %v2312
        %v2314 = vpop.f32.mrb[0].mxu0
        %v2315 = vpop.f32.mrb[0].mxu0
        %v2316 = vadd.f32 0.0, %v2315
        %v2317 = vpop.f32.mrb[0].mxu0
        %2318 = vmatprep.mubr.bf16.mxu0 0
        %2319 = vmatmul.mubr.bf16.gmra.mrb[0].mxu0 %v2219
        %v2320 = vpop.f32.mrb[0].mxu0
        %v2321 = vadd.f32 0.0, %v2320
        %v2322 = vpop.f32.mrb[0].mxu0
        %v2323 = vpop.f32.mrb[0].mxu0
        %v2324 = vadd.f32 0.0, %v2323
        %v2325 = vpop.f32.mrb[0].mxu0
        %2326 = vmatprep.mubr.bf16.mxu0 0
        %2327 = vmatmul.mubr.bf16.gmra.mrb[0].mxu0 %v2222
        %v2328 = vpop.f32.mrb[0].mxu0
        %v2329 = vadd.f32 0.0, %v2328
        %v2330 = vpop.f32.mrb[0].mxu0
        %v2331 = vpop.f32.mrb[0].mxu0
        %v2332 = vadd.f32 0.0, %v2331
        %v2333 = vpop.f32.mrb[0].mxu0
        %2334 = vmatprep.mubr.bf16.mxu0 0
        %2335 = vmatmul.mubr.bf16.gmra.mrb[0].mxu0 %v2225
        %v2336 = vpop.f32.mrb[0].mxu0
        %v2337 = vadd.f32 0.0, %v2336
        %v2338 = vpop.f32.mrb[0].mxu0
        %v2339 = vpop.f32.mrb[0].mxu0
        %v2340 = vadd.f32 0.0, %v2339
        %v2341 = vpop.f32.mrb[0].mxu0
        %2342 = vmatprep.mubr.bf16.mxu0 0
        %2343 = vmatmul.mubr.bf16.gmra.mrb[0].mxu0 %v2228
        %v2344 = vpop.f32.mrb[0].mxu0
        %v2345 = vadd.f32 0.0, %v2344
        %v2346 = vpop.f32.mrb[0].mxu0
        %v2347 = vpop.f32.mrb[0].mxu0
        %v2348 = vadd.f32 0.0, %v2347
        %v2349 = vpop.f32.mrb[0].mxu0
        %2350 = vmatprep.mubr.bf16.mxu0 0
        %2351 = vmatmul.mubr.bf16.gmra.mrb[0].mxu0 %v2231
        %v2352 = vpop.f32.mrb[0].mxu0
        %v2353 = vadd.f32 0.0, %v2352
        %v2354 = vpop.f32.mrb[0].mxu0
        %v2355 = vpop.f32.mrb[0].mxu0
        %v2356 = vadd.f32 0.0, %v2355
        %v2357 = vpop.f32.mrb[0].mxu0
        %2358 = vmatprep.mubr.bf16.mxu0 0
        %2359 = vmatmul.mubr.bf16.gmra.mrb[0].mxu0 %v2234
        %v2360 = vpop.f32.mrb[0].mxu0
        %v2361 = vadd.f32 0.0, %v2360
        %v2362 = vpop.f32.mrb[0].mxu0
        %v2363 = vpop.f32.mrb[0].mxu0
        %v2364 = vadd.f32 0.0, %v2363
        %v2365 = vpop.f32.mrb[0].mxu0
        %2366 = vmatprep.mubr.bf16.mxu0 0
        %2367 = vmatmul.mubr.bf16.gmra.mrb[0].mxu0 %v2237
        %v2368 = vpop.f32.mrb[0].mxu0
        %v2369 = vadd.f32 0.0, %v2368
        %v2370 = vpop.f32.mrb[0].mxu0
        %v2371 = vpop.f32.mrb[0].mxu0
        %v2372 = vadd.f32 0.0, %v2371
        %v2373 = vpop.f32.mrb[0].mxu0
        %2374 = vmatprep.mubr.bf16.mxu0 0
        %2375 = vmatmul.mubr.bf16.gmra.mrb[0].mxu0 %v2240
        %v2376 = vpop.f32.mrb[0].mxu0
        %v2377 = vadd.f32 0.0, %v2376
        %v2378 = vpop.f32.mrb[0].mxu0
        %v2379 = vpop.f32.mrb[0].mxu0
        %v2380 = vadd.f32 0.0, %v2379
        %v2381 = vpop.f32.mrb[0].mxu0
        %2382 = vmatprep.mubr.bf16.mxu0 0
        %2383 = vmatmul.mubr.bf16.gmra.mrb[0].mxu0 %v2243
        %v2384 = vpop.f32.mrb[0].mxu0
        %v2385 = vadd.f32 0.0, %v2384
        %v2386 = vpop.f32.mrb[0].mxu0
        %v2387 = vpop.f32.mrb[0].mxu0
        %v2388 = vadd.f32 0.0, %v2387
        %v2389 = vpop.f32.mrb[0].mxu0
        %2390 = vmatprep.mubr.bf16.mxu0 0
        %2391 = vmatmul.mubr.bf16.gmra.mrb[0].mxu0 %v2246
        %v2392 = vpop.f32.mrb[0].mxu0
        %v2393 = vadd.f32 0.0, %v2392
        %v2394 = vpop.f32.mrb[0].mxu0
        %v2395 = vpop.f32.mrb[0].mxu0
        %v2396 = vadd.f32 0.0, %v2395
        %v2397 = vpop.f32.mrb[0].mxu0
        %2398 = vmatprep.mubr.bf16.mxu0 0
        %2399 = vmatmul.mubr.bf16.gmra.mrb[0].mxu0 %v2249
        %v2400 = vpop.f32.mrb[0].mxu0
        %v2401 = vadd.f32 0.0, %v2400
        %v2402 = vpop.f32.mrb[0].mxu0
        %v2403 = vpop.f32.mrb[0].mxu0
        %v2404 = vadd.f32 0.0, %v2403
        %v2405 = vpop.f32.mrb[0].mxu0
        %2406 = vmatprep.mubr.bf16.mxu0 0
        %2407 = vmatmul.mubr.bf16.gmra.mrb[0].mxu0 %v2252
        %v2408 = vpop.f32.mrb[0].mxu0
        %v2409 = vadd.f32 0.0, %v2408
        %v2410 = vpop.f32.mrb[0].mxu0
        %v2411 = vpop.f32.mrb[0].mxu0
        %v2412 = vadd.f32 0.0, %v2411
        %v2413 = vpop.f32.mrb[0].mxu0
        %2414 = vdwg.mxu0
        %v2415 = vadd.f32 %v2029, %v2289
        %v2416 = vadd.f32 %v2030, %v2292
        %v2417 = vadd.f32 %v2031, %v2297
        %v2418 = vadd.f32 %v2032, %v2300
        %v2419 = vadd.f32 %v2033, %v2305
        %v2420 = vadd.f32 %v2034, %v2308
        %v2421 = vadd.f32 %v2035, %v2313
        %v2422 = vadd.f32 %v2036, %v2316
        %v2423 = vadd.f32 %v2037, %v2321
        %v2424 = vadd.f32 %v2038, %v2324
        %v2425 = vadd.f32 %v2039, %v2329
        %v2426 = vadd.f32 %v2040, %v2332
        %v2427 = vadd.f32 %v2041, %v2337
        %v2428 = vadd.f32 %v2042, %v2340
        %v2429 = vadd.f32 %v2043, %v2345
        %v2430 = vadd.f32 %v2044, %v2348
        %v2431 = vadd.f32 %v2045, %v2353
        %v2432 = vadd.f32 %v2046, %v2356
        %v2433 = vadd.f32 %v2047, %v2361
        %v2434 = vadd.f32 %v2048, %v2364
        %v2435 = vadd.f32 %v2049, %v2369
        %v2436 = vadd.f32 %v2050, %v2372
        %v2437 = vadd.f32 %v2051, %v2377
        %v2438 = vadd.f32 %v2052, %v2380
        %v2439 = vadd.f32 %v2053, %v2385
        %v2440 = vadd.f32 %v2054, %v2388
        %v2441 = vadd.f32 %v2055, %v2393
        %v2442 = vadd.f32 %v2056, %v2396
        %v2443 = vadd.f32 %v2057, %v2401
        %v2444 = vadd.f32 %v2058, %v2404
        %v2445 = vadd.f32 %v2059, %v2409
        %v2446 = vadd.f32 %v2060, %v2412
        %s2447 = scalar_lea.vmem %s222, 48
        %v2448 = vld [vmem:[%s2447] sm:$0xff]
        %v2449 = vld [vmem:[%s2447 + $0x8] sm:$0xff]
        %v2450 = vld [vmem:[%s2447 + $0x10] sm:$0x3]
        %v2451 = vld [vmem:[%s2447 + $0x18] sm:$0xff]
        %v2452 = vld [vmem:[%s2447 + $0x20] sm:$0xff]
        %v2453 = vld [vmem:[%s2447 + $0x28] sm:$0x3]
        %v2454 = vld [vmem:[%s2447 + $0x30] sm:$0xff]
        %v2455 = vld [vmem:[%s2447 + $0x38] sm:$0xff]
        %v2456 = vld [vmem:[%s2447 + $0x40] sm:$0x3]
        %v2457 = vld [vmem:[%s2447 + $0x48] sm:$0xff]
        %v2458 = vld [vmem:[%s2447 + $0x50] sm:$0xff]
        %v2459 = vld [vmem:[%s2447 + $0x58] sm:$0x3]
        %v2460 = vld [vmem:[%s2447 + $0x60] sm:$0xff]
        %v2461 = vld [vmem:[%s2447 + $0x68] sm:$0xff]
        %v2462 = vld [vmem:[%s2447 + $0x70] sm:$0x3]
        %v2463 = vld [vmem:[%s2447 + $0x78] sm:$0xff]
        %v2464 = vld [vmem:[%s2447 + $0x80] sm:$0xff]
        %v2465 = vld [vmem:[%s2447 + $0x88] sm:$0x3]
        %v2466 = vld [vmem:[%s2447 + $0x90] sm:$0xff]
        %v2467 = vld [vmem:[%s2447 + $0x98] sm:$0xff]
        %v2468 = vld [vmem:[%s2447 + $0xa0] sm:$0x3]
        %v2469 = vld [vmem:[%s2447 + $0xa8] sm:$0xff]
        %v2470 = vld [vmem:[%s2447 + $0xb0] sm:$0xff]
        %v2471 = vld [vmem:[%s2447 + $0xb8] sm:$0x3]
        %v2472 = vld [vmem:[%s2447 + $0xc0] sm:$0xff]
        %v2473 = vld [vmem:[%s2447 + $0xc8] sm:$0xff]
        %v2474 = vld [vmem:[%s2447 + $0xd0] sm:$0x3]
        %v2475 = vld [vmem:[%s2447 + $0xd8] sm:$0xff]
        %v2476 = vld [vmem:[%s2447 + $0xe0] sm:$0xff]
        %v2477 = vld [vmem:[%s2447 + $0xe8] sm:$0x3]
        %v2478 = vld [vmem:[%s2447 + $0xf0] sm:$0xff]
        %v2479 = vld [vmem:[%s2447 + $0xf8] sm:$0xff]
        %v2480 = vld [vmem:[%s2447 + $0x100] sm:$0x3]
        %v2481 = vld [vmem:[%s2447 + $0x108] sm:$0xff]
        %v2482 = vld [vmem:[%s2447 + $0x110] sm:$0xff]
        %v2483 = vld [vmem:[%s2447 + $0x118] sm:$0x3]
        %v2484 = vld [vmem:[%s2447 + $0x120] sm:$0xff]
        %v2485 = vld [vmem:[%s2447 + $0x128] sm:$0xff]
        %v2486 = vld [vmem:[%s2447 + $0x130] sm:$0x3]
        %v2487 = vld [vmem:[%s2447 + $0x138] sm:$0xff]
        %v2488 = vld [vmem:[%s2447 + $0x140] sm:$0xff]
        %v2489 = vld [vmem:[%s2447 + $0x148] sm:$0x3]
        %v2490 = vld [vmem:[%s2447 + $0x150] sm:$0xff]
        %v2491 = vld [vmem:[%s2447 + $0x158] sm:$0xff]
        %v2492 = vld [vmem:[%s2447 + $0x160] sm:$0x3]
        %v2493 = vld [vmem:[%s2447 + $0x168] sm:$0xff]
        %v2494 = vld [vmem:[%s2447 + $0x170] sm:$0xff]
        %v2495 = vld [vmem:[%s2447 + $0x178] sm:$0x3]
        %v2496 = vpack.c.bf16 %v2449, %v2448
        %v2497 = vpack.c.bf16 %v2452, %v2451
        %v2498 = vpack.c.bf16 %v2455, %v2454
        %v2499 = vpack.c.bf16 %v2458, %v2457
        %v2500 = vpack.c.bf16 %v2461, %v2460
        %v2501 = vpack.c.bf16 %v2464, %v2463
        %v2502 = vpack.c.bf16 %v2467, %v2466
        %v2503 = vpack.c.bf16 %v2470, %v2469
        %v2504 = vpack.c.bf16 %v2473, %v2472
        %v2505 = vpack.c.bf16 %v2476, %v2475
        %v2506 = vpack.c.bf16 %v2479, %v2478
        %v2507 = vpack.c.bf16 %v2482, %v2481
        %v2508 = vpack.c.bf16 %v2485, %v2484
        %v2509 = vpack.c.bf16 %v2488, %v2487
        %v2510 = vpack.c.bf16 %v2491, %v2490
        %v2511 = vpack.c.bf16 %v2494, %v2493
        %s2512 = scalar_lea.vmem %s1, 96
        %v2513 = vld [vmem:[%s2512] sm:$0xf]
        %v2514 = vld [vmem:[%s2512 + $0x4] sm:$0xf]
        %v2515 = vld [vmem:[%s2512 + $0x8] sm:$0xf]
        %v2516 = vld [vmem:[%s2512 + $0xc] sm:$0xf]
        %v2521 = vunpack.c.l.b16 %v2513
        %v2522 = vunpack.c.l.b16 %v2514
        %v2523 = vunpack.c.l.b16 %v2515
        %v2524 = vunpack.c.l.b16 %v2516
        %v2525 = vpack.c.b16 %v2522, %v2521
        %v2526 = vpack.c.b16 %v2524, %v2523
        %v2530 = vsel %vm486, %v2496, 0
        %v2533 = vsel %vm486, %v2497, 0
        %v2536 = vsel %vm486, %v2498, 0
        %v2539 = vsel %vm486, %v2499, 0
        %v2542 = vsel %vm486, %v2500, 0
        %v2545 = vsel %vm486, %v2501, 0
        %v2548 = vsel %vm486, %v2502, 0
        %v2551 = vsel %vm486, %v2503, 0
        %v2554 = vsel %vm486, %v2504, 0
        %v2557 = vsel %vm486, %v2505, 0
        %v2560 = vsel %vm486, %v2506, 0
        %v2563 = vsel %vm486, %v2507, 0
        %v2566 = vsel %vm486, %v2508, 0
        %v2569 = vsel %vm486, %v2509, 0
        %v2572 = vsel %vm486, %v2510, 0
        %v2575 = vsel %vm486, %v2511, 0
        %2577 = vmatprep.subr.bf16.mxu0 0
        %2578 = vmatpush1.bf16.msra.mxu0 %v2525
        %2579 = vmatprep.subr.bf16.mxu0 0
        %2580 = vmatpush1.bf16.msra.mxu0 %v2526
        %2581 = vmatprep.subr.bf16.mxu0 0
        %2582 = vmatpush1.bf16.msra.mxu0 0
        %2583 = vmatprep.subr.bf16.mxu0 0
        %2584 = vmatpush1.bf16.msra.mxu0 0
        %2585 = vmatprep.subr.bf16.mxu0 0
        %2586 = vmatpush1.bf16.msra.mxu0 0
        %2587 = vmatprep.subr.bf16.mxu0 0
        %2588 = vmatpush1.bf16.msra.mxu0 0
        %2589 = vmatprep.subr.bf16.mxu0 0
        %2590 = vmatpush1.bf16.msra.mxu0 0
        %2591 = vmatprep.subr.bf16.mxu0 0
        %2592 = vmatpush1.bf16.msra.mxu0 0
        %2593 = vmatprep.subr.bf16.mxu0 0
        %2594 = vmatpush1.bf16.msra.mxu0 0
        %2595 = vmatprep.subr.bf16.mxu0 0
        %2596 = vmatpush1.bf16.msra.mxu0 0
        %2597 = vmatprep.subr.bf16.mxu0 0
        %2598 = vmatpush1.bf16.msra.mxu0 0
        %2599 = vmatprep.subr.bf16.mxu0 0
        %2600 = vmatpush1.bf16.msra.mxu0 0
        %2601 = vmatprep.subr.bf16.mxu0 0
        %2602 = vmatpush1.bf16.msra.mxu0 0
        %2603 = vmatprep.subr.bf16.mxu0 0
        %2604 = vmatpush1.bf16.msra.mxu0 0
        %2605 = vmatprep.subr.bf16.mxu0 0
        %2606 = vmatpush1.bf16.msra.mxu0 0
        %2607 = vmatprep.subr.bf16.mxu0 0
        %2608 = vmatpush1.bf16.msra.mxu0 0
        %2609 = vmatprep.mubr.bf16.mxu0 0
        %2610 = vmatmul.mubr.bf16.gmra.mrb[0].mxu0 %v2530
        %v2611 = vpop.f32.mrb[0].mxu0
        %v2612 = vadd.f32 0.0, %v2611
        %v2613 = vpop.f32.mrb[0].mxu0
        %v2614 = vpop.f32.mrb[0].mxu0
        %v2615 = vadd.f32 0.0, %v2614
        %v2616 = vpop.f32.mrb[0].mxu0
        %2617 = vmatprep.mubr.bf16.mxu0 0
        %2618 = vmatmul.mubr.bf16.gmra.mrb[0].mxu0 %v2533
        %v2619 = vpop.f32.mrb[0].mxu0
        %v2620 = vadd.f32 0.0, %v2619
        %v2621 = vpop.f32.mrb[0].mxu0
        %v2622 = vpop.f32.mrb[0].mxu0
        %v2623 = vadd.f32 0.0, %v2622
        %v2624 = vpop.f32.mrb[0].mxu0
        %2625 = vmatprep.mubr.bf16.mxu0 0
        %2626 = vmatmul.mubr.bf16.gmra.mrb[0].mxu0 %v2536
        %v2627 = vpop.f32.mrb[0].mxu0
        %v2628 = vadd.f32 0.0, %v2627
        %v2629 = vpop.f32.mrb[0].mxu0
        %v2630 = vpop.f32.mrb[0].mxu0
        %v2631 = vadd.f32 0.0, %v2630
        %v2632 = vpop.f32.mrb[0].mxu0
        %2633 = vmatprep.mubr.bf16.mxu0 0
        %2634 = vmatmul.mubr.bf16.gmra.mrb[0].mxu0 %v2539
        %v2635 = vpop.f32.mrb[0].mxu0
        %v2636 = vadd.f32 0.0, %v2635
        %v2637 = vpop.f32.mrb[0].mxu0
        %v2638 = vpop.f32.mrb[0].mxu0
        %v2639 = vadd.f32 0.0, %v2638
        %v2640 = vpop.f32.mrb[0].mxu0
        %2641 = vmatprep.mubr.bf16.mxu0 0
        %2642 = vmatmul.mubr.bf16.gmra.mrb[0].mxu0 %v2542
        %v2643 = vpop.f32.mrb[0].mxu0
        %v2644 = vadd.f32 0.0, %v2643
        %v2645 = vpop.f32.mrb[0].mxu0
        %v2646 = vpop.f32.mrb[0].mxu0
        %v2647 = vadd.f32 0.0, %v2646
        %v2648 = vpop.f32.mrb[0].mxu0
        %2649 = vmatprep.mubr.bf16.mxu0 0
        %2650 = vmatmul.mubr.bf16.gmra.mrb[0].mxu0 %v2545
        %v2651 = vpop.f32.mrb[0].mxu0
        %v2652 = vadd.f32 0.0, %v2651
        %v2653 = vpop.f32.mrb[0].mxu0
        %v2654 = vpop.f32.mrb[0].mxu0
        %v2655 = vadd.f32 0.0, %v2654
        %v2656 = vpop.f32.mrb[0].mxu0
        %2657 = vmatprep.mubr.bf16.mxu0 0
        %2658 = vmatmul.mubr.bf16.gmra.mrb[0].mxu0 %v2548
        %v2659 = vpop.f32.mrb[0].mxu0
        %v2660 = vadd.f32 0.0, %v2659
        %v2661 = vpop.f32.mrb[0].mxu0
        %v2662 = vpop.f32.mrb[0].mxu0
        %v2663 = vadd.f32 0.0, %v2662
        %v2664 = vpop.f32.mrb[0].mxu0
        %2665 = vmatprep.mubr.bf16.mxu0 0
        %2666 = vmatmul.mubr.bf16.gmra.mrb[0].mxu0 %v2551
        %v2667 = vpop.f32.mrb[0].mxu0
        %v2668 = vadd.f32 0.0, %v2667
        %v2669 = vpop.f32.mrb[0].mxu0
        %v2670 = vpop.f32.mrb[0].mxu0
        %v2671 = vadd.f32 0.0, %v2670
        %v2672 = vpop.f32.mrb[0].mxu0
        %2673 = vmatprep.mubr.bf16.mxu0 0
        %2674 = vmatmul.mubr.bf16.gmra.mrb[0].mxu0 %v2554
        %v2675 = vpop.f32.mrb[0].mxu0
        %v2676 = vadd.f32 0.0, %v2675
        %v2677 = vpop.f32.mrb[0].mxu0
        %v2678 = vpop.f32.mrb[0].mxu0
        %v2679 = vadd.f32 0.0, %v2678
        %v2680 = vpop.f32.mrb[0].mxu0
        %2681 = vmatprep.mubr.bf16.mxu0 0
        %2682 = vmatmul.mubr.bf16.gmra.mrb[0].mxu0 %v2557
        %v2683 = vpop.f32.mrb[0].mxu0
        %v2684 = vadd.f32 0.0, %v2683
        %v2685 = vpop.f32.mrb[0].mxu0
        %v2686 = vpop.f32.mrb[0].mxu0
        %v2687 = vadd.f32 0.0, %v2686
        %v2688 = vpop.f32.mrb[0].mxu0
        %2689 = vmatprep.mubr.bf16.mxu0 0
        %2690 = vmatmul.mubr.bf16.gmra.mrb[0].mxu0 %v2560
        %v2691 = vpop.f32.mrb[0].mxu0
        %v2692 = vadd.f32 0.0, %v2691
        %v2693 = vpop.f32.mrb[0].mxu0
        %v2694 = vpop.f32.mrb[0].mxu0
        %v2695 = vadd.f32 0.0, %v2694
        %v2696 = vpop.f32.mrb[0].mxu0
        %2697 = vmatprep.mubr.bf16.mxu0 0
        %2698 = vmatmul.mubr.bf16.gmra.mrb[0].mxu0 %v2563
        %v2699 = vpop.f32.mrb[0].mxu0
        %v2700 = vadd.f32 0.0, %v2699
        %v2701 = vpop.f32.mrb[0].mxu0
        %v2702 = vpop.f32.mrb[0].mxu0
        %v2703 = vadd.f32 0.0, %v2702
        %v2704 = vpop.f32.mrb[0].mxu0
        %2705 = vmatprep.mubr.bf16.mxu0 0
        %2706 = vmatmul.mubr.bf16.gmra.mrb[0].mxu0 %v2566
        %v2707 = vpop.f32.mrb[0].mxu0
        %v2708 = vadd.f32 0.0, %v2707
        %v2709 = vpop.f32.mrb[0].mxu0
        %v2710 = vpop.f32.mrb[0].mxu0
        %v2711 = vadd.f32 0.0, %v2710
        %v2712 = vpop.f32.mrb[0].mxu0
        %2713 = vmatprep.mubr.bf16.mxu0 0
        %2714 = vmatmul.mubr.bf16.gmra.mrb[0].mxu0 %v2569
        %v2715 = vpop.f32.mrb[0].mxu0
        %v2716 = vadd.f32 0.0, %v2715
        %v2717 = vpop.f32.mrb[0].mxu0
        %v2718 = vpop.f32.mrb[0].mxu0
        %v2719 = vadd.f32 0.0, %v2718
        %v2720 = vpop.f32.mrb[0].mxu0
        %2721 = vmatprep.mubr.bf16.mxu0 0
        %2722 = vmatmul.mubr.bf16.gmra.mrb[0].mxu0 %v2572
        %v2723 = vpop.f32.mrb[0].mxu0
        %v2724 = vadd.f32 0.0, %v2723
        %v2725 = vpop.f32.mrb[0].mxu0
        %v2726 = vpop.f32.mrb[0].mxu0
        %v2727 = vadd.f32 0.0, %v2726
        %v2728 = vpop.f32.mrb[0].mxu0
        %2729 = vmatprep.mubr.bf16.mxu0 0
        %2730 = vmatmul.mubr.bf16.gmra.mrb[0].mxu0 %v2575
        %v2731 = vpop.f32.mrb[0].mxu0
        %v2732 = vadd.f32 0.0, %v2731
        %v2733 = vpop.f32.mrb[0].mxu0
        %v2734 = vpop.f32.mrb[0].mxu0
        %v2735 = vadd.f32 0.0, %v2734
        %v2736 = vpop.f32.mrb[0].mxu0
        %2737 = vdwg.mxu0
        %v2738 = vadd.f32 %v2415, %v2612
        %v2739 = vadd.f32 %v2416, %v2615
        %v2740 = vadd.f32 %v2417, %v2620
        %v2741 = vadd.f32 %v2418, %v2623
        %v2742 = vadd.f32 %v2419, %v2628
        %v2743 = vadd.f32 %v2420, %v2631
        %v2744 = vadd.f32 %v2421, %v2636
        %v2745 = vadd.f32 %v2422, %v2639
        %v2746 = vadd.f32 %v2423, %v2644
        %v2747 = vadd.f32 %v2424, %v2647
        %v2748 = vadd.f32 %v2425, %v2652
        %v2749 = vadd.f32 %v2426, %v2655
        %v2750 = vadd.f32 %v2427, %v2660
        %v2751 = vadd.f32 %v2428, %v2663
        %v2752 = vadd.f32 %v2429, %v2668
        %v2753 = vadd.f32 %v2430, %v2671
        %v2754 = vadd.f32 %v2431, %v2676
        %v2755 = vadd.f32 %v2432, %v2679
        %v2756 = vadd.f32 %v2433, %v2684
        %v2757 = vadd.f32 %v2434, %v2687
        %v2758 = vadd.f32 %v2435, %v2692
        %v2759 = vadd.f32 %v2436, %v2695
        %v2760 = vadd.f32 %v2437, %v2700
        %v2761 = vadd.f32 %v2438, %v2703
        %v2762 = vadd.f32 %v2439, %v2708
        %v2763 = vadd.f32 %v2440, %v2711
        %v2764 = vadd.f32 %v2441, %v2716
        %v2765 = vadd.f32 %v2442, %v2719
        %v2766 = vadd.f32 %v2443, %v2724
        %v2767 = vadd.f32 %v2444, %v2727
        %v2768 = vadd.f32 %v2445, %v2732
        %v2769 = vadd.f32 %v2446, %v2735
        %v2818 = vrot.slane %v2448, 1
        %v2819 = vrot.slane %v2449, 1
        %v2820 = vsel %vm340, %v2818, %v2819
        %v2821 = vrot.slane %v2450, 1
        %v2822 = vsel %vm340, %v2819, %v2821
        %v2823 = vrot.slane %v2451, 1
        %v2824 = vrot.slane %v2452, 1
        %v2825 = vsel %vm340, %v2823, %v2824
        %v2826 = vrot.slane %v2453, 1
        %v2827 = vsel %vm340, %v2824, %v2826
        %v2828 = vrot.slane %v2454, 1
        %v2829 = vrot.slane %v2455, 1
        %v2830 = vsel %vm340, %v2828, %v2829
        %v2831 = vrot.slane %v2456, 1
        %v2832 = vsel %vm340, %v2829, %v2831
        %v2833 = vrot.slane %v2457, 1
        %v2834 = vrot.slane %v2458, 1
        %v2835 = vsel %vm340, %v2833, %v2834
        %v2836 = vrot.slane %v2459, 1
        %v2837 = vsel %vm340, %v2834, %v2836
        %v2838 = vrot.slane %v2460, 1
        %v2839 = vrot.slane %v2461, 1
        %v2840 = vsel %vm340, %v2838, %v2839
        %v2841 = vrot.slane %v2462, 1
        %v2842 = vsel %vm340, %v2839, %v2841
        %v2843 = vrot.slane %v2463, 1
        %v2844 = vrot.slane %v2464, 1
        %v2845 = vsel %vm340, %v2843, %v2844
        %v2846 = vrot.slane %v2465, 1
        %v2847 = vsel %vm340, %v2844, %v2846
        %v2848 = vrot.slane %v2466, 1
        %v2849 = vrot.slane %v2467, 1
        %v2850 = vsel %vm340, %v2848, %v2849
        %v2851 = vrot.slane %v2468, 1
        %v2852 = vsel %vm340, %v2849, %v2851
        %v2853 = vrot.slane %v2469, 1
        %v2854 = vrot.slane %v2470, 1
        %v2855 = vsel %vm340, %v2853, %v2854
        %v2856 = vrot.slane %v2471, 1
        %v2857 = vsel %vm340, %v2854, %v2856
        %v2858 = vrot.slane %v2472, 1
        %v2859 = vrot.slane %v2473, 1
        %v2860 = vsel %vm340, %v2858, %v2859
        %v2861 = vrot.slane %v2474, 1
        %v2862 = vsel %vm340, %v2859, %v2861
        %v2863 = vrot.slane %v2475, 1
        %v2864 = vrot.slane %v2476, 1
        %v2865 = vsel %vm340, %v2863, %v2864
        %v2866 = vrot.slane %v2477, 1
        %v2867 = vsel %vm340, %v2864, %v2866
        %v2868 = vrot.slane %v2478, 1
        %v2869 = vrot.slane %v2479, 1
        %v2870 = vsel %vm340, %v2868, %v2869
        %v2871 = vrot.slane %v2480, 1
        %v2872 = vsel %vm340, %v2869, %v2871
        %v2873 = vrot.slane %v2481, 1
        %v2874 = vrot.slane %v2482, 1
        %v2875 = vsel %vm340, %v2873, %v2874
        %v2876 = vrot.slane %v2483, 1
        %v2877 = vsel %vm340, %v2874, %v2876
        %v2878 = vrot.slane %v2484, 1
        %v2879 = vrot.slane %v2485, 1
        %v2880 = vsel %vm340, %v2878, %v2879
        %v2881 = vrot.slane %v2486, 1
        %v2882 = vsel %vm340, %v2879, %v2881
        %v2883 = vrot.slane %v2487, 1
        %v2884 = vrot.slane %v2488, 1
        %v2885 = vsel %vm340, %v2883, %v2884
        %v2886 = vrot.slane %v2489, 1
        %v2887 = vsel %vm340, %v2884, %v2886
        %v2888 = vrot.slane %v2490, 1
        %v2889 = vrot.slane %v2491, 1
        %v2890 = vsel %vm340, %v2888, %v2889
        %v2891 = vrot.slane %v2492, 1
        %v2892 = vsel %vm340, %v2889, %v2891
        %v2893 = vrot.slane %v2493, 1
        %v2894 = vrot.slane %v2494, 1
        %v2895 = vsel %vm340, %v2893, %v2894
        %v2896 = vrot.slane %v2495, 1
        %v2897 = vsel %vm340, %v2894, %v2896
        %v2930 = vpack.c.bf16 %v2822, %v2820
        %v2931 = vpack.c.bf16 %v2827, %v2825
        %v2932 = vpack.c.bf16 %v2832, %v2830
        %v2933 = vpack.c.bf16 %v2837, %v2835
        %v2934 = vpack.c.bf16 %v2842, %v2840
        %v2935 = vpack.c.bf16 %v2847, %v2845
        %v2936 = vpack.c.bf16 %v2852, %v2850
        %v2937 = vpack.c.bf16 %v2857, %v2855
        %v2938 = vpack.c.bf16 %v2862, %v2860
        %v2939 = vpack.c.bf16 %v2867, %v2865
        %v2940 = vpack.c.bf16 %v2872, %v2870
        %v2941 = vpack.c.bf16 %v2877, %v2875
        %v2942 = vpack.c.bf16 %v2882, %v2880
        %v2943 = vpack.c.bf16 %v2887, %v2885
        %v2944 = vpack.c.bf16 %v2892, %v2890
        %v2945 = vpack.c.bf16 %v2897, %v2895
        %s2946 = scalar_lea.vmem %s1, 112
        %v2947 = vld [vmem:[%s2946] sm:$0xf]
        %v2948 = vld [vmem:[%s2946 + $0x4] sm:$0xf]
        %v2949 = vld [vmem:[%s2946 + $0x8] sm:$0xf]
        %v2950 = vld [vmem:[%s2946 + $0xc] sm:$0xf]
        %v2955 = vunpack.c.l.b16 %v2947
        %v2956 = vunpack.c.l.b16 %v2948
        %v2957 = vunpack.c.l.b16 %v2949
        %v2958 = vunpack.c.l.b16 %v2950
        %v2959 = vpack.c.b16 %v2956, %v2955
        %v2960 = vpack.c.b16 %v2958, %v2957
        %v2964 = vsel %vm486, %v2930, 0
        %v2967 = vsel %vm486, %v2931, 0
        %v2970 = vsel %vm486, %v2932, 0
        %v2973 = vsel %vm486, %v2933, 0
        %v2976 = vsel %vm486, %v2934, 0
        %v2979 = vsel %vm486, %v2935, 0
        %v2982 = vsel %vm486, %v2936, 0
        %v2985 = vsel %vm486, %v2937, 0
        %v2988 = vsel %vm486, %v2938, 0
        %v2991 = vsel %vm486, %v2939, 0
        %v2994 = vsel %vm486, %v2940, 0
        %v2997 = vsel %vm486, %v2941, 0
        %v3000 = vsel %vm486, %v2942, 0
        %v3003 = vsel %vm486, %v2943, 0
        %v3006 = vsel %vm486, %v2944, 0
        %v3009 = vsel %vm486, %v2945, 0
        %3011 = vmatprep.subr.bf16.mxu0 0
        %3012 = vmatpush1.bf16.msra.mxu0 %v2959
        %3013 = vmatprep.subr.bf16.mxu0 0
        %3014 = vmatpush1.bf16.msra.mxu0 %v2960
        %3015 = vmatprep.subr.bf16.mxu0 0
        %3016 = vmatpush1.bf16.msra.mxu0 0
        %3017 = vmatprep.subr.bf16.mxu0 0
        %3018 = vmatpush1.bf16.msra.mxu0 0
        %3019 = vmatprep.subr.bf16.mxu0 0
        %3020 = vmatpush1.bf16.msra.mxu0 0
        %3021 = vmatprep.subr.bf16.mxu0 0
        %3022 = vmatpush1.bf16.msra.mxu0 0
        %3023 = vmatprep.subr.bf16.mxu0 0
        %3024 = vmatpush1.bf16.msra.mxu0 0
        %3025 = vmatprep.subr.bf16.mxu0 0
        %3026 = vmatpush1.bf16.msra.mxu0 0
        %3027 = vmatprep.subr.bf16.mxu0 0
        %3028 = vmatpush1.bf16.msra.mxu0 0
        %3029 = vmatprep.subr.bf16.mxu0 0
        %3030 = vmatpush1.bf16.msra.mxu0 0
        %3031 = vmatprep.subr.bf16.mxu0 0
        %3032 = vmatpush1.bf16.msra.mxu0 0
        %3033 = vmatprep.subr.bf16.mxu0 0
        %3034 = vmatpush1.bf16.msra.mxu0 0
        %3035 = vmatprep.subr.bf16.mxu0 0
        %3036 = vmatpush1.bf16.msra.mxu0 0
        %3037 = vmatprep.subr.bf16.mxu0 0
        %3038 = vmatpush1.bf16.msra.mxu0 0
        %3039 = vmatprep.subr.bf16.mxu0 0
        %3040 = vmatpush1.bf16.msra.mxu0 0
        %3041 = vmatprep.subr.bf16.mxu0 0
        %3042 = vmatpush1.bf16.msra.mxu0 0
        %3043 = vmatprep.mubr.bf16.mxu0 0
        %3044 = vmatmul.mubr.bf16.gmra.mrb[0].mxu0 %v2964
        %v3045 = vpop.f32.mrb[0].mxu0
        %v3046 = vadd.f32 0.0, %v3045
        %v3047 = vpop.f32.mrb[0].mxu0
        %v3048 = vpop.f32.mrb[0].mxu0
        %v3049 = vadd.f32 0.0, %v3048
        %v3050 = vpop.f32.mrb[0].mxu0
        %3051 = vmatprep.mubr.bf16.mxu0 0
        %3052 = vmatmul.mubr.bf16.gmra.mrb[0].mxu0 %v2967
        %v3053 = vpop.f32.mrb[0].mxu0
        %v3054 = vadd.f32 0.0, %v3053
        %v3055 = vpop.f32.mrb[0].mxu0
        %v3056 = vpop.f32.mrb[0].mxu0
        %v3057 = vadd.f32 0.0, %v3056
        %v3058 = vpop.f32.mrb[0].mxu0
        %3059 = vmatprep.mubr.bf16.mxu0 0
        %3060 = vmatmul.mubr.bf16.gmra.mrb[0].mxu0 %v2970
        %v3061 = vpop.f32.mrb[0].mxu0
        %v3062 = vadd.f32 0.0, %v3061
        %v3063 = vpop.f32.mrb[0].mxu0
        %v3064 = vpop.f32.mrb[0].mxu0
        %v3065 = vadd.f32 0.0, %v3064
        %v3066 = vpop.f32.mrb[0].mxu0
        %3067 = vmatprep.mubr.bf16.mxu0 0
        %3068 = vmatmul.mubr.bf16.gmra.mrb[0].mxu0 %v2973
        %v3069 = vpop.f32.mrb[0].mxu0
        %v3070 = vadd.f32 0.0, %v3069
        %v3071 = vpop.f32.mrb[0].mxu0
        %v3072 = vpop.f32.mrb[0].mxu0
        %v3073 = vadd.f32 0.0, %v3072
        %v3074 = vpop.f32.mrb[0].mxu0
        %3075 = vmatprep.mubr.bf16.mxu0 0
        %3076 = vmatmul.mubr.bf16.gmra.mrb[0].mxu0 %v2976
        %v3077 = vpop.f32.mrb[0].mxu0
        %v3078 = vadd.f32 0.0, %v3077
        %v3079 = vpop.f32.mrb[0].mxu0
        %v3080 = vpop.f32.mrb[0].mxu0
        %v3081 = vadd.f32 0.0, %v3080
        %v3082 = vpop.f32.mrb[0].mxu0
        %3083 = vmatprep.mubr.bf16.mxu0 0
        %3084 = vmatmul.mubr.bf16.gmra.mrb[0].mxu0 %v2979
        %v3085 = vpop.f32.mrb[0].mxu0
        %v3086 = vadd.f32 0.0, %v3085
        %v3087 = vpop.f32.mrb[0].mxu0
        %v3088 = vpop.f32.mrb[0].mxu0
        %v3089 = vadd.f32 0.0, %v3088
        %v3090 = vpop.f32.mrb[0].mxu0
        %3091 = vmatprep.mubr.bf16.mxu0 0
        %3092 = vmatmul.mubr.bf16.gmra.mrb[0].mxu0 %v2982
        %v3093 = vpop.f32.mrb[0].mxu0
        %v3094 = vadd.f32 0.0, %v3093
        %v3095 = vpop.f32.mrb[0].mxu0
        %v3096 = vpop.f32.mrb[0].mxu0
        %v3097 = vadd.f32 0.0, %v3096
        %v3098 = vpop.f32.mrb[0].mxu0
        %3099 = vmatprep.mubr.bf16.mxu0 0
        %3100 = vmatmul.mubr.bf16.gmra.mrb[0].mxu0 %v2985
        %v3101 = vpop.f32.mrb[0].mxu0
        %v3102 = vadd.f32 0.0, %v3101
        %v3103 = vpop.f32.mrb[0].mxu0
        %v3104 = vpop.f32.mrb[0].mxu0
        %v3105 = vadd.f32 0.0, %v3104
        %v3106 = vpop.f32.mrb[0].mxu0
        %3107 = vmatprep.mubr.bf16.mxu0 0
        %3108 = vmatmul.mubr.bf16.gmra.mrb[0].mxu0 %v2988
        %v3109 = vpop.f32.mrb[0].mxu0
        %v3110 = vadd.f32 0.0, %v3109
        %v3111 = vpop.f32.mrb[0].mxu0
        %v3112 = vpop.f32.mrb[0].mxu0
        %v3113 = vadd.f32 0.0, %v3112
        %v3114 = vpop.f32.mrb[0].mxu0
        %3115 = vmatprep.mubr.bf16.mxu0 0
        %3116 = vmatmul.mubr.bf16.gmra.mrb[0].mxu0 %v2991
        %v3117 = vpop.f32.mrb[0].mxu0
        %v3118 = vadd.f32 0.0, %v3117
        %v3119 = vpop.f32.mrb[0].mxu0
        %v3120 = vpop.f32.mrb[0].mxu0
        %v3121 = vadd.f32 0.0, %v3120
        %v3122 = vpop.f32.mrb[0].mxu0
        %3123 = vmatprep.mubr.bf16.mxu0 0
        %3124 = vmatmul.mubr.bf16.gmra.mrb[0].mxu0 %v2994
        %v3125 = vpop.f32.mrb[0].mxu0
        %v3126 = vadd.f32 0.0, %v3125
        %v3127 = vpop.f32.mrb[0].mxu0
        %v3128 = vpop.f32.mrb[0].mxu0
        %v3129 = vadd.f32 0.0, %v3128
        %v3130 = vpop.f32.mrb[0].mxu0
        %3131 = vmatprep.mubr.bf16.mxu0 0
        %3132 = vmatmul.mubr.bf16.gmra.mrb[0].mxu0 %v2997
        %v3133 = vpop.f32.mrb[0].mxu0
        %v3134 = vadd.f32 0.0, %v3133
        %v3135 = vpop.f32.mrb[0].mxu0
        %v3136 = vpop.f32.mrb[0].mxu0
        %v3137 = vadd.f32 0.0, %v3136
        %v3138 = vpop.f32.mrb[0].mxu0
        %3139 = vmatprep.mubr.bf16.mxu0 0
        %3140 = vmatmul.mubr.bf16.gmra.mrb[0].mxu0 %v3000
        %v3141 = vpop.f32.mrb[0].mxu0
        %v3142 = vadd.f32 0.0, %v3141
        %v3143 = vpop.f32.mrb[0].mxu0
        %v3144 = vpop.f32.mrb[0].mxu0
        %v3145 = vadd.f32 0.0, %v3144
        %v3146 = vpop.f32.mrb[0].mxu0
        %3147 = vmatprep.mubr.bf16.mxu0 0
        %3148 = vmatmul.mubr.bf16.gmra.mrb[0].mxu0 %v3003
        %v3149 = vpop.f32.mrb[0].mxu0
        %v3150 = vadd.f32 0.0, %v3149
        %v3151 = vpop.f32.mrb[0].mxu0
        %v3152 = vpop.f32.mrb[0].mxu0
        %v3153 = vadd.f32 0.0, %v3152
        %v3154 = vpop.f32.mrb[0].mxu0
        %3155 = vmatprep.mubr.bf16.mxu0 0
        %3156 = vmatmul.mubr.bf16.gmra.mrb[0].mxu0 %v3006
        %v3157 = vpop.f32.mrb[0].mxu0
        %v3158 = vadd.f32 0.0, %v3157
        %v3159 = vpop.f32.mrb[0].mxu0
        %v3160 = vpop.f32.mrb[0].mxu0
        %v3161 = vadd.f32 0.0, %v3160
        %v3162 = vpop.f32.mrb[0].mxu0
        %3163 = vmatprep.mubr.bf16.mxu0 0
        %3164 = vmatmul.mubr.bf16.gmra.mrb[0].mxu0 %v3009
        %v3165 = vpop.f32.mrb[0].mxu0
        %v3166 = vadd.f32 0.0, %v3165
        %v3167 = vpop.f32.mrb[0].mxu0
        %v3168 = vpop.f32.mrb[0].mxu0
        %v3169 = vadd.f32 0.0, %v3168
        %v3170 = vpop.f32.mrb[0].mxu0
        %3171 = vdwg.mxu0
        %v3172 = vadd.f32 %v2738, %v3046
        %v3173 = vadd.f32 %v2739, %v3049
        %v3174 = vadd.f32 %v2740, %v3054
        %v3175 = vadd.f32 %v2741, %v3057
        %v3176 = vadd.f32 %v2742, %v3062
        %v3177 = vadd.f32 %v2743, %v3065
        %v3178 = vadd.f32 %v2744, %v3070
        %v3179 = vadd.f32 %v2745, %v3073
        %v3180 = vadd.f32 %v2746, %v3078
        %v3181 = vadd.f32 %v2747, %v3081
        %v3182 = vadd.f32 %v2748, %v3086
        %v3183 = vadd.f32 %v2749, %v3089
        %v3184 = vadd.f32 %v2750, %v3094
        %v3185 = vadd.f32 %v2751, %v3097
        %v3186 = vadd.f32 %v2752, %v3102
        %v3187 = vadd.f32 %v2753, %v3105
        %v3188 = vadd.f32 %v2754, %v3110
        %v3189 = vadd.f32 %v2755, %v3113
        %v3190 = vadd.f32 %v2756, %v3118
        %v3191 = vadd.f32 %v2757, %v3121
        %v3192 = vadd.f32 %v2758, %v3126
        %v3193 = vadd.f32 %v2759, %v3129
        %v3194 = vadd.f32 %v2760, %v3134
        %v3195 = vadd.f32 %v2761, %v3137
        %v3196 = vadd.f32 %v2762, %v3142
        %v3197 = vadd.f32 %v2763, %v3145
        %v3198 = vadd.f32 %v2764, %v3150
        %v3199 = vadd.f32 %v2765, %v3153
        %v3200 = vadd.f32 %v2766, %v3158
        %v3201 = vadd.f32 %v2767, %v3161
        %v3202 = vadd.f32 %v2768, %v3166
        %v3203 = vadd.f32 %v2769, %v3169
        %v3204 = vrot.slane %v2448, 2
        %v3205 = vrot.slane %v2449, 2
        %v3206 = vsel %vm917, %v3204, %v3205
        %v3207 = vrot.slane %v2450, 2
        %v3208 = vsel %vm917, %v3205, %v3207
        %v3209 = vrot.slane %v2451, 2
        %v3210 = vrot.slane %v2452, 2
        %v3211 = vsel %vm917, %v3209, %v3210
        %v3212 = vrot.slane %v2453, 2
        %v3213 = vsel %vm917, %v3210, %v3212
        %v3214 = vrot.slane %v2454, 2
        %v3215 = vrot.slane %v2455, 2
        %v3216 = vsel %vm917, %v3214, %v3215
        %v3217 = vrot.slane %v2456, 2
        %v3218 = vsel %vm917, %v3215, %v3217
        %v3219 = vrot.slane %v2457, 2
        %v3220 = vrot.slane %v2458, 2
        %v3221 = vsel %vm917, %v3219, %v3220
        %v3222 = vrot.slane %v2459, 2
        %v3223 = vsel %vm917, %v3220, %v3222
        %v3224 = vrot.slane %v2460, 2
        %v3225 = vrot.slane %v2461, 2
        %v3226 = vsel %vm917, %v3224, %v3225
        %v3227 = vrot.slane %v2462, 2
        %v3228 = vsel %vm917, %v3225, %v3227
        %v3229 = vrot.slane %v2463, 2
        %v3230 = vrot.slane %v2464, 2
        %v3231 = vsel %vm917, %v3229, %v3230
        %v3232 = vrot.slane %v2465, 2
        %v3233 = vsel %vm917, %v3230, %v3232
        %v3234 = vrot.slane %v2466, 2
        %v3235 = vrot.slane %v2467, 2
        %v3236 = vsel %vm917, %v3234, %v3235
        %v3237 = vrot.slane %v2468, 2
        %v3238 = vsel %vm917, %v3235, %v3237
        %v3239 = vrot.slane %v2469, 2
        %v3240 = vrot.slane %v2470, 2
        %v3241 = vsel %vm917, %v3239, %v3240
        %v3242 = vrot.slane %v2471, 2
        %v3243 = vsel %vm917, %v3240, %v3242
        %v3244 = vrot.slane %v2472, 2
        %v3245 = vrot.slane %v2473, 2
        %v3246 = vsel %vm917, %v3244, %v3245
        %v3247 = vrot.slane %v2474, 2
        %v3248 = vsel %vm917, %v3245, %v3247
        %v3249 = vrot.slane %v2475, 2
        %v3250 = vrot.slane %v2476, 2
        %v3251 = vsel %vm917, %v3249, %v3250
        %v3252 = vrot.slane %v2477, 2
        %v3253 = vsel %vm917, %v3250, %v3252
        %v3254 = vrot.slane %v2478, 2
        %v3255 = vrot.slane %v2479, 2
        %v3256 = vsel %vm917, %v3254, %v3255
        %v3257 = vrot.slane %v2480, 2
        %v3258 = vsel %vm917, %v3255, %v3257
        %v3259 = vrot.slane %v2481, 2
        %v3260 = vrot.slane %v2482, 2
        %v3261 = vsel %vm917, %v3259, %v3260
        %v3262 = vrot.slane %v2483, 2
        %v3263 = vsel %vm917, %v3260, %v3262
        %v3264 = vrot.slane %v2484, 2
        %v3265 = vrot.slane %v2485, 2
        %v3266 = vsel %vm917, %v3264, %v3265
        %v3267 = vrot.slane %v2486, 2
        %v3268 = vsel %vm917, %v3265, %v3267
        %v3269 = vrot.slane %v2487, 2
        %v3270 = vrot.slane %v2488, 2
        %v3271 = vsel %vm917, %v3269, %v3270
        %v3272 = vrot.slane %v2489, 2
        %v3273 = vsel %vm917, %v3270, %v3272
        %v3274 = vrot.slane %v2490, 2
        %v3275 = vrot.slane %v2491, 2
        %v3276 = vsel %vm917, %v3274, %v3275
        %v3277 = vrot.slane %v2492, 2
        %v3278 = vsel %vm917, %v3275, %v3277
        %v3279 = vrot.slane %v2493, 2
        %v3280 = vrot.slane %v2494, 2
        %v3281 = vsel %vm917, %v3279, %v3280
        %v3282 = vrot.slane %v2495, 2
        %v3283 = vsel %vm917, %v3280, %v3282
        %v3316 = vpack.c.bf16 %v3208, %v3206
        %v3317 = vpack.c.bf16 %v3213, %v3211
        %v3318 = vpack.c.bf16 %v3218, %v3216
        %v3319 = vpack.c.bf16 %v3223, %v3221
        %v3320 = vpack.c.bf16 %v3228, %v3226
        %v3321 = vpack.c.bf16 %v3233, %v3231
        %v3322 = vpack.c.bf16 %v3238, %v3236
        %v3323 = vpack.c.bf16 %v3243, %v3241
        %v3324 = vpack.c.bf16 %v3248, %v3246
        %v3325 = vpack.c.bf16 %v3253, %v3251
        %v3326 = vpack.c.bf16 %v3258, %v3256
        %v3327 = vpack.c.bf16 %v3263, %v3261
        %v3328 = vpack.c.bf16 %v3268, %v3266
        %v3329 = vpack.c.bf16 %v3273, %v3271
        %v3330 = vpack.c.bf16 %v3278, %v3276
        %v3331 = vpack.c.bf16 %v3283, %v3281
        %s3332 = scalar_lea.vmem %s1, 128
        %v3333 = vld [vmem:[%s3332] sm:$0xf]
        %v3334 = vld [vmem:[%s3332 + $0x4] sm:$0xf]
        %v3335 = vld [vmem:[%s3332 + $0x8] sm:$0xf]
        %v3336 = vld [vmem:[%s3332 + $0xc] sm:$0xf]
        %v3341 = vunpack.c.l.b16 %v3333
        %v3342 = vunpack.c.l.b16 %v3334
        %v3343 = vunpack.c.l.b16 %v3335
        %v3344 = vunpack.c.l.b16 %v3336
        %v3345 = vpack.c.b16 %v3342, %v3341
        %v3346 = vpack.c.b16 %v3344, %v3343
        %v3350 = vsel %vm486, %v3316, 0
        %v3353 = vsel %vm486, %v3317, 0
        %v3356 = vsel %vm486, %v3318, 0
        %v3359 = vsel %vm486, %v3319, 0
        %v3362 = vsel %vm486, %v3320, 0
        %v3365 = vsel %vm486, %v3321, 0
        %v3368 = vsel %vm486, %v3322, 0
        %v3371 = vsel %vm486, %v3323, 0
        %v3374 = vsel %vm486, %v3324, 0
        %v3377 = vsel %vm486, %v3325, 0
        %v3380 = vsel %vm486, %v3326, 0
        %v3383 = vsel %vm486, %v3327, 0
        %v3386 = vsel %vm486, %v3328, 0
        %v3389 = vsel %vm486, %v3329, 0
        %v3392 = vsel %vm486, %v3330, 0
        %v3395 = vsel %vm486, %v3331, 0
        %3397 = vmatprep.subr.bf16.mxu0 0
        %3398 = vmatpush1.bf16.msra.mxu0 %v3345
        %3399 = vmatprep.subr.bf16.mxu0 0
        %3400 = vmatpush1.bf16.msra.mxu0 %v3346
        %3401 = vmatprep.subr.bf16.mxu0 0
        %3402 = vmatpush1.bf16.msra.mxu0 0
        %3403 = vmatprep.subr.bf16.mxu0 0
        %3404 = vmatpush1.bf16.msra.mxu0 0
        %3405 = vmatprep.subr.bf16.mxu0 0
        %3406 = vmatpush1.bf16.msra.mxu0 0
        %3407 = vmatprep.subr.bf16.mxu0 0
        %3408 = vmatpush1.bf16.msra.mxu0 0
        %3409 = vmatprep.subr.bf16.mxu0 0
        %3410 = vmatpush1.bf16.msra.mxu0 0
        %3411 = vmatprep.subr.bf16.mxu0 0
        %3412 = vmatpush1.bf16.msra.mxu0 0
        %3413 = vmatprep.subr.bf16.mxu0 0
        %3414 = vmatpush1.bf16.msra.mxu0 0
        %3415 = vmatprep.subr.bf16.mxu0 0
        %3416 = vmatpush1.bf16.msra.mxu0 0
        %3417 = vmatprep.subr.bf16.mxu0 0
        %3418 = vmatpush1.bf16.msra.mxu0 0
        %3419 = vmatprep.subr.bf16.mxu0 0
        %3420 = vmatpush1.bf16.msra.mxu0 0
        %3421 = vmatprep.subr.bf16.mxu0 0
        %3422 = vmatpush1.bf16.msra.mxu0 0
        %3423 = vmatprep.subr.bf16.mxu0 0
        %3424 = vmatpush1.bf16.msra.mxu0 0
        %3425 = vmatprep.subr.bf16.mxu0 0
        %3426 = vmatpush1.bf16.msra.mxu0 0
        %3427 = vmatprep.subr.bf16.mxu0 0
        %3428 = vmatpush1.bf16.msra.mxu0 0
        %3429 = vmatprep.mubr.bf16.mxu0 0
        %3430 = vmatmul.mubr.bf16.gmra.mrb[0].mxu0 %v3350
        %v3431 = vpop.f32.mrb[0].mxu0
        %v3432 = vadd.f32 0.0, %v3431
        %v3433 = vpop.f32.mrb[0].mxu0
        %v3434 = vpop.f32.mrb[0].mxu0
        %v3435 = vadd.f32 0.0, %v3434
        %v3436 = vpop.f32.mrb[0].mxu0
        %3437 = vmatprep.mubr.bf16.mxu0 0
        %3438 = vmatmul.mubr.bf16.gmra.mrb[0].mxu0 %v3353
        %v3439 = vpop.f32.mrb[0].mxu0
        %v3440 = vadd.f32 0.0, %v3439
        %v3441 = vpop.f32.mrb[0].mxu0
        %v3442 = vpop.f32.mrb[0].mxu0
        %v3443 = vadd.f32 0.0, %v3442
        %v3444 = vpop.f32.mrb[0].mxu0
        %3445 = vmatprep.mubr.bf16.mxu0 0
        %3446 = vmatmul.mubr.bf16.gmra.mrb[0].mxu0 %v3356
        %v3447 = vpop.f32.mrb[0].mxu0
        %v3448 = vadd.f32 0.0, %v3447
        %v3449 = vpop.f32.mrb[0].mxu0
        %v3450 = vpop.f32.mrb[0].mxu0
        %v3451 = vadd.f32 0.0, %v3450
        %v3452 = vpop.f32.mrb[0].mxu0
        %3453 = vmatprep.mubr.bf16.mxu0 0
        %3454 = vmatmul.mubr.bf16.gmra.mrb[0].mxu0 %v3359
        %v3455 = vpop.f32.mrb[0].mxu0
        %v3456 = vadd.f32 0.0, %v3455
        %v3457 = vpop.f32.mrb[0].mxu0
        %v3458 = vpop.f32.mrb[0].mxu0
        %v3459 = vadd.f32 0.0, %v3458
        %v3460 = vpop.f32.mrb[0].mxu0
        %3461 = vmatprep.mubr.bf16.mxu0 0
        %3462 = vmatmul.mubr.bf16.gmra.mrb[0].mxu0 %v3362
        %v3463 = vpop.f32.mrb[0].mxu0
        %v3464 = vadd.f32 0.0, %v3463
        %v3465 = vpop.f32.mrb[0].mxu0
        %v3466 = vpop.f32.mrb[0].mxu0
        %v3467 = vadd.f32 0.0, %v3466
        %v3468 = vpop.f32.mrb[0].mxu0
        %3469 = vmatprep.mubr.bf16.mxu0 0
        %3470 = vmatmul.mubr.bf16.gmra.mrb[0].mxu0 %v3365
        %v3471 = vpop.f32.mrb[0].mxu0
        %v3472 = vadd.f32 0.0, %v3471
        %v3473 = vpop.f32.mrb[0].mxu0
        %v3474 = vpop.f32.mrb[0].mxu0
        %v3475 = vadd.f32 0.0, %v3474
        %v3476 = vpop.f32.mrb[0].mxu0
        %3477 = vmatprep.mubr.bf16.mxu0 0
        %3478 = vmatmul.mubr.bf16.gmra.mrb[0].mxu0 %v3368
        %v3479 = vpop.f32.mrb[0].mxu0
        %v3480 = vadd.f32 0.0, %v3479
        %v3481 = vpop.f32.mrb[0].mxu0
        %v3482 = vpop.f32.mrb[0].mxu0
        %v3483 = vadd.f32 0.0, %v3482
        %v3484 = vpop.f32.mrb[0].mxu0
        %3485 = vmatprep.mubr.bf16.mxu0 0
        %3486 = vmatmul.mubr.bf16.gmra.mrb[0].mxu0 %v3371
        %v3487 = vpop.f32.mrb[0].mxu0
        %v3488 = vadd.f32 0.0, %v3487
        %v3489 = vpop.f32.mrb[0].mxu0
        %v3490 = vpop.f32.mrb[0].mxu0
        %v3491 = vadd.f32 0.0, %v3490
        %v3492 = vpop.f32.mrb[0].mxu0
        %3493 = vmatprep.mubr.bf16.mxu0 0
        %3494 = vmatmul.mubr.bf16.gmra.mrb[0].mxu0 %v3374
        %v3495 = vpop.f32.mrb[0].mxu0
        %v3496 = vadd.f32 0.0, %v3495
        %v3497 = vpop.f32.mrb[0].mxu0
        %v3498 = vpop.f32.mrb[0].mxu0
        %v3499 = vadd.f32 0.0, %v3498
        %v3500 = vpop.f32.mrb[0].mxu0
        %3501 = vmatprep.mubr.bf16.mxu0 0
        %3502 = vmatmul.mubr.bf16.gmra.mrb[0].mxu0 %v3377
        %v3503 = vpop.f32.mrb[0].mxu0
        %v3504 = vadd.f32 0.0, %v3503
        %v3505 = vpop.f32.mrb[0].mxu0
        %v3506 = vpop.f32.mrb[0].mxu0
        %v3507 = vadd.f32 0.0, %v3506
        %v3508 = vpop.f32.mrb[0].mxu0
        %3509 = vmatprep.mubr.bf16.mxu0 0
        %3510 = vmatmul.mubr.bf16.gmra.mrb[0].mxu0 %v3380
        %v3511 = vpop.f32.mrb[0].mxu0
        %v3512 = vadd.f32 0.0, %v3511
        %v3513 = vpop.f32.mrb[0].mxu0
        %v3514 = vpop.f32.mrb[0].mxu0
        %v3515 = vadd.f32 0.0, %v3514
        %v3516 = vpop.f32.mrb[0].mxu0
        %3517 = vmatprep.mubr.bf16.mxu0 0
        %3518 = vmatmul.mubr.bf16.gmra.mrb[0].mxu0 %v3383
        %v3519 = vpop.f32.mrb[0].mxu0
        %v3520 = vadd.f32 0.0, %v3519
        %v3521 = vpop.f32.mrb[0].mxu0
        %v3522 = vpop.f32.mrb[0].mxu0
        %v3523 = vadd.f32 0.0, %v3522
        %v3524 = vpop.f32.mrb[0].mxu0
        %3525 = vmatprep.mubr.bf16.mxu0 0
        %3526 = vmatmul.mubr.bf16.gmra.mrb[0].mxu0 %v3386
        %v3527 = vpop.f32.mrb[0].mxu0
        %v3528 = vadd.f32 0.0, %v3527
        %v3529 = vpop.f32.mrb[0].mxu0
        %v3530 = vpop.f32.mrb[0].mxu0
        %v3531 = vadd.f32 0.0, %v3530
        %v3532 = vpop.f32.mrb[0].mxu0
        %3533 = vmatprep.mubr.bf16.mxu0 0
        %3534 = vmatmul.mubr.bf16.gmra.mrb[0].mxu0 %v3389
        %v3535 = vpop.f32.mrb[0].mxu0
        %v3536 = vadd.f32 0.0, %v3535
        %v3537 = vpop.f32.mrb[0].mxu0
        %v3538 = vpop.f32.mrb[0].mxu0
        %v3539 = vadd.f32 0.0, %v3538
        %v3540 = vpop.f32.mrb[0].mxu0
        %3541 = vmatprep.mubr.bf16.mxu0 0
        %3542 = vmatmul.mubr.bf16.gmra.mrb[0].mxu0 %v3392
        %v3543 = vpop.f32.mrb[0].mxu0
        %v3544 = vadd.f32 0.0, %v3543
        %v3545 = vpop.f32.mrb[0].mxu0
        %v3546 = vpop.f32.mrb[0].mxu0
        %v3547 = vadd.f32 0.0, %v3546
        %v3548 = vpop.f32.mrb[0].mxu0
        %3549 = vmatprep.mubr.bf16.mxu0 0
        %3550 = vmatmul.mubr.bf16.gmra.mrb[0].mxu0 %v3395
        %v3551 = vpop.f32.mrb[0].mxu0
        %v3552 = vadd.f32 0.0, %v3551
        %v3553 = vpop.f32.mrb[0].mxu0
        %v3554 = vpop.f32.mrb[0].mxu0
        %v3555 = vadd.f32 0.0, %v3554
        %v3556 = vpop.f32.mrb[0].mxu0
        %3557 = vdwg.mxu0
        %v3558 = vadd.f32 %v3172, %v3432
        %v3559 = vadd.f32 %v3173, %v3435
        %v3560 = vadd.f32 %v3174, %v3440
        %v3561 = vadd.f32 %v3175, %v3443
        %v3562 = vadd.f32 %v3176, %v3448
        %v3563 = vadd.f32 %v3177, %v3451
        %v3564 = vadd.f32 %v3178, %v3456
        %v3565 = vadd.f32 %v3179, %v3459
        %v3566 = vadd.f32 %v3180, %v3464
        %v3567 = vadd.f32 %v3181, %v3467
        %v3568 = vadd.f32 %v3182, %v3472
        %v3569 = vadd.f32 %v3183, %v3475
        %v3570 = vadd.f32 %v3184, %v3480
        %v3571 = vadd.f32 %v3185, %v3483
        %v3572 = vadd.f32 %v3186, %v3488
        %v3573 = vadd.f32 %v3187, %v3491
        %v3574 = vadd.f32 %v3188, %v3496
        %v3575 = vadd.f32 %v3189, %v3499
        %v3576 = vadd.f32 %v3190, %v3504
        %v3577 = vadd.f32 %v3191, %v3507
        %v3578 = vadd.f32 %v3192, %v3512
        %v3579 = vadd.f32 %v3193, %v3515
        %v3580 = vadd.f32 %v3194, %v3520
        %v3581 = vadd.f32 %v3195, %v3523
        %v3582 = vadd.f32 %v3196, %v3528
        %v3583 = vadd.f32 %v3197, %v3531
        %v3584 = vadd.f32 %v3198, %v3536
        %v3585 = vadd.f32 %v3199, %v3539
        %v3586 = vadd.f32 %v3200, %v3544
        %v3587 = vadd.f32 %v3201, %v3547
        %v3588 = vadd.f32 %v3202, %v3552
        %v3589 = vadd.f32 %v3203, %v3555
        %v3590 = vld [vmem:[%s2] sm:$0x1]
        %v3592 = vlaneseq
        %v3593 = vshrl.u32 %v3592, 7
        %v3594 = vsub.s32 0, %v3593
        %v3595 = vrot.slane %v3590, %v3594
        %v3597 = vadd.f32 %v3558, %v3595
        %v3598 = vadd.f32 %v3559, %v3595
        %v3599 = vadd.f32 %v3560, %v3595
        %v3600 = vadd.f32 %v3561, %v3595
        %v3601 = vadd.f32 %v3562, %v3595
        %v3602 = vadd.f32 %v3563, %v3595
        %v3603 = vadd.f32 %v3564, %v3595
        %v3604 = vadd.f32 %v3565, %v3595
        %v3605 = vadd.f32 %v3566, %v3595
        %v3606 = vadd.f32 %v3567, %v3595
        %v3607 = vadd.f32 %v3568, %v3595
        %v3608 = vadd.f32 %v3569, %v3595
        %v3609 = vadd.f32 %v3570, %v3595
        %v3610 = vadd.f32 %v3571, %v3595
        %v3611 = vadd.f32 %v3572, %v3595
        %v3612 = vadd.f32 %v3573, %v3595
        %v3613 = vadd.f32 %v3574, %v3595
        %v3614 = vadd.f32 %v3575, %v3595
        %v3615 = vadd.f32 %v3576, %v3595
        %v3616 = vadd.f32 %v3577, %v3595
        %v3617 = vadd.f32 %v3578, %v3595
        %v3618 = vadd.f32 %v3579, %v3595
        %v3619 = vadd.f32 %v3580, %v3595
        %v3620 = vadd.f32 %v3581, %v3595
        %v3621 = vadd.f32 %v3582, %v3595
        %v3622 = vadd.f32 %v3583, %v3595
        %v3623 = vadd.f32 %v3584, %v3595
        %v3624 = vadd.f32 %v3585, %v3595
        %v3625 = vadd.f32 %v3586, %v3595
        %v3626 = vadd.f32 %v3587, %v3595
        %v3627 = vadd.f32 %v3588, %v3595
        %v3628 = vadd.f32 %v3589, %v3595
        %v3629 = vmax.f32 %v3597, 0.0
        %v3630 = vmax.f32 %v3598, 0.0
        %v3631 = vmax.f32 %v3599, 0.0
        %v3632 = vmax.f32 %v3600, 0.0
        %v3633 = vmax.f32 %v3601, 0.0
        %v3634 = vmax.f32 %v3602, 0.0
        %v3635 = vmax.f32 %v3603, 0.0
        %v3636 = vmax.f32 %v3604, 0.0
        %v3637 = vmax.f32 %v3605, 0.0
        %v3638 = vmax.f32 %v3606, 0.0
        %v3639 = vmax.f32 %v3607, 0.0
        %v3640 = vmax.f32 %v3608, 0.0
        %v3641 = vmax.f32 %v3609, 0.0
        %v3642 = vmax.f32 %v3610, 0.0
        %v3643 = vmax.f32 %v3611, 0.0
        %v3644 = vmax.f32 %v3612, 0.0
        %v3645 = vmax.f32 %v3613, 0.0
        %v3646 = vmax.f32 %v3614, 0.0
        %v3647 = vmax.f32 %v3615, 0.0
        %v3648 = vmax.f32 %v3616, 0.0
        %v3649 = vmax.f32 %v3617, 0.0
        %v3650 = vmax.f32 %v3618, 0.0
        %v3651 = vmax.f32 %v3619, 0.0
        %v3652 = vmax.f32 %v3620, 0.0
        %v3653 = vmax.f32 %v3621, 0.0
        %v3654 = vmax.f32 %v3622, 0.0
        %v3655 = vmax.f32 %v3623, 0.0
        %v3656 = vmax.f32 %v3624, 0.0
        %v3657 = vmax.f32 %v3625, 0.0
        %v3658 = vmax.f32 %v3626, 0.0
        %v3659 = vmax.f32 %v3627, 0.0
        %v3660 = vmax.f32 %v3628, 0.0
        %v3661 = vld [vmem:[%s3] sm:$0xf]
        %v3662 = vpack.c.bf16 %v3630, %v3629
        %v3663 = vpack.c.bf16 %v3632, %v3631
        %v3664 = vpack.c.bf16 %v3634, %v3633
        %v3665 = vpack.c.bf16 %v3636, %v3635
        %v3666 = vpack.c.bf16 %v3638, %v3637
        %v3667 = vpack.c.bf16 %v3640, %v3639
        %v3668 = vpack.c.bf16 %v3642, %v3641
        %v3669 = vpack.c.bf16 %v3644, %v3643
        %v3670 = vpack.c.bf16 %v3646, %v3645
        %v3671 = vpack.c.bf16 %v3648, %v3647
        %v3672 = vpack.c.bf16 %v3650, %v3649
        %v3673 = vpack.c.bf16 %v3652, %v3651
        %v3674 = vpack.c.bf16 %v3654, %v3653
        %v3675 = vpack.c.bf16 %v3656, %v3655
        %v3676 = vpack.c.bf16 %v3658, %v3657
        %v3677 = vpack.c.bf16 %v3660, %v3659
        %v3678 = vld [vmem:[%s4] sm:$0xff]
        %3680 = vset.pattern.permute.xlu0 0
        %3681 = vperm.xlu0 %3680, %v3678
        %v3682 = vpop.permute.xlu0 %3681
        %vm3684 = vcmask 785408
        %v3686 = vsel %vm3684, %v3661, 0
        %v3689 = vsel %vm3684, %v3662, 0
        %v3692 = vsel %vm3684, %v3663, 0
        %v3695 = vsel %vm3684, %v3664, 0
        %v3698 = vsel %vm3684, %v3665, 0
        %v3701 = vsel %vm3684, %v3666, 0
        %v3704 = vsel %vm3684, %v3667, 0
        %v3707 = vsel %vm3684, %v3668, 0
        %v3710 = vsel %vm3684, %v3669, 0
        %v3713 = vsel %vm3684, %v3670, 0
        %v3716 = vsel %vm3684, %v3671, 0
        %v3719 = vsel %vm3684, %v3672, 0
        %v3722 = vsel %vm3684, %v3673, 0
        %v3725 = vsel %vm3684, %v3674, 0
        %v3728 = vsel %vm3684, %v3675, 0
        %v3731 = vsel %vm3684, %v3676, 0
        %v3734 = vsel %vm3684, %v3677, 0
        %3736 = vmatprep.subr.bf16.mxu0 0
        %3737 = vmatpush1.bf16.xpose.msra.mxu0 %v3689
        %3738 = vmatprep.subr.bf16.mxu0 0
        %3739 = vmatpush1.bf16.xpose.msra.mxu0 %v3692
        %3740 = vmatprep.subr.bf16.mxu0 0
        %3741 = vmatpush1.bf16.xpose.msra.mxu0 %v3695
        %3742 = vmatprep.subr.bf16.mxu0 0
        %3743 = vmatpush1.bf16.xpose.msra.mxu0 %v3698
        %3744 = vmatprep.subr.bf16.mxu0 0
        %3745 = vmatpush1.bf16.xpose.msra.mxu0 %v3701
        %3746 = vmatprep.subr.bf16.mxu0 0
        %3747 = vmatpush1.bf16.xpose.msra.mxu0 %v3704
        %3748 = vmatprep.subr.bf16.mxu0 0
        %3749 = vmatpush1.bf16.xpose.msra.mxu0 %v3707
        %3750 = vmatprep.subr.bf16.mxu0 0
        %3751 = vmatpush1.bf16.xpose.msra.mxu0 %v3710
        %3752 = vmatprep.subr.bf16.mxu0 0
        %3753 = vmatpush1.bf16.xpose.msra.mxu0 %v3713
        %3754 = vmatprep.subr.bf16.mxu0 0
        %3755 = vmatpush1.bf16.xpose.msra.mxu0 %v3716
        %3756 = vmatprep.subr.bf16.mxu0 0
        %3757 = vmatpush1.bf16.xpose.msra.mxu0 %v3719
        %3758 = vmatprep.subr.bf16.mxu0 0
        %3759 = vmatpush1.bf16.xpose.msra.mxu0 %v3722
        %3760 = vmatprep.subr.bf16.mxu0 0
        %3761 = vmatpush1.bf16.xpose.msra.mxu0 %v3725
        %3762 = vmatprep.subr.bf16.mxu0 0
        %3763 = vmatpush1.bf16.xpose.msra.mxu0 %v3728
        %3764 = vmatprep.subr.bf16.mxu0 0
        %3765 = vmatpush1.bf16.xpose.msra.mxu0 %v3731
        %3766 = vmatprep.subr.bf16.mxu0 0
        %3767 = vmatpush1.bf16.xpose.msra.mxu0 %v3734
        %3768 = vmatprep.mubr.bf16.mxu0 0
        %3769 = vmatmul.mubr.bf16.gmra.mrb[0].mxu0 %v3686
        %v3770 = vpop.f32.mrb[0].mxu0
        %v3771 = vadd.f32 %v3682, %v3770
        %v3772 = vpop.f32.mrb[0].mxu0
        %v3773 = vadd.f32 %v3682, %v3772
        %v3774 = vpop.f32.mrb[0].mxu0
        %v3775 = vpop.f32.mrb[0].mxu0
        %3776 = vdwg.mxu0
        %3777 = vst [vmem:[%s217] sm:$0xff] %v3771
        %3778 = vst [vmem:[%s217 + $0x8] sm:$0xff] %v3773
        %s3779 = sand.u32 %s137, 1
        %s3780 = scalar_lea.sflag [#allocation3], %s3779
        %s3781 = sand.u32 %s137, 1
        %s3782 = smul.addr %s3781, 16
        %s3783 = scalar_lea.vmem [#allocation2], %s3782
        // Predicated region
        $region41: #{tpu_custom_call.1} parent=39 // pred_check
          %p3784 = pneg %p147
        $region42: #{tpu_custom_call.1} parent=39 // pred_check_branch
          %3786 = sbr.rel (%p3784) target = $region44
        $region43: #{tpu_custom_call.1} parent=39 // pred_region
          %s3788 = ssub.s32 256, 256
          %3789 = vsyncadd %s3780, %s3788
          %s3790 = smul.addr %s19, 2
          %s3791 = smul.addr %s3790, 128
          %s3792 = scalar_lea.hbm %s5, %s3791
          %s3794 = sshll.u32 %s3783, 4
          %s3795 = int_to_ptr.vmem [resolvable:$true] %s3794
          %3797 = dma.vmem_to_hbm [thread:$0]  %s3795, 256, %s3792, %s3780
        $region44: #{tpu_custom_call.1} parent=39 // pred_fallthru
          _
      $region40: #{tpu_custom_call.1} parent=5 // pred_fallthru
        _
      %p3798 = scmp.le.s32.totalorder 2, %s14
      // Predicated region
      $region45: #{tpu_custom_call.1} parent=5 // pred_check
        %p3799 = pneg %p3798
      $region46: #{tpu_custom_call.1} parent=5 // pred_check_branch
        %3801 = sbr.rel (%p3799) target = $region48
      $region47: #{tpu_custom_call.1} parent=5 // pred_region
        %s3802 = ssub.s32 %s14, 2
        // Predicated region
        $region49: #{tpu_custom_call.1} parent=47 // pred_check
          %p3803 = pneg %p153
        $region50: #{tpu_custom_call.1} parent=47 // pred_check_branch
          %3805 = sbr.rel (%p3803) target = $region52
        $region51: #{tpu_custom_call.1} parent=47 // pred_region
          %s3806 = sand.u32 %s138, 1
          %s3807 = scalar_lea.sflag [#allocation3], %s3806
          %s3808 = sand.u32 %s138, 1
          %s3809 = smul.addr %s3808, 16
          %s3810 = scalar_lea.vmem [#allocation2], %s3809
          %3811 = dma.done %s3807, 256
        $region52: #{tpu_custom_call.1} parent=47 // pred_fallthru
          _
      $region48: #{tpu_custom_call.1} parent=5 // pred_fallthru
        _
    $region6: #{tpu_custom_call.1} parent=1 // loop_footer
      %s18 = sadd.s32 1, %s14
    $region7: #{tpu_custom_call.1} parent=1 // loop_footer_branch
      %13 = sbr.rel target = $region3
    $region8: #{tpu_custom_call.1} parent=1 // loop_exit
      _
    %3812 = vsyncpa [#allocation3], 1
    %s3813 = scalar_lea.sflag [#allocation3], 1
    %3814 = vsyncpa %s3813, 1

</llo_original>
